<compile_context>
chip_gen: v6e
topology: v6e:2x2x1
jax: 0.10.0
libtpu: 0.0.40
codegen_flags: <defaults>
</compile_context>

<pallas_src>
import jax
import jax.numpy as jnp
from jax import lax
from jax.experimental import pallas as pl
from jax.experimental.pallas import tpu as pltpu


# ----------------------------------------------------------------------------
# Pallas kernel: fused DoubleConv (conv3x3 + BN(eval) + ReLU, twice) over one
# row tile of one image.  The channel concat of the two inputs is folded into
# conv1; the mid activation lives only in a VMEM scratch.
# ----------------------------------------------------------------------------
def double_conv_kernel(xa_ref, xb_ref, w1_ref, s1_ref, b1_ref,
                       w2_ref, s2_ref, b2_ref, o_ref, mid_ref):
    # xa_ref: (1, TH+4, W+2, Ca)  row window of x2   (2-row / 1-col zero halo)
    # xb_ref: (1, TH+4, W+2, Cb)  row window of up(x1)
    # w1_ref: (9*(Ca+Cb), Cmid)   conv1 weights, im2col layout [taps(xa); taps(xb)]
    # s1/b1 : (1, Cmid)           folded BN1 scale / bias (f32)
    # w2_ref: (9*Cmid, Cout)      conv2 weights, im2col layout
    # s2/b2 : (1, Cout)           folded BN2 scale / bias (f32)
    # o_ref : (1, Cout, TH*W)     lane-dense NCHW output tile
    # mid_ref:(TH+2, W+2, Cmid)   VMEM scratch: mid activation + 1-px border
    TH = mid_ref.shape[0] - 2          # output rows per tile (derived from block)
    W = mid_ref.shape[1] - 2
    Ca = xa_ref.shape[3]
    Cb = xb_ref.shape[3]
    Cmid = mid_ref.shape[2]
    cdt = mid_ref.dtype                # MXU compute dtype (bf16)

    r = pl.program_id(1)

    def taps(x, rows, c):
        # x: (rows+2, W+2, c) -> list of 9 (rows*W, c) shifted views,
        # column order (dy, dx, channel) to match the HWIO weight reshape.
        out = []
        for dy in range(3):
            for dx in range(3):
                out.append(x[dy:dy + rows, dx:dx + W, :].reshape(rows * W, c))
        return out

    # ---- conv1 (channel concat folded in) + BN1 + ReLU over TH+2 mid rows ----
    # NOTE: im2col is kept here because these decoder layers have small C
    # (per-tap K < 128); for Cin >= 128 switch to accumulated shifted dots.
    xa = xa_ref[0]
    xb = xb_ref[0]
    p1 = jnp.concatenate(taps(xa, TH + 2, Ca) + taps(xb, TH + 2, Cb), axis=1)
    h1 = jnp.dot(p1, w1_ref[...], preferred_element_type=jnp.float32)
    h1 = jnp.maximum(h1 * s1_ref[0] + b1_ref[0], 0.0)     # f32, ((TH+2)*W, Cmid)

    # Mid activation (with its 1-row halo) stays in VMEM.  Zero only the
    # 1-pixel border: column strips every step, row strips only at image edges.
    mid_ref[:, 1:W + 1, :] = h1.reshape(TH + 2, W, Cmid).astype(cdt)
    zcol = jnp.zeros((TH + 2, 1, Cmid), cdt)
    mid_ref[:, 0:1, :] = zcol
    mid_ref[:, W + 1:W + 2, :] = zcol

    @pl.when(r == 0)
    def _():                                    # conv2 zero padding at image top
        mid_ref[0:1, :, :] = jnp.zeros((1, W + 2, Cmid), cdt)

    @pl.when(r == pl.num_programs(1) - 1)
    def _():                                    # ... and at image bottom
        mid_ref[TH + 1:TH + 2, :, :] = jnp.zeros((1, W + 2, Cmid), cdt)

    # ---- conv2 + BN2 + ReLU ---------------------------------------------------
    midv = mid_ref[...]
    p2 = jnp.concatenate(taps(midv, TH, Cmid), axis=1)
    h2 = jnp.dot(p2, w2_ref[...], preferred_element_type=jnp.float32)
    h2 = jnp.maximum(h2 * s2_ref[0] + b2_ref[0], 0.0)      # (TH*W, Cout)

    # Lane-dense NCHW store: (Cout, TH*W), TH*W is a multiple of 128.
    # (Transposed store kept because Cout < 128 for these decoder layers.)
    o_ref[0] = h2.T.astype(o_ref.dtype)


def _pick_row_tile(H, W, Cin, Cmid, act_bytes,
                   vmem_budget_bytes=12 << 20, max_rows=64):
    """Largest row tile TH that divides H, keeps the output block lane-dense
    (TH*W % 128 == 0, or TH == H), and whose dominant per-step buffers fit a
    conservative VMEM budget (sized for v7x's 64 MiB physical VMEM)."""
    cands = [th for th in range(1, H + 1)
             if H % th == 0 and (th == H or (th * W) % 128 == 0)]
    fitting = []
    for th in cands:
        live = (2 * (th + 4) * (W + 2) * Cin          # double-buffered windows
                + 9 * (th + 2) * W * Cin              # conv1 im2col temp
                + (th + 2) * (W + 2) * Cmid           # mid scratch
                ) * act_bytes
        if th <= max_rows and live <= vmem_budget_bytes:
            fitting.append(th)
    return max(fitting) if fitting else min(cands)


def double_conv_fused(xa_nhwc, xb_nhwc, w1_hwio, s1, b1, w2_hwio, s2, b2,
                      *, row_tile=None, compute_dtype=jnp.bfloat16):
    """Fused DoubleConv over the (virtual) channel concat of xa/xb.

    xa_nhwc: (N,H,W,Ca)  xb_nhwc: (N,H,W,Cb)  w1_hwio: (3,3,Ca+Cb,Cmid)
    w2_hwio: (3,3,Cmid,Cout).  Returns NCHW (N, Cout, H, W) in f32.
    """
    N, H, W, Ca = xa_nhwc.shape
    Cb = xb_nhwc.shape[-1]
    Cin = Ca + Cb
    Cmid = w1_hwio.shape[-1]
    Cout = w2_hwio.shape[-1]
    assert w1_hwio.shape == (3, 3, Cin, Cmid)
    assert w2_hwio.shape == (3, 3, Cmid, Cout)

    act_bytes = jnp.dtype(compute_dtype).itemsize
    TH = row_tile if row_tile is not None else _pick_row_tile(
        H, W, Cin, Cmid, act_bytes)
    assert H % TH == 0 and (TH == H or (TH * W) % 128 == 0)
    R = H // TH

    # conv1 halo: 2 rows / 1 col of zero padding, in the MXU compute dtype.
    xap = jnp.pad(xa_nhwc, ((0, 0), (2, 2), (1, 1), (0, 0))).astype(compute_dtype)
    xbp = jnp.pad(xb_nhwc, ((0, 0), (2, 2), (1, 1), (0, 0))).astype(compute_dtype)

    # Overlapping (TH+4)-row windows per tile, gathered once on the host side
    # so every grid step maps to a plain Blocked block (keeps the BlockSpec
    # pipeline and the "parallel" row axis).
    # TODO(synk): this duplicates the 4 halo rows of each tile in HBM; for
    # production H use element-offset row indexing or a manual double-buffered
    # DMA to avoid the duplication (and fold the zero pad into the kernel).
    row_idx = jnp.arange(R)[:, None] * TH + jnp.arange(TH + 4)[None, :]
    xa_win = xap[:, row_idx].reshape(N * R, TH + 4, W + 2, Ca)
    xb_win = xbp[:, row_idx].reshape(N * R, TH + 4, W + 2, Cb)

    # im2col weight layouts; conv1 weight split along Cin to match the folded
    # concat ([all taps of xa ; all taps of xb]).
    w1f = jnp.concatenate(
        [w1_hwio[:, :, :Ca, :].reshape(9 * Ca, Cmid),
         w1_hwio[:, :, Ca:, :].reshape(9 * Cb, Cmid)],
        axis=0).astype(compute_dtype)                       # (9*Cin, Cmid)
    w2f = w2_hwio.reshape(9 * Cmid, Cout).astype(compute_dtype)
    s1r = s1.reshape(1, Cmid).astype(jnp.float32)
    b1r = b1.reshape(1, Cmid).astype(jnp.float32)
    s2r = s2.reshape(1, Cout).astype(jnp.float32)
    b2r = b2.reshape(1, Cout).astype(jnp.float32)

    # Explicit scoped-VMEM limit from a rough per-step footprint bound
    # (v7x: 64 MiB physical / 32 MiB default scoped; v5e/v6e: 128 MiB).
    vmem_est = 2 * (
        2 * (TH + 4) * (W + 2) * Cin * act_bytes            # in windows (x2 buf)
        + (TH + 2) * (W + 2) * Cmid * act_bytes             # mid scratch
        + ((TH + 2) * W * 9 * Cin + TH * W * 9 * Cmid) * act_bytes  # im2col tmp
        + (9 * Cin * Cmid + 9 * Cmid * Cout) * act_bytes    # weights
        + TH * W * Cout * 4                                  # out tile (x2 buf)
    ) + (4 << 20)
    vmem_limit = int(min(max(vmem_est, 16 << 20), 56 << 20))

    out = pl.pallas_call(
        double_conv_kernel,
        out_shape=jax.ShapeDtypeStruct((N, Cout, H * W), jnp.float32),
        grid=(N, R),
        in_specs=[
            pl.BlockSpec((1, TH + 4, W + 2, Ca), lambda n, r: (n * R + r, 0, 0, 0)),
            pl.BlockSpec((1, TH + 4, W + 2, Cb), lambda n, r: (n * R + r, 0, 0, 0)),
            pl.BlockSpec((9 * Cin, Cmid), lambda n, r: (0, 0)),
            pl.BlockSpec((1, Cmid), lambda n, r: (0, 0)),
            pl.BlockSpec((1, Cmid), lambda n, r: (0, 0)),
            pl.BlockSpec((9 * Cmid, Cout), lambda n, r: (0, 0)),
            pl.BlockSpec((1, Cout), lambda n, r: (0, 0)),
            pl.BlockSpec((1, Cout), lambda n, r: (0, 0)),
        ],
        out_specs=pl.BlockSpec((1, Cout, TH * W), lambda n, r: (n, 0, r)),
        scratch_shapes=[pltpu.VMEM((TH + 2, W + 2, Cmid), compute_dtype)],
        compiler_params=pltpu.CompilerParams(
            dimension_semantics=("parallel", "parallel"),   # batch x row tiles
            vmem_limit_bytes=vmem_limit),
    )(xa_win, xb_win, w1f, s1r, b1r, w2f, s2r, b2r)

    return out.reshape(N, Cout, H, W)          # (Cout, H*W) store is already NCHW


# ----------------------------------------------------------------------------
# Glue: bilinear upsample x2 (align_corners=True), matches nn.Upsample.
# ----------------------------------------------------------------------------
def bilinear_upsample_x2_align_corners(x_nchw):
    N, C, H, W = x_nchw.shape
    Ho, Wo = 2 * H, 2 * W

    def coords(out_size, in_size):
        if in_size == 1:
            idx0 = jnp.zeros((out_size,), jnp.int32)
            return jnp.zeros((out_size,), jnp.float32), idx0, idx0
        src = jnp.arange(out_size, dtype=jnp.float32) * (
            (in_size - 1) / (out_size - 1))
        i0 = jnp.clip(jnp.floor(src).astype(jnp.int32), 0, in_size - 2)
        frac = src - i0.astype(jnp.float32)
        return frac, i0, i0 + 1

    fy, y0, y1 = coords(Ho, H)
    fx, x0, x1 = coords(Wo, W)

    top = x_nchw[:, :, y0, :]
    bot = x_nchw[:, :, y1, :]
    rows = top * (1.0 - fy)[None, None, :, None] + bot * fy[None, None, :, None]
    left = rows[:, :, :, x0]
    right = rows[:, :, :, x1]
    return left * (1.0 - fx)[None, None, None, :] + right * fx[None, None, None, :]


def fold_bn(gamma, beta, mean, var, eps=1e-5):
    scale = gamma / jnp.sqrt(var + eps)
    bias = beta - mean * scale
    return scale, bias


# ----------------------------------------------------------------------------
# Up module forward (NCHW in / NCHW out, like PyTorch)
# ----------------------------------------------------------------------------
def up_forward(x1, x2, params, *, row_tile=None):
    # 1) bilinear upsample x2 (align_corners=True)
    x1 = bilinear_upsample_x2_align_corners(x1)
    # 2) pad x1 to x2's spatial size
    diffY = x2.shape[2] - x1.shape[2]
    diffX = x2.shape[3] - x1.shape[3]
    x1 = jnp.pad(x1, ((0, 0), (0, 0),
                      (diffY // 2, diffY - diffY // 2),
                      (diffX // 2, diffX - diffX // 2)))
    # 3+4) concat (folded into the kernel) + fused DoubleConv.  The NCHW<->NHWC
    # transposes only exist at the module boundary to match the PyTorch API.
    xa = jnp.transpose(x2, (0, 2, 3, 1))          # first half of concat channels
    xb = jnp.transpose(x1, (0, 2, 3, 1))          # second half
    s1, b1 = fold_bn(*params["bn1"])
    s2, b2 = fold_bn(*params["bn2"])
    return double_conv_fused(xa, xb, params["w1"], s1, b1,
                             params["w2"], s2, b2, row_tile=row_tile)


# ----------------------------------------------------------------------------
# Pure-JAX reference (f32) for correctness check of the Pallas path
# ----------------------------------------------------------------------------
def conv3x3_bn_relu_ref(x_nhwc, w_hwio, bn_scale, bn_bias):
    y = lax.conv_general_dilated(
        x_nhwc, w_hwio, window_strides=(1, 1), padding="SAME",
        dimension_numbers=("NHWC", "HWIO", "NHWC"))
    y = y * bn_scale[None, None, None, :] + bn_bias[None, None, None, :]
    return jnp.maximum(y, 0.0)


def up_forward_ref(x1, x2, params):
    x1 = bilinear_upsample_x2_align_corners(x1)
    diffY = x2.shape[2] - x1.shape[2]
    diffX = x2.shape[3] - x1.shape[3]
    x1 = jnp.pad(x1, ((0, 0), (0, 0),
                      (diffY // 2, diffY - diffY // 2),
                      (diffX // 2, diffX - diffX // 2)))
    x = jnp.concatenate([x2, x1], axis=1)
    x = jnp.transpose(x, (0, 2, 3, 1))
    s1, b1 = fold_bn(*params["bn1"])
    x = conv3x3_bn_relu_ref(x, params["w1"], s1, b1)
    s2, b2 = fold_bn(*params["bn2"])
    x = conv3x3_bn_relu_ref(x, params["w2"], s2, b2)
    return jnp.transpose(x, (0, 3, 1, 2))


if __name__ == "__main__":
    # Up(in_channels=8, out_channels=4): x1 has 4 channels at half resolution,
    # x2 has 4 channels at full resolution; concat gives in_channels=8.
    in_channels, out_channels = 8, 4
    mid_channels = in_channels // 2                  # 4
    N, H2, W2 = 2, 16, 16

    key = jax.random.PRNGKey(0)
    k = jax.random.split(key, 8)

    x1 = jax.random.normal(k[0], (N, in_channels // 2, H2 // 2, W2 // 2),
                           jnp.float32)
    x2 = jax.random.normal(k[1], (N, in_channels // 2, H2, W2), jnp.float32)

    # Deterministic synthetic parameters (HWIO conv weights, eval-mode BN stats)
    params = {
        "w1": 0.1 * jax.random.normal(
            k[2], (3, 3, in_channels, mid_channels), jnp.float32),
        "bn1": (1.0 + 0.1 * jax.random.normal(k[3], (mid_channels,)),   # gamma
                0.1 * jax.random.normal(k[4], (mid_channels,)),          # beta
                0.05 * jax.random.normal(k[5], (mid_channels,)),         # mean
                jnp.abs(1.0 + 0.1 * jax.random.normal(k[6], (mid_channels,)))),  # var
        "w2": 0.1 * jax.random.normal(
            k[7], (3, 3, mid_channels, out_channels), jnp.float32),
        "bn2": (jnp.ones((out_channels,), jnp.float32),
                jnp.zeros((out_channels,), jnp.float32),
                jnp.zeros((out_channels,), jnp.float32),
                jnp.ones((out_channels,), jnp.float32)),
    }

    ref = jax.block_until_ready(up_forward_ref(x1, x2, params))

    # Explicit 8-row tiles: exercises the multi-tile path (halo + both image
    # boundary tiles).  bf16 MXU operands -> compare with a loose tolerance.
    out = jax.block_until_ready(up_forward(x1, x2, params, row_tile=8))
    assert out.shape == (N, out_channels, H2, W2)
    assert jnp.allclose(out, ref, rtol=5e-2, atol=5e-2), "row_tile=8 mismatch"

    # Auto-selected row tile (whole image at this small H).
    out2 = jax.block_until_ready(up_forward(x1, x2, params))
    assert jnp.allclose(out2, ref, rtol=5e-2, atol=5e-2), "auto tile mismatch"

    print("KERNEL_OK")
</pallas_src>

<mosaic_0001>
module attributes {stable_mosaic.version = 11 : i64} {
  func.func @double_conv_kernel(%arg0: i32, %arg1: i32, %arg2: memref<1x12x18x4xbf16, #tpu.memory_space<vmem>>, %arg3: memref<1x12x18x4xbf16, #tpu.memory_space<vmem>>, %arg4: memref<72x4xbf16, #tpu.memory_space<vmem>>, %arg5: memref<1x4xf32, #tpu.memory_space<vmem>>, %arg6: memref<1x4xf32, #tpu.memory_space<vmem>>, %arg7: memref<36x4xbf16, #tpu.memory_space<vmem>>, %arg8: memref<1x4xf32, #tpu.memory_space<vmem>>, %arg9: memref<1x4xf32, #tpu.memory_space<vmem>>, %arg10: memref<1x4x128xf32, #tpu.memory_space<vmem>>, %arg11: memref<10x18x4xbf16, #tpu.memory_space<vmem>>) attributes {dimension_semantics = [#tpu.dimension_semantics<parallel>, #tpu.dimension_semantics<parallel>], iteration_bounds = array<i64: 2, 2>, scalar_prefetch = 0 : i64, scratch_operands = 1 : i64, tpu.core_type = #tpu.core_type<tc>, window_params = [{transform_indices = @transform_0, window_bounds = array<i64: 1, 12, 18, 4>}, {transform_indices = @transform_1, window_bounds = array<i64: 1, 12, 18, 4>}, {pipeline_mode = #tpu.pipeline_mode<synchronous>, transform_indices = @transform_2, window_bounds = array<i64: 72, 4>}, {pipeline_mode = #tpu.pipeline_mode<synchronous>, transform_indices = @transform_3, window_bounds = array<i64: 1, 4>}, {pipeline_mode = #tpu.pipeline_mode<synchronous>, transform_indices = @transform_4, window_bounds = array<i64: 1, 4>}, {pipeline_mode = #tpu.pipeline_mode<synchronous>, transform_indices = @transform_5, window_bounds = array<i64: 36, 4>}, {pipeline_mode = #tpu.pipeline_mode<synchronous>, transform_indices = @transform_6, window_bounds = array<i64: 1, 4>}, {pipeline_mode = #tpu.pipeline_mode<synchronous>, transform_indices = @transform_7, window_bounds = array<i64: 1, 4>}, {transform_indices = @transform_8, window_bounds = array<i64: 1, 4, 128>}]} {
    %c0 = arith.constant 0 : index
    %c0_0 = arith.constant 0 : index
    %c0_1 = arith.constant 0 : index
    %c0_2 = arith.constant 0 : index
    %0 = vector.load %arg2[%c0, %c0_0, %c0_1, %c0_2] : memref<1x12x18x4xbf16, #tpu.memory_space<vmem>>, vector<1x12x18x4xbf16>
    %1 = vector.shape_cast %0 : vector<1x12x18x4xbf16> to vector<12x18x4xbf16>
    %c0_3 = arith.constant 0 : index
    %c0_4 = arith.constant 0 : index
    %c0_5 = arith.constant 0 : index
    %c0_6 = arith.constant 0 : index
    %2 = vector.load %arg3[%c0_3, %c0_4, %c0_5, %c0_6] : memref<1x12x18x4xbf16, #tpu.memory_space<vmem>>, vector<1x12x18x4xbf16>
    %3 = vector.shape_cast %2 : vector<1x12x18x4xbf16> to vector<12x18x4xbf16>
    %4 = vector.extract_strided_slice %1 {offsets = [0, 0, 0], sizes = [10, 16, 4], strides = [1, 1, 1]} : vector<12x18x4xbf16> to vector<10x16x4xbf16>
    %5 = vector.shape_cast %4 : vector<10x16x4xbf16> to vector<160x4xbf16>
    %6 = vector.extract_strided_slice %1 {offsets = [0, 1, 0], sizes = [10, 16, 4], strides = [1, 1, 1]} : vector<12x18x4xbf16> to vector<10x16x4xbf16>
    %7 = vector.shape_cast %6 : vector<10x16x4xbf16> to vector<160x4xbf16>
    %8 = vector.extract_strided_slice %1 {offsets = [0, 2, 0], sizes = [10, 16, 4], strides = [1, 1, 1]} : vector<12x18x4xbf16> to vector<10x16x4xbf16>
    %9 = vector.shape_cast %8 : vector<10x16x4xbf16> to vector<160x4xbf16>
    %10 = vector.extract_strided_slice %1 {offsets = [1, 0, 0], sizes = [10, 16, 4], strides = [1, 1, 1]} : vector<12x18x4xbf16> to vector<10x16x4xbf16>
    %11 = vector.shape_cast %10 : vector<10x16x4xbf16> to vector<160x4xbf16>
    %12 = vector.extract_strided_slice %1 {offsets = [1, 1, 0], sizes = [10, 16, 4], strides = [1, 1, 1]} : vector<12x18x4xbf16> to vector<10x16x4xbf16>
    %13 = vector.shape_cast %12 : vector<10x16x4xbf16> to vector<160x4xbf16>
    %14 = vector.extract_strided_slice %1 {offsets = [1, 2, 0], sizes = [10, 16, 4], strides = [1, 1, 1]} : vector<12x18x4xbf16> to vector<10x16x4xbf16>
    %15 = vector.shape_cast %14 : vector<10x16x4xbf16> to vector<160x4xbf16>
    %16 = vector.extract_strided_slice %1 {offsets = [2, 0, 0], sizes = [10, 16, 4], strides = [1, 1, 1]} : vector<12x18x4xbf16> to vector<10x16x4xbf16>
    %17 = vector.shape_cast %16 : vector<10x16x4xbf16> to vector<160x4xbf16>
    %18 = vector.extract_strided_slice %1 {offsets = [2, 1, 0], sizes = [10, 16, 4], strides = [1, 1, 1]} : vector<12x18x4xbf16> to vector<10x16x4xbf16>
    %19 = vector.shape_cast %18 : vector<10x16x4xbf16> to vector<160x4xbf16>
    %20 = vector.extract_strided_slice %1 {offsets = [2, 2, 0], sizes = [10, 16, 4], strides = [1, 1, 1]} : vector<12x18x4xbf16> to vector<10x16x4xbf16>
    %21 = vector.shape_cast %20 : vector<10x16x4xbf16> to vector<160x4xbf16>
    %22 = vector.extract_strided_slice %3 {offsets = [0, 0, 0], sizes = [10, 16, 4], strides = [1, 1, 1]} : vector<12x18x4xbf16> to vector<10x16x4xbf16>
    %23 = vector.shape_cast %22 : vector<10x16x4xbf16> to vector<160x4xbf16>
    %24 = vector.extract_strided_slice %3 {offsets = [0, 1, 0], sizes = [10, 16, 4], strides = [1, 1, 1]} : vector<12x18x4xbf16> to vector<10x16x4xbf16>
    %25 = vector.shape_cast %24 : vector<10x16x4xbf16> to vector<160x4xbf16>
    %26 = vector.extract_strided_slice %3 {offsets = [0, 2, 0], sizes = [10, 16, 4], strides = [1, 1, 1]} : vector<12x18x4xbf16> to vector<10x16x4xbf16>
    %27 = vector.shape_cast %26 : vector<10x16x4xbf16> to vector<160x4xbf16>
    %28 = vector.extract_strided_slice %3 {offsets = [1, 0, 0], sizes = [10, 16, 4], strides = [1, 1, 1]} : vector<12x18x4xbf16> to vector<10x16x4xbf16>
    %29 = vector.shape_cast %28 : vector<10x16x4xbf16> to vector<160x4xbf16>
    %30 = vector.extract_strided_slice %3 {offsets = [1, 1, 0], sizes = [10, 16, 4], strides = [1, 1, 1]} : vector<12x18x4xbf16> to vector<10x16x4xbf16>
    %31 = vector.shape_cast %30 : vector<10x16x4xbf16> to vector<160x4xbf16>
    %32 = vector.extract_strided_slice %3 {offsets = [1, 2, 0], sizes = [10, 16, 4], strides = [1, 1, 1]} : vector<12x18x4xbf16> to vector<10x16x4xbf16>
    %33 = vector.shape_cast %32 : vector<10x16x4xbf16> to vector<160x4xbf16>
    %34 = vector.extract_strided_slice %3 {offsets = [2, 0, 0], sizes = [10, 16, 4], strides = [1, 1, 1]} : vector<12x18x4xbf16> to vector<10x16x4xbf16>
    %35 = vector.shape_cast %34 : vector<10x16x4xbf16> to vector<160x4xbf16>
    %36 = vector.extract_strided_slice %3 {offsets = [2, 1, 0], sizes = [10, 16, 4], strides = [1, 1, 1]} : vector<12x18x4xbf16> to vector<10x16x4xbf16>
    %37 = vector.shape_cast %36 : vector<10x16x4xbf16> to vector<160x4xbf16>
    %38 = vector.extract_strided_slice %3 {offsets = [2, 2, 0], sizes = [10, 16, 4], strides = [1, 1, 1]} : vector<12x18x4xbf16> to vector<10x16x4xbf16>
    %39 = vector.shape_cast %38 : vector<10x16x4xbf16> to vector<160x4xbf16>
    %40 = tpu.concatenate %5, %7, %9, %11, %13, %15, %17, %19, %21, %23, %25, %27, %29, %31, %33, %35 in 1 : vector<160x4xbf16>, vector<160x4xbf16>, vector<160x4xbf16>, vector<160x4xbf16>, vector<160x4xbf16>, vector<160x4xbf16>, vector<160x4xbf16>, vector<160x4xbf16>, vector<160x4xbf16>, vector<160x4xbf16>, vector<160x4xbf16>, vector<160x4xbf16>, vector<160x4xbf16>, vector<160x4xbf16>, vector<160x4xbf16>, vector<160x4xbf16> -> vector<160x64xbf16>
    %41 = tpu.concatenate %37, %39 in 1 : vector<160x4xbf16>, vector<160x4xbf16> -> vector<160x8xbf16>
    %42 = tpu.concatenate %40, %41 in 1 : vector<160x64xbf16>, vector<160x8xbf16> -> vector<160x72xbf16>
    %c0_7 = arith.constant 0 : index
    %c0_8 = arith.constant 0 : index
    %43 = vector.load %arg4[%c0_7, %c0_8] : memref<72x4xbf16, #tpu.memory_space<vmem>>, vector<72x4xbf16>
    %cst = arith.constant dense<0.000000e+00> : vector<160x4xf32>
    %44 = tpu.matmul %42, %43, %cst {dimension_numbers = #tpu.dot_dimension_numbers<[1], [0], [0], [1], [0, 0, 1, 1], [], []>} : vector<160x72xbf16>, vector<72x4xbf16>, vector<160x4xf32> -> vector<160x4xf32>
    %c0_9 = arith.constant 0 : index
    %c0_10 = arith.constant 0 : index
    %45 = vector.load %arg5[%c0_9, %c0_10] : memref<1x4xf32, #tpu.memory_space<vmem>>, vector<1x4xf32>
    %46 = vector.shape_cast %45 : vector<1x4xf32> to vector<4xf32>
    %47 = vector.shape_cast %46 : vector<4xf32> to vector<1x4xf32>
    %48 = vector.broadcast %47 : vector<1x4xf32> to vector<160x4xf32>
    %49 = arith.mulf %44, %48 : vector<160x4xf32>
    %c0_11 = arith.constant 0 : index
    %c0_12 = arith.constant 0 : index
    %50 = vector.load %arg6[%c0_11, %c0_12] : memref<1x4xf32, #tpu.memory_space<vmem>>, vector<1x4xf32>
    %51 = vector.shape_cast %50 : vector<1x4xf32> to vector<4xf32>
    %52 = vector.shape_cast %51 : vector<4xf32> to vector<1x4xf32>
    %53 = vector.broadcast %52 : vector<1x4xf32> to vector<160x4xf32>
    %54 = arith.addf %49, %53 : vector<160x4xf32>
    %cst_13 = arith.constant 0.000000e+00 : f32
    %55 = vector.broadcast %cst_13 : f32 to vector<160x4xf32>
    %56 = arith.maximumf %54, %55 : vector<160x4xf32>
    %57 = vector.shape_cast %56 : vector<160x4xf32> to vector<10x16x4xf32>
    %58 = arith.truncf %57 : vector<10x16x4xf32> to vector<10x16x4xbf16>
    %c0_14 = arith.constant 0 : index
    %c1 = arith.constant 1 : index
    %c0_15 = arith.constant 0 : index
    %59 = vector.load %arg11[%c0_14, %c1, %c0_15] : memref<10x18x4xbf16, #tpu.memory_space<vmem>>, vector<10x16x4xbf16>
    tpu.vector_store %arg11[%c0_14, %c1, %c0_15], %58 {strides = array<i32>} : memref<10x18x4xbf16, #tpu.memory_space<vmem>>, vector<10x16x4xbf16>,
    %cst_16 = arith.constant 0.000000e+00 : bf16
    %60 = vector.broadcast %cst_16 : bf16 to vector<10x1x4xbf16>
    %c0_17 = arith.constant 0 : index
    %c0_18 = arith.constant 0 : index
    %c0_19 = arith.constant 0 : index
    %61 = vector.load %arg11[%c0_17, %c0_18, %c0_19] : memref<10x18x4xbf16, #tpu.memory_space<vmem>>, vector<10x1x4xbf16>
    tpu.vector_store %arg11[%c0_17, %c0_18, %c0_19], %60 {strides = array<i32>} : memref<10x18x4xbf16, #tpu.memory_space<vmem>>, vector<10x1x4xbf16>,
    %c0_20 = arith.constant 0 : index
    %c17 = arith.constant 17 : index
    %c0_21 = arith.constant 0 : index
    %62 = vector.load %arg11[%c0_20, %c17, %c0_21] : memref<10x18x4xbf16, #tpu.memory_space<vmem>>, vector<10x1x4xbf16>
    tpu.vector_store %arg11[%c0_20, %c17, %c0_21], %60 {strides = array<i32>} : memref<10x18x4xbf16, #tpu.memory_space<vmem>>, vector<10x1x4xbf16>,
    %c0_i32 = arith.constant 0 : i32
    %63 = arith.cmpi eq, %arg1, %c0_i32 : i32
    %64 = arith.extui %63 : i1 to i32
    %c0_i32_22 = arith.constant 0 : i32
    %65 = arith.cmpi ne, %64, %c0_i32_22 : i32
    scf.if %65 {
      %cst_38 = arith.constant 0.000000e+00 : bf16
      %107 = vector.broadcast %cst_38 : bf16 to vector<1x18x4xbf16>
      %c0_39 = arith.constant 0 : index
      %c0_40 = arith.constant 0 : index
      %c0_41 = arith.constant 0 : index
      %108 = vector.load %arg11[%c0_39, %c0_40, %c0_41] : memref<10x18x4xbf16, #tpu.memory_space<vmem>>, vector<1x18x4xbf16>
      tpu.vector_store %arg11[%c0_39, %c0_40, %c0_41], %107 {strides = array<i32>} : memref<10x18x4xbf16, #tpu.memory_space<vmem>>, vector<1x18x4xbf16>,
    } else {
    }
    %c1_i32 = arith.constant 1 : i32
    %66 = arith.cmpi eq, %arg1, %c1_i32 : i32
    %67 = arith.extui %66 : i1 to i32
    %c0_i32_23 = arith.constant 0 : i32
    %68 = arith.cmpi ne, %67, %c0_i32_23 : i32
    scf.if %68 {
      %cst_38 = arith.constant 0.000000e+00 : bf16
      %107 = vector.broadcast %cst_38 : bf16 to vector<1x18x4xbf16>
      %c9 = arith.constant 9 : index
      %c0_39 = arith.constant 0 : index
      %c0_40 = arith.constant 0 : index
      %108 = vector.load %arg11[%c9, %c0_39, %c0_40] : memref<10x18x4xbf16, #tpu.memory_space<vmem>>, vector<1x18x4xbf16>
      tpu.vector_store %arg11[%c9, %c0_39, %c0_40], %107 {strides = array<i32>} : memref<10x18x4xbf16, #tpu.memory_space<vmem>>, vector<1x18x4xbf16>,
    } else {
    }
    %c0_24 = arith.constant 0 : index
    %c0_25 = arith.constant 0 : index
    %c0_26 = arith.constant 0 : index
    %69 = vector.load %arg11[%c0_24, %c0_25, %c0_26] : memref<10x18x4xbf16, #tpu.memory_space<vmem>>, vector<10x18x4xbf16>
    %70 = vector.extract_strided_slice %69 {offsets = [0, 0, 0], sizes = [8, 16, 4], strides = [1, 1, 1]} : vector<10x18x4xbf16> to vector<8x16x4xbf16>
    %71 = vector.shape_cast %70 : vector<8x16x4xbf16> to vector<128x4xbf16>
    %72 = vector.extract_strided_slice %69 {offsets = [0, 1, 0], sizes = [8, 16, 4], strides = [1, 1, 1]} : vector<10x18x4xbf16> to vector<8x16x4xbf16>
    %73 = vector.shape_cast %72 : vector<8x16x4xbf16> to vector<128x4xbf16>
    %74 = vector.extract_strided_slice %69 {offsets = [0, 2, 0], sizes = [8, 16, 4], strides = [1, 1, 1]} : vector<10x18x4xbf16> to vector<8x16x4xbf16>
    %75 = vector.shape_cast %74 : vector<8x16x4xbf16> to vector<128x4xbf16>
    %76 = vector.extract_strided_slice %69 {offsets = [1, 0, 0], sizes = [8, 16, 4], strides = [1, 1, 1]} : vector<10x18x4xbf16> to vector<8x16x4xbf16>
    %77 = vector.shape_cast %76 : vector<8x16x4xbf16> to vector<128x4xbf16>
    %78 = vector.extract_strided_slice %69 {offsets = [1, 1, 0], sizes = [8, 16, 4], strides = [1, 1, 1]} : vector<10x18x4xbf16> to vector<8x16x4xbf16>
    %79 = vector.shape_cast %78 : vector<8x16x4xbf16> to vector<128x4xbf16>
    %80 = vector.extract_strided_slice %69 {offsets = [1, 2, 0], sizes = [8, 16, 4], strides = [1, 1, 1]} : vector<10x18x4xbf16> to vector<8x16x4xbf16>
    %81 = vector.shape_cast %80 : vector<8x16x4xbf16> to vector<128x4xbf16>
    %82 = vector.extract_strided_slice %69 {offsets = [2, 0, 0], sizes = [8, 16, 4], strides = [1, 1, 1]} : vector<10x18x4xbf16> to vector<8x16x4xbf16>
    %83 = vector.shape_cast %82 : vector<8x16x4xbf16> to vector<128x4xbf16>
    %84 = vector.extract_strided_slice %69 {offsets = [2, 1, 0], sizes = [8, 16, 4], strides = [1, 1, 1]} : vector<10x18x4xbf16> to vector<8x16x4xbf16>
    %85 = vector.shape_cast %84 : vector<8x16x4xbf16> to vector<128x4xbf16>
    %86 = vector.extract_strided_slice %69 {offsets = [2, 2, 0], sizes = [8, 16, 4], strides = [1, 1, 1]} : vector<10x18x4xbf16> to vector<8x16x4xbf16>
    %87 = vector.shape_cast %86 : vector<8x16x4xbf16> to vector<128x4xbf16>
    %88 = tpu.concatenate %71, %73, %75, %77, %79, %81, %83, %85, %87 in 1 : vector<128x4xbf16>, vector<128x4xbf16>, vector<128x4xbf16>, vector<128x4xbf16>, vector<128x4xbf16>, vector<128x4xbf16>, vector<128x4xbf16>, vector<128x4xbf16>, vector<128x4xbf16> -> vector<128x36xbf16>
    %c0_27 = arith.constant 0 : index
    %c0_28 = arith.constant 0 : index
    %89 = vector.load %arg7[%c0_27, %c0_28] : memref<36x4xbf16, #tpu.memory_space<vmem>>, vector<36x4xbf16>
    %cst_29 = arith.constant dense<0.000000e+00> : vector<128x4xf32>
    %90 = tpu.matmul %88, %89, %cst_29 {dimension_numbers = #tpu.dot_dimension_numbers<[1], [0], [0], [1], [0, 0, 1, 1], [], []>} : vector<128x36xbf16>, vector<36x4xbf16>, vector<128x4xf32> -> vector<128x4xf32>
    %c0_30 = arith.constant 0 : index
    %c0_31 = arith.constant 0 : index
    %91 = vector.load %arg8[%c0_30, %c0_31] : memref<1x4xf32, #tpu.memory_space<vmem>>, vector<1x4xf32>
    %92 = vector.shape_cast %91 : vector<1x4xf32> to vector<4xf32>
    %93 = vector.shape_cast %92 : vector<4xf32> to vector<1x4xf32>
    %94 = vector.broadcast %93 : vector<1x4xf32> to vector<128x4xf32>
    %95 = arith.mulf %90, %94 : vector<128x4xf32>
    %c0_32 = arith.constant 0 : index
    %c0_33 = arith.constant 0 : index
    %96 = vector.load %arg9[%c0_32, %c0_33] : memref<1x4xf32, #tpu.memory_space<vmem>>, vector<1x4xf32>
    %97 = vector.shape_cast %96 : vector<1x4xf32> to vector<4xf32>
    %98 = vector.shape_cast %97 : vector<4xf32> to vector<1x4xf32>
    %99 = vector.broadcast %98 : vector<1x4xf32> to vector<128x4xf32>
    %100 = arith.addf %95, %99 : vector<128x4xf32>
    %cst_34 = arith.constant 0.000000e+00 : f32
    %101 = vector.broadcast %cst_34 : f32 to vector<128x4xf32>
    %102 = arith.maximumf %100, %101 : vector<128x4xf32>
    %103 = tpu.transpose %102, [1, 0] : vector<128x4xf32> -> vector<4x128xf32>
    %c0_35 = arith.constant 0 : index
    %c0_36 = arith.constant 0 : index
    %c0_37 = arith.constant 0 : index
    %104 = vector.load %arg10[%c0_35, %c0_36, %c0_37] : memref<1x4x128xf32, #tpu.memory_space<vmem>>, vector<1x4x128xf32>
    %105 = vector.shape_cast %104 : vector<1x4x128xf32> to vector<4x128xf32>
    %106 = vector.shape_cast %103 : vector<4x128xf32> to vector<1x4x128xf32>
    tpu.vector_store %arg10[%c0_35, %c0_36, %c0_37], %106 {strides = array<i32>} : memref<1x4x128xf32, #tpu.memory_space<vmem>>, vector<1x4x128xf32>,
    return
  }
  func.func @transform_0(%arg0: i32, %arg1: i32) -> (i32, i32, i32, i32) {
    %c2_i32 = arith.constant 2 : i32
    %0 = arith.muli %arg0, %c2_i32 : i32
    %1 = arith.addi %0, %arg1 : i32
    %c0_i32 = arith.constant 0 : i32
    %c0_i32_0 = arith.constant 0 : i32
    %c0_i32_1 = arith.constant 0 : i32
    %c0_i32_2 = arith.constant 0 : i32
    return %1, %c0_i32, %c0_i32_0, %c0_i32_1 : i32, i32, i32, i32
  }
  func.func @transform_1(%arg0: i32, %arg1: i32) -> (i32, i32, i32, i32) {
    %c2_i32 = arith.constant 2 : i32
    %0 = arith.muli %arg0, %c2_i32 : i32
    %1 = arith.addi %0, %arg1 : i32
    %c0_i32 = arith.constant 0 : i32
    %c0_i32_0 = arith.constant 0 : i32
    %c0_i32_1 = arith.constant 0 : i32
    %c0_i32_2 = arith.constant 0 : i32
    return %1, %c0_i32, %c0_i32_0, %c0_i32_1 : i32, i32, i32, i32
  }
  func.func @transform_2(%arg0: i32, %arg1: i32) -> (i32, i32) {
    %c0_i32 = arith.constant 0 : i32
    %c0_i32_0 = arith.constant 0 : i32
    %c0_i32_1 = arith.constant 0 : i32
    return %c0_i32, %c0_i32_0 : i32, i32
  }
  func.func @transform_3(%arg0: i32, %arg1: i32) -> (i32, i32) {
    %c0_i32 = arith.constant 0 : i32
    %c0_i32_0 = arith.constant 0 : i32
    %c0_i32_1 = arith.constant 0 : i32
    return %c0_i32, %c0_i32_0 : i32, i32
  }
  func.func @transform_4(%arg0: i32, %arg1: i32) -> (i32, i32) {
    %c0_i32 = arith.constant 0 : i32
    %c0_i32_0 = arith.constant 0 : i32
    %c0_i32_1 = arith.constant 0 : i32
    return %c0_i32, %c0_i32_0 : i32, i32
  }
  func.func @transform_5(%arg0: i32, %arg1: i32) -> (i32, i32) {
    %c0_i32 = arith.constant 0 : i32
    %c0_i32_0 = arith.constant 0 : i32
    %c0_i32_1 = arith.constant 0 : i32
    return %c0_i32, %c0_i32_0 : i32, i32
  }
  func.func @transform_6(%arg0: i32, %arg1: i32) -> (i32, i32) {
    %c0_i32 = arith.constant 0 : i32
    %c0_i32_0 = arith.constant 0 : i32
    %c0_i32_1 = arith.constant 0 : i32
    return %c0_i32, %c0_i32_0 : i32, i32
  }
  func.func @transform_7(%arg0: i32, %arg1: i32) -> (i32, i32) {
    %c0_i32 = arith.constant 0 : i32
    %c0_i32_0 = arith.constant 0 : i32
    %c0_i32_1 = arith.constant 0 : i32
    return %c0_i32, %c0_i32_0 : i32, i32
  }
  func.func @transform_8(%arg0: i32, %arg1: i32) -> (i32, i32, i32) {
    %c0_i32 = arith.constant 0 : i32
    %c0_i32_0 = arith.constant 0 : i32
    return %arg0, %c0_i32, %arg1 : i32, i32, i32
  }
}

</mosaic_0001>

<llo_original>
// kernel: tpu_custom_call.1
$region0: #{tpu_custom_call.1}
  #allocation0 [shape = 'u32[]', space=smem, size = 0x4, offset = 0x4, fixed_abs, tag = 'smem constant byte address 0x4 - core index']
  #allocation1 [shape = 'u32[144,128]{1,0:T(1,128)}', space=vmem, size = 0x12000, scoped, tag = 'internal scratch']
  #allocation2 [shape = 'bf16[10,18,4]{2,1,0:T(8,128)(2,1)}', space=vmem, size = 0xf000, scoped, tag = 'scratch operand']
  %s0 = inlined_call_operand.vmem [shape: bf16[4,12,18,4], index: 0, kind: input, shape index: {}]
  %s1 = inlined_call_operand.vmem [shape: bf16[4,12,18,4], index: 1, kind: input, shape index: {}]
  %s2 = inlined_call_operand.vmem [shape: bf16[72,4], index: 2, kind: input, shape index: {}]
  %s3 = inlined_call_operand.vmem [shape: f32[1,4], index: 3, kind: input, shape index: {}]
  %s4 = inlined_call_operand.vmem [shape: f32[1,4], index: 4, kind: input, shape index: {}]
  %s5 = inlined_call_operand.vmem [shape: bf16[36,4], index: 5, kind: input, shape index: {}]
  %s6 = inlined_call_operand.vmem [shape: f32[1,4], index: 6, kind: input, shape index: {}]
  %s7 = inlined_call_operand.vmem [shape: f32[1,4], index: 7, kind: input, shape index: {}]
  %s8 = inlined_call_operand.hbm [shape: f32[2,4,256], index: 8, kind: output, shape index: {}]
  %s9 = sld [smem:[#allocation0]]
  $region73: #{tpu_custom_call.1} parent=0
    _
  %s11 = ssub.s32 1, %s9
  %s12 = scalar_select 0, %s11, %s9
  $region1: #{tpu_custom_call.1} parent=0
    #allocation3 [shape = 'u8[4096]{0}', space=vmem, size = 0x1000, scoped, tag = 'output window, operand 0']
    #allocation4 [shape = 's32[2]{0}', space=sflag, size = 0x8, scoped, tag = 'scoped memory for tpu_custom_call.1']
    %13 = vsyncpa [#allocation4], 0
    %s14 = scalar_lea.sflag [#allocation4], 1
    %15 = vsyncpa %s14, 0
    loop: start=0, step=1, limit=6
    $region2: #{tpu_custom_call.1} parent=1 // loop_pre_header
      _
    $region3: #{tpu_custom_call.1} parent=1 // loop_header
      %s17 = sphi 0, %s21
      %p18 = scmp.ge.s32.totalorder %s17, 6
      %s24 = sphi 0, %s36
      %s25 = sphi 0, %s32
      %s26 = sphi 0, %s24
      %s27 = sphi 0, %s25
      %s28 = sphi 0, %s26
      %s29 = sphi 0, %s27
      %s43 = sphi 0, %s45
      %s46 = sphi 0, %s43
      %s47 = sphi 0, %s46
      %s63 = sphi 0, %s47
      %s73 = sphi 0, %s75
      %s76 = sphi 0, %s73
      %s77 = sphi 0, %s76
      %s93 = sphi 0, %s77
      %s97 = sphi 0, %s97
      %s99 = sphi 0, %s97
      %s100 = sphi 0, %s99
      %s114 = sphi 0, %s100
      %s118 = sphi 0, %s118
      %s120 = sphi 0, %s118
      %s121 = sphi 0, %s120
      %s135 = sphi 0, %s121
      %s139 = sphi 0, %s139
      %s141 = sphi 0, %s139
      %s142 = sphi 0, %s141
      %s156 = sphi 0, %s142
      %s160 = sphi 0, %s160
      %s162 = sphi 0, %s160
      %s163 = sphi 0, %s162
      %s177 = sphi 0, %s163
      %s181 = sphi 0, %s181
      %s183 = sphi 0, %s181
      %s184 = sphi 0, %s183
      %s198 = sphi 0, %s184
      %s202 = sphi 0, %s202
      %s204 = sphi 0, %s202
      %s205 = sphi 0, %s204
      %s219 = sphi 0, %s205
      %s227 = sphi 0, %s229
      %s230 = sphi 0, %s227
      %s231 = sphi 0, %s230
      %s247 = sphi 0, %s231
    $region4: #{tpu_custom_call.1} parent=1 // loop_header_branch
      %20 = sbr.rel (%p18) target = $region8
    $region5: #{tpu_custom_call.1} parent=1 // loop_body
      %s22 = ssub.s32 %s17, 1
      %s23 = ssub.s32 %s17, 2
      %s30 = sadd.s32 1, %s25
      %p31 = scmp.ge.s32.totalorder %s30, 2
      %s32 = scalar_select %p31, 0, %s30
      %s33 = sadd.s32 1, %s24
      %s34 = scalar_select %p31, %s33, %s24
      %p35 = scmp.ge.s32.totalorder %s34, 2
      %s36 = scalar_select %p35, 0, %s34
      %s37 = smul.u32 %s24, 2
      %s38 = sadd.s32 %s37, %s25
      %s39 = smul.u32 %s36, 2
      %s40 = sadd.s32 %s39, %s32
      %s41 = ssub.s32 %s38, %s40
      %p42 = scmp.eq.s32.totalorder %s41, 0
      %s44 = sadd.s32 %s43, 1
      %s45 = scalar_select %p42, %s43, %s44
      %p48 = pneg %p42
      %p49 = scmp.eq.s32.totalorder %s17, 3
      %p50 = por %p48, %p49
      %p51 = scmp.ne.s32.totalorder %s43, %s46
      %p52 = scmp.eq.s32.totalorder %s17, 0
      %p53 = por %p51, %p52
      %p54 = scmp.ne.s32.totalorder %s43, %s46
      %p55 = scmp.eq.s32.totalorder %s22, 3
      %p56 = por %p54, %p55
      %p57 = scmp.ne.s32.totalorder %s46, %s47
      %p58 = scmp.eq.s32.totalorder %s22, 0
      %p59 = por %p57, %p58
      %p60 = scmp.ne.s32.totalorder %s46, %s47
      %p61 = scmp.eq.s32.totalorder %s23, 3
      %p62 = por %p60, %p61
      %p64 = scmp.ne.s32.totalorder %s47, %s63
      %p65 = scmp.eq.s32.totalorder %s23, 0
      %p66 = por %p64, %p65
      %s67 = smul.u32 %s24, 2
      %s68 = sadd.s32 %s67, %s25
      %s69 = smul.u32 %s36, 2
      %s70 = sadd.s32 %s69, %s32
      %s71 = ssub.s32 %s68, %s70
      %p72 = scmp.eq.s32.totalorder %s71, 0
      %s74 = sadd.s32 %s73, 1
      %s75 = scalar_select %p72, %s73, %s74
      %p78 = pneg %p72
      %p79 = scmp.eq.s32.totalorder %s17, 3
      %p80 = por %p78, %p79
      %p81 = scmp.ne.s32.totalorder %s73, %s76
      %p82 = scmp.eq.s32.totalorder %s17, 0
      %p83 = por %p81, %p82
      %p84 = scmp.ne.s32.totalorder %s73, %s76
      %p85 = scmp.eq.s32.totalorder %s22, 3
      %p86 = por %p84, %p85
      %p87 = scmp.ne.s32.totalorder %s76, %s77
      %p88 = scmp.eq.s32.totalorder %s22, 0
      %p89 = por %p87, %p88
      %p90 = scmp.ne.s32.totalorder %s76, %s77
      %p91 = scmp.eq.s32.totalorder %s23, 3
      %p92 = por %p90, %p91
      %p94 = scmp.ne.s32.totalorder %s77, %s93
      %p95 = scmp.eq.s32.totalorder %s23, 0
      %p96 = por %p94, %p95
      %s98 = sadd.s32 %s97, 1
      %p101 = scmp.eq.s32.totalorder %s17, 3
      %p102 = scmp.ne.s32.totalorder %s97, %s99
      %p103 = scmp.eq.s32.totalorder %s17, 0
      %p104 = por %p102, %p103
      %p105 = scmp.ne.s32.totalorder %s97, %s99
      %p106 = scmp.eq.s32.totalorder %s22, 3
      %p107 = por %p105, %p106
      %p108 = scmp.ne.s32.totalorder %s99, %s100
      %p109 = scmp.eq.s32.totalorder %s22, 0
      %p110 = por %p108, %p109
      %p111 = scmp.ne.s32.totalorder %s99, %s100
      %p112 = scmp.eq.s32.totalorder %s23, 3
      %p113 = por %p111, %p112
      %p115 = scmp.ne.s32.totalorder %s100, %s114
      %p116 = scmp.eq.s32.totalorder %s23, 0
      %p117 = por %p115, %p116
      %s119 = sadd.s32 %s118, 1
      %p122 = scmp.eq.s32.totalorder %s17, 3
      %p123 = scmp.ne.s32.totalorder %s118, %s120
      %p124 = scmp.eq.s32.totalorder %s17, 0
      %p125 = por %p123, %p124
      %p126 = scmp.ne.s32.totalorder %s118, %s120
      %p127 = scmp.eq.s32.totalorder %s22, 3
      %p128 = por %p126, %p127
      %p129 = scmp.ne.s32.totalorder %s120, %s121
      %p130 = scmp.eq.s32.totalorder %s22, 0
      %p131 = por %p129, %p130
      %p132 = scmp.ne.s32.totalorder %s120, %s121
      %p133 = scmp.eq.s32.totalorder %s23, 3
      %p134 = por %p132, %p133
      %p136 = scmp.ne.s32.totalorder %s121, %s135
      %p137 = scmp.eq.s32.totalorder %s23, 0
      %p138 = por %p136, %p137
      %s140 = sadd.s32 %s139, 1
      %p143 = scmp.eq.s32.totalorder %s17, 3
      %p144 = scmp.ne.s32.totalorder %s139, %s141
      %p145 = scmp.eq.s32.totalorder %s17, 0
      %p146 = por %p144, %p145
      %p147 = scmp.ne.s32.totalorder %s139, %s141
      %p148 = scmp.eq.s32.totalorder %s22, 3
      %p149 = por %p147, %p148
      %p150 = scmp.ne.s32.totalorder %s141, %s142
      %p151 = scmp.eq.s32.totalorder %s22, 0
      %p152 = por %p150, %p151
      %p153 = scmp.ne.s32.totalorder %s141, %s142
      %p154 = scmp.eq.s32.totalorder %s23, 3
      %p155 = por %p153, %p154
      %p157 = scmp.ne.s32.totalorder %s142, %s156
      %p158 = scmp.eq.s32.totalorder %s23, 0
      %p159 = por %p157, %p158
      %s161 = sadd.s32 %s160, 1
      %p164 = scmp.eq.s32.totalorder %s17, 3
      %p165 = scmp.ne.s32.totalorder %s160, %s162
      %p166 = scmp.eq.s32.totalorder %s17, 0
      %p167 = por %p165, %p166
      %p168 = scmp.ne.s32.totalorder %s160, %s162
      %p169 = scmp.eq.s32.totalorder %s22, 3
      %p170 = por %p168, %p169
      %p171 = scmp.ne.s32.totalorder %s162, %s163
      %p172 = scmp.eq.s32.totalorder %s22, 0
      %p173 = por %p171, %p172
      %p174 = scmp.ne.s32.totalorder %s162, %s163
      %p175 = scmp.eq.s32.totalorder %s23, 3
      %p176 = por %p174, %p175
      %p178 = scmp.ne.s32.totalorder %s163, %s177
      %p179 = scmp.eq.s32.totalorder %s23, 0
      %p180 = por %p178, %p179
      %s182 = sadd.s32 %s181, 1
      %p185 = scmp.eq.s32.totalorder %s17, 3
      %p186 = scmp.ne.s32.totalorder %s181, %s183
      %p187 = scmp.eq.s32.totalorder %s17, 0
      %p188 = por %p186, %p187
      %p189 = scmp.ne.s32.totalorder %s181, %s183
      %p190 = scmp.eq.s32.totalorder %s22, 3
      %p191 = por %p189, %p190
      %p192 = scmp.ne.s32.totalorder %s183, %s184
      %p193 = scmp.eq.s32.totalorder %s22, 0
      %p194 = por %p192, %p193
      %p195 = scmp.ne.s32.totalorder %s183, %s184
      %p196 = scmp.eq.s32.totalorder %s23, 3
      %p197 = por %p195, %p196
      %p199 = scmp.ne.s32.totalorder %s184, %s198
      %p200 = scmp.eq.s32.totalorder %s23, 0
      %p201 = por %p199, %p200
      %s203 = sadd.s32 %s202, 1
      %p206 = scmp.eq.s32.totalorder %s17, 3
      %p207 = scmp.ne.s32.totalorder %s202, %s204
      %p208 = scmp.eq.s32.totalorder %s17, 0
      %p209 = por %p207, %p208
      %p210 = scmp.ne.s32.totalorder %s202, %s204
      %p211 = scmp.eq.s32.totalorder %s22, 3
      %p212 = por %p210, %p211
      %p213 = scmp.ne.s32.totalorder %s204, %s205
      %p214 = scmp.eq.s32.totalorder %s22, 0
      %p215 = por %p213, %p214
      %p216 = scmp.ne.s32.totalorder %s204, %s205
      %p217 = scmp.eq.s32.totalorder %s23, 3
      %p218 = por %p216, %p217
      %p220 = scmp.ne.s32.totalorder %s205, %s219
      %p221 = scmp.eq.s32.totalorder %s23, 0
      %p222 = por %p220, %p221
      %s223 = ssub.s32 %s24, %s36
      %s224 = ssub.s32 %s25, %s32
      %s225 = sor.u32 %s223, %s224
      %p226 = scmp.eq.s32.totalorder %s225, 0
      %s228 = sadd.s32 %s227, 1
      %s229 = scalar_select %p226, %s227, %s228
      %p232 = pneg %p226
      %p233 = scmp.eq.s32.totalorder %s17, 3
      %p234 = por %p232, %p233
      %p235 = scmp.ne.s32.totalorder %s227, %s230
      %p236 = scmp.eq.s32.totalorder %s17, 0
      %p237 = por %p235, %p236
      %p238 = scmp.ne.s32.totalorder %s227, %s230
      %p239 = scmp.eq.s32.totalorder %s22, 3
      %p240 = por %p238, %p239
      %p241 = scmp.ne.s32.totalorder %s230, %s231
      %p242 = scmp.eq.s32.totalorder %s22, 0
      %p243 = por %p241, %p242
      %p244 = scmp.ne.s32.totalorder %s230, %s231
      %p245 = scmp.eq.s32.totalorder %s23, 3
      %p246 = por %p244, %p245
      %p248 = scmp.ne.s32.totalorder %s231, %s247
      %p249 = scmp.eq.s32.totalorder %s23, 0
      %p250 = por %p248, %p249
      %p251 = scmp.le.s32.totalorder 1, %s17
      %p252 = scmp.lt.s32.totalorder %s17, 5
      %p253 = pnand %p251, %p252
      %p254 = pneg %p253
      // Predicated region
      $region9: #{tpu_custom_call.1} parent=5 // pred_check
        _
      $region10: #{tpu_custom_call.1} parent=5 // pred_check_branch
        %256 = sbr.rel (%p253) target = $region12
      $region11: #{tpu_custom_call.1} parent=5 // pred_region
        %s257 = ssub.s32 %s17, 1
        // Predicated region
        $region13: #{tpu_custom_call.1} parent=11 // pred_check
          %p258 = pneg %p110
        $region14: #{tpu_custom_call.1} parent=11 // pred_check_branch
          %260 = sbr.rel (%p258) target = $region16
        $region15: #{tpu_custom_call.1} parent=11 // pred_region
          _
        $region16: #{tpu_custom_call.1} parent=11 // pred_fallthru
          _
        // Predicated region
        $region17: #{tpu_custom_call.1} parent=11 // pred_check
          %p261 = pneg %p131
        $region18: #{tpu_custom_call.1} parent=11 // pred_check_branch
          %263 = sbr.rel (%p261) target = $region20
        $region19: #{tpu_custom_call.1} parent=11 // pred_region
          _
        $region20: #{tpu_custom_call.1} parent=11 // pred_fallthru
          _
        // Predicated region
        $region21: #{tpu_custom_call.1} parent=11 // pred_check
          %p264 = pneg %p152
        $region22: #{tpu_custom_call.1} parent=11 // pred_check_branch
          %266 = sbr.rel (%p264) target = $region24
        $region23: #{tpu_custom_call.1} parent=11 // pred_region
          _
        $region24: #{tpu_custom_call.1} parent=11 // pred_fallthru
          _
        // Predicated region
        $region25: #{tpu_custom_call.1} parent=11 // pred_check
          %p267 = pneg %p173
        $region26: #{tpu_custom_call.1} parent=11 // pred_check_branch
          %269 = sbr.rel (%p267) target = $region28
        $region27: #{tpu_custom_call.1} parent=11 // pred_region
          _
        $region28: #{tpu_custom_call.1} parent=11 // pred_fallthru
          _
        // Predicated region
        $region29: #{tpu_custom_call.1} parent=11 // pred_check
          %p270 = pneg %p194
        $region30: #{tpu_custom_call.1} parent=11 // pred_check_branch
          %272 = sbr.rel (%p270) target = $region32
        $region31: #{tpu_custom_call.1} parent=11 // pred_region
          _
        $region32: #{tpu_custom_call.1} parent=11 // pred_fallthru
          _
        // Predicated region
        $region33: #{tpu_custom_call.1} parent=11 // pred_check
          %p273 = pneg %p215
        $region34: #{tpu_custom_call.1} parent=11 // pred_check_branch
          %275 = sbr.rel (%p273) target = $region36
        $region35: #{tpu_custom_call.1} parent=11 // pred_region
          _
        $region36: #{tpu_custom_call.1} parent=11 // pred_fallthru
          _
      $region12: #{tpu_custom_call.1} parent=5 // pred_fallthru
        _
      %p276 = scmp.lt.s32.totalorder %s17, 4
      // Predicated region
      $region37: #{tpu_custom_call.1} parent=5 // pred_check
        %p277 = pneg %p276
      $region38: #{tpu_custom_call.1} parent=5 // pred_check_branch
        %279 = sbr.rel (%p277) target = $region40
      $region39: #{tpu_custom_call.1} parent=5 // pred_region
        // Predicated region
        $region41: #{tpu_custom_call.1} parent=39 // pred_check
          %p280 = pneg %p53
        $region42: #{tpu_custom_call.1} parent=39 // pred_check_branch
          %282 = sbr.rel (%p280) target = $region44
        $region43: #{tpu_custom_call.1} parent=39 // pred_region
          %s283 = smul.u32 %s24, 2
          %s284 = sadd.s32 %s283, %s25
          %p285 = scmp.lt.s32.totalorder %s284, 3
          %s286 = scalar_select %p285, %s284, 3
          %s287 = smul.addr %s286, 36
          %s288 = smul.addr %s287, 4
          %s289 = scalar_lea.vmem %s0, %s288
          %s290 = smul.u32 %s24, 2
          %s291 = sadd.s32 %s290, %s25
        $region44: #{tpu_custom_call.1} parent=39 // pred_fallthru
          _
        // Predicated region
        $region45: #{tpu_custom_call.1} parent=39 // pred_check
          %p292 = pneg %p83
        $region46: #{tpu_custom_call.1} parent=39 // pred_check_branch
          %294 = sbr.rel (%p292) target = $region48
        $region47: #{tpu_custom_call.1} parent=39 // pred_region
          %s295 = smul.u32 %s24, 2
          %s296 = sadd.s32 %s295, %s25
          %p297 = scmp.lt.s32.totalorder %s296, 3
          %s298 = scalar_select %p297, %s296, 3
          %s299 = smul.addr %s298, 36
          %s300 = smul.addr %s299, 4
          %s301 = scalar_lea.vmem %s1, %s300
          %s302 = smul.u32 %s24, 2
          %s303 = sadd.s32 %s302, %s25
        $region48: #{tpu_custom_call.1} parent=39 // pred_fallthru
          _
      $region40: #{tpu_custom_call.1} parent=5 // pred_fallthru
        _
      %p304 = scmp.le.s32.totalorder 1, %s17
      %p305 = scmp.lt.s32.totalorder %s17, 5
      %p306 = pnand %p304, %p305
      %p307 = pneg %p306
      // Predicated region
      $region49: #{tpu_custom_call.1} parent=5 // pred_check
        _
      $region50: #{tpu_custom_call.1} parent=5 // pred_check_branch
        %309 = sbr.rel (%p306) target = $region52
      $region51: #{tpu_custom_call.1} parent=5 // pred_region
        %s310 = ssub.s32 %s17, 1
        %s311 = smul.u32 %s26, 2
        %s312 = sadd.s32 %s311, %s27
        %p313 = scmp.lt.s32.totalorder %s312, 3
        %s314 = scalar_select %p313, %s312, 3
        %s315 = smul.addr %s314, 36
        %s316 = smul.addr %s315, 4
        %s317 = scalar_lea.vmem %s0, %s316
        %p318 = pneg %p59
        %p319 = pneg %p56
        %s320 = smul.u32 %s26, 2
        %s321 = sadd.s32 %s320, %s27
        %p322 = scmp.lt.s32.totalorder %s321, 3
        %s323 = scalar_select %p322, %s321, 3
        %s324 = smul.addr %s323, 36
        %s325 = smul.addr %s324, 4
        %s326 = scalar_lea.vmem %s1, %s325
        %p327 = pneg %p89
        %p328 = pneg %p86
        %p329 = pneg %p110
        %p330 = pneg %p107
        %p331 = pneg %p131
        %p332 = pneg %p128
        %p333 = pneg %p152
        %p334 = pneg %p149
        %p335 = pneg %p173
        %p336 = pneg %p170
        %p337 = pneg %p194
        %p338 = pneg %p191
        %p339 = pneg %p215
        %p340 = pneg %p212
        %p341 = pneg %p243
        %p342 = pneg %p240
        %s343 = sand.u32 %s230, 1
        %s344 = scalar_lea.sflag [#allocation4], %s343
        %s345 = sand.u32 %s230, 1
        %s346 = smul.addr %s345, 4
        %s347 = scalar_lea.vmem [#allocation3], %s346
        %s348 = smul.u32 %s26, 2
        %s349 = sadd.s32 %s348, %s27
        %p350 = scmp.lt.s32.totalorder %s349, 3
        %s351 = scalar_select %p350, %s349, 3
        %s352 = smul.addr %s351, 36
        %s353 = smul.addr %s352, 4
        %s354 = scalar_lea.vmem %s0, %s353
        %s355 = smul.u32 %s26, 2
        %s356 = sadd.s32 %s355, %s27
        %s357 = smul.u32 %s26, 2
        %s358 = sadd.s32 %s357, %s27
        %p359 = scmp.lt.s32.totalorder %s358, 3
        %s360 = scalar_select %p359, %s358, 3
        %s361 = smul.addr %s360, 36
        %s362 = smul.addr %s361, 4
        %s363 = scalar_lea.vmem %s1, %s362
        %s364 = smul.u32 %s26, 2
        %s365 = sadd.s32 %s364, %s27
        %v367 = vld [vmem:[%s354] sm:$0xf]
        %v368 = vld [vmem:[%s354 + $0x4] sm:$0xf]
        %v369 = vld [vmem:[%s354 + $0x8] sm:$0x1]
        %v370 = vld [vmem:[%s354 + $0xc] sm:$0xf]
        %v371 = vld [vmem:[%s354 + $0x10] sm:$0xf]
        %v372 = vld [vmem:[%s354 + $0x14] sm:$0x1]
        %v373 = vld [vmem:[%s354 + $0x18] sm:$0xf]
        %v374 = vld [vmem:[%s354 + $0x1c] sm:$0xf]
        %v375 = vld [vmem:[%s354 + $0x20] sm:$0x1]
        %v376 = vld [vmem:[%s354 + $0x24] sm:$0xf]
        %v377 = vld [vmem:[%s354 + $0x28] sm:$0xf]
        %v378 = vld [vmem:[%s354 + $0x2c] sm:$0x1]
        %v379 = vld [vmem:[%s354 + $0x30] sm:$0xf]
        %v380 = vld [vmem:[%s354 + $0x34] sm:$0xf]
        %v381 = vld [vmem:[%s354 + $0x38] sm:$0x1]
        %v382 = vld [vmem:[%s354 + $0x3c] sm:$0xf]
        %v383 = vld [vmem:[%s354 + $0x40] sm:$0xf]
        %v384 = vld [vmem:[%s354 + $0x44] sm:$0x1]
        %v385 = vld [vmem:[%s354 + $0x48] sm:$0xf]
        %v386 = vld [vmem:[%s354 + $0x4c] sm:$0xf]
        %v387 = vld [vmem:[%s354 + $0x50] sm:$0x1]
        %v388 = vld [vmem:[%s354 + $0x54] sm:$0xf]
        %v389 = vld [vmem:[%s354 + $0x58] sm:$0xf]
        %v390 = vld [vmem:[%s354 + $0x5c] sm:$0x1]
        %v391 = vld [vmem:[%s354 + $0x60] sm:$0xf]
        %v392 = vld [vmem:[%s354 + $0x64] sm:$0xf]
        %v393 = vld [vmem:[%s354 + $0x68] sm:$0x1]
        %v394 = vld [vmem:[%s354 + $0x6c] sm:$0xf]
        %v395 = vld [vmem:[%s354 + $0x70] sm:$0xf]
        %v396 = vld [vmem:[%s354 + $0x74] sm:$0x1]
        %v397 = vld [vmem:[%s354 + $0x78] sm:$0xf]
        %v398 = vld [vmem:[%s354 + $0x7c] sm:$0xf]
        %v399 = vld [vmem:[%s354 + $0x80] sm:$0x1]
        %v400 = vld [vmem:[%s354 + $0x84] sm:$0xf]
        %v401 = vld [vmem:[%s354 + $0x88] sm:$0xf]
        %v402 = vld [vmem:[%s354 + $0x8c] sm:$0x1]
        %v403 = vld [vmem:[%s363] sm:$0xf]
        %v404 = vld [vmem:[%s363 + $0x4] sm:$0xf]
        %v405 = vld [vmem:[%s363 + $0x8] sm:$0x1]
        %v406 = vld [vmem:[%s363 + $0xc] sm:$0xf]
        %v407 = vld [vmem:[%s363 + $0x10] sm:$0xf]
        %v408 = vld [vmem:[%s363 + $0x14] sm:$0x1]
        %v409 = vld [vmem:[%s363 + $0x18] sm:$0xf]
        %v410 = vld [vmem:[%s363 + $0x1c] sm:$0xf]
        %v411 = vld [vmem:[%s363 + $0x20] sm:$0x1]
        %v412 = vld [vmem:[%s363 + $0x24] sm:$0xf]
        %v413 = vld [vmem:[%s363 + $0x28] sm:$0xf]
        %v414 = vld [vmem:[%s363 + $0x2c] sm:$0x1]
        %v415 = vld [vmem:[%s363 + $0x30] sm:$0xf]
        %v416 = vld [vmem:[%s363 + $0x34] sm:$0xf]
        %v417 = vld [vmem:[%s363 + $0x38] sm:$0x1]
        %v418 = vld [vmem:[%s363 + $0x3c] sm:$0xf]
        %v419 = vld [vmem:[%s363 + $0x40] sm:$0xf]
        %v420 = vld [vmem:[%s363 + $0x44] sm:$0x1]
        %v421 = vld [vmem:[%s363 + $0x48] sm:$0xf]
        %v422 = vld [vmem:[%s363 + $0x4c] sm:$0xf]
        %v423 = vld [vmem:[%s363 + $0x50] sm:$0x1]
        %v424 = vld [vmem:[%s363 + $0x54] sm:$0xf]
        %v425 = vld [vmem:[%s363 + $0x58] sm:$0xf]
        %v426 = vld [vmem:[%s363 + $0x5c] sm:$0x1]
        %v427 = vld [vmem:[%s363 + $0x60] sm:$0xf]
        %v428 = vld [vmem:[%s363 + $0x64] sm:$0xf]
        %v429 = vld [vmem:[%s363 + $0x68] sm:$0x1]
        %v430 = vld [vmem:[%s363 + $0x6c] sm:$0xf]
        %v431 = vld [vmem:[%s363 + $0x70] sm:$0xf]
        %v432 = vld [vmem:[%s363 + $0x74] sm:$0x1]
        %v433 = vld [vmem:[%s363 + $0x78] sm:$0xf]
        %v434 = vld [vmem:[%s363 + $0x7c] sm:$0xf]
        %v435 = vld [vmem:[%s363 + $0x80] sm:$0x1]
        %v436 = vld [vmem:[%s363 + $0x84] sm:$0xf]
        %v437 = vld [vmem:[%s363 + $0x88] sm:$0xf]
        %v438 = vld [vmem:[%s363 + $0x8c] sm:$0x1]
        %vm439 = vsmask.f32 3328
        %vm440 = vsmask.f32 7440
        %vm441 = vmor %vm439, %vm440
        %v443 = vshrl.u32 %v367, 16
        %v445 = vrot.slane %v443, 4
        %v446 = vshll.u32 %v367, 16
        %v448 = vrot.slane %v446, 5
        %v449 = vor.u32 %v445, %v448
        %v450 = vrot.slane %v449, 4
        %v452 = vshll.u32 %v368, 16
        %v454 = vrot.slane %v452, 5
        %v455 = vsel %vm441, %v450, %v454
        %v456 = vshrl.u32 %v368, 16
        %v458 = vrot.slane %v456, 4
        %v459 = vor.u32 %v458, %v454
        %v460 = vrot.slane %v459, 4
        %v462 = vshll.u32 %v369, 16
        %v464 = vrot.slane %v462, 5
        %v465 = vsel %vm441, %v460, %v464
        %v467 = vshrl.u32 %v370, 16
        %v469 = vrot.slane %v467, 4
        %v470 = vshll.u32 %v370, 16
        %v472 = vrot.slane %v470, 5
        %v473 = vor.u32 %v469, %v472
        %v474 = vrot.slane %v473, 4
        %v476 = vshll.u32 %v371, 16
        %v478 = vrot.slane %v476, 5
        %v479 = vsel %vm441, %v474, %v478
        %v480 = vshrl.u32 %v371, 16
        %v482 = vrot.slane %v480, 4
        %v483 = vor.u32 %v482, %v478
        %v484 = vrot.slane %v483, 4
        %v486 = vshll.u32 %v372, 16
        %v488 = vrot.slane %v486, 5
        %v489 = vsel %vm441, %v484, %v488
        %v491 = vshrl.u32 %v373, 16
        %v493 = vrot.slane %v491, 4
        %v494 = vshll.u32 %v373, 16
        %v496 = vrot.slane %v494, 5
        %v497 = vor.u32 %v493, %v496
        %v498 = vrot.slane %v497, 4
        %v500 = vshll.u32 %v374, 16
        %v502 = vrot.slane %v500, 5
        %v503 = vsel %vm441, %v498, %v502
        %v504 = vshrl.u32 %v374, 16
        %v506 = vrot.slane %v504, 4
        %v507 = vor.u32 %v506, %v502
        %v508 = vrot.slane %v507, 4
        %v510 = vshll.u32 %v375, 16
        %v512 = vrot.slane %v510, 5
        %v513 = vsel %vm441, %v508, %v512
        %v515 = vshrl.u32 %v376, 16
        %v517 = vrot.slane %v515, 4
        %v518 = vshll.u32 %v376, 16
        %v520 = vrot.slane %v518, 5
        %v521 = vor.u32 %v517, %v520
        %v522 = vrot.slane %v521, 4
        %v524 = vshll.u32 %v377, 16
        %v526 = vrot.slane %v524, 5
        %v527 = vsel %vm441, %v522, %v526
        %v528 = vshrl.u32 %v377, 16
        %v530 = vrot.slane %v528, 4
        %v531 = vor.u32 %v530, %v526
        %v532 = vrot.slane %v531, 4
        %v534 = vshll.u32 %v378, 16
        %v536 = vrot.slane %v534, 5
        %v537 = vsel %vm441, %v532, %v536
        %v539 = vshrl.u32 %v379, 16
        %v541 = vrot.slane %v539, 4
        %v542 = vshll.u32 %v379, 16
        %v544 = vrot.slane %v542, 5
        %v545 = vor.u32 %v541, %v544
        %v546 = vrot.slane %v545, 4
        %v548 = vshll.u32 %v380, 16
        %v550 = vrot.slane %v548, 5
        %v551 = vsel %vm441, %v546, %v550
        %v552 = vshrl.u32 %v380, 16
        %v554 = vrot.slane %v552, 4
        %v555 = vor.u32 %v554, %v550
        %v556 = vrot.slane %v555, 4
        %v558 = vshll.u32 %v381, 16
        %v560 = vrot.slane %v558, 5
        %v561 = vsel %vm441, %v556, %v560
        %v563 = vshrl.u32 %v382, 16
        %v565 = vrot.slane %v563, 4
        %v566 = vshll.u32 %v382, 16
        %v568 = vrot.slane %v566, 5
        %v569 = vor.u32 %v565, %v568
        %v570 = vrot.slane %v569, 4
        %v572 = vshll.u32 %v383, 16
        %v574 = vrot.slane %v572, 5
        %v575 = vsel %vm441, %v570, %v574
        %v576 = vshrl.u32 %v383, 16
        %v578 = vrot.slane %v576, 4
        %v579 = vor.u32 %v578, %v574
        %v580 = vrot.slane %v579, 4
        %v582 = vshll.u32 %v384, 16
        %v584 = vrot.slane %v582, 5
        %v585 = vsel %vm441, %v580, %v584
        %v587 = vshrl.u32 %v385, 16
        %v589 = vrot.slane %v587, 4
        %v590 = vshll.u32 %v385, 16
        %v592 = vrot.slane %v590, 5
        %v593 = vor.u32 %v589, %v592
        %v594 = vrot.slane %v593, 4
        %v596 = vshll.u32 %v386, 16
        %v598 = vrot.slane %v596, 5
        %v599 = vsel %vm441, %v594, %v598
        %v600 = vshrl.u32 %v386, 16
        %v602 = vrot.slane %v600, 4
        %v603 = vor.u32 %v602, %v598
        %v604 = vrot.slane %v603, 4
        %v606 = vshll.u32 %v387, 16
        %v608 = vrot.slane %v606, 5
        %v609 = vsel %vm441, %v604, %v608
        %v611 = vshrl.u32 %v388, 16
        %v613 = vrot.slane %v611, 4
        %v614 = vshll.u32 %v388, 16
        %v616 = vrot.slane %v614, 5
        %v617 = vor.u32 %v613, %v616
        %v618 = vrot.slane %v617, 4
        %v620 = vshll.u32 %v389, 16
        %v622 = vrot.slane %v620, 5
        %v623 = vsel %vm441, %v618, %v622
        %v624 = vshrl.u32 %v389, 16
        %v626 = vrot.slane %v624, 4
        %v627 = vor.u32 %v626, %v622
        %v628 = vrot.slane %v627, 4
        %v630 = vshll.u32 %v390, 16
        %v632 = vrot.slane %v630, 5
        %v633 = vsel %vm441, %v628, %v632
        %v635 = vshrl.u32 %v391, 16
        %v637 = vrot.slane %v635, 4
        %v638 = vshll.u32 %v391, 16
        %v640 = vrot.slane %v638, 5
        %v641 = vor.u32 %v637, %v640
        %v642 = vrot.slane %v641, 4
        %v644 = vshll.u32 %v392, 16
        %v646 = vrot.slane %v644, 5
        %v647 = vsel %vm441, %v642, %v646
        %v648 = vshrl.u32 %v392, 16
        %v650 = vrot.slane %v648, 4
        %v651 = vor.u32 %v650, %v646
        %v652 = vrot.slane %v651, 4
        %v654 = vshll.u32 %v393, 16
        %v656 = vrot.slane %v654, 5
        %v657 = vsel %vm441, %v652, %v656
        %v659 = vshrl.u32 %v394, 16
        %v661 = vrot.slane %v659, 4
        %v662 = vshll.u32 %v394, 16
        %v664 = vrot.slane %v662, 5
        %v665 = vor.u32 %v661, %v664
        %v666 = vrot.slane %v665, 4
        %v668 = vshll.u32 %v395, 16
        %v670 = vrot.slane %v668, 5
        %v671 = vsel %vm441, %v666, %v670
        %v672 = vshrl.u32 %v395, 16
        %v674 = vrot.slane %v672, 4
        %v675 = vor.u32 %v674, %v670
        %v676 = vrot.slane %v675, 4
        %v678 = vshll.u32 %v396, 16
        %v680 = vrot.slane %v678, 5
        %v681 = vsel %vm441, %v676, %v680
        %vm712 = vcmask 1042432
        %vm713 = vcmask 1046532
        %vm714 = vmor %vm712, %vm713
        %v715 = vrot.slane %v367, 5
        %v716 = vrot.slane %v715, 4
        %v717 = vrot.slane %v368, 5
        %v718 = vsel %vm714, %v716, %v717
        %v719 = vrot.slane %v717, 4
        %v720 = vrot.slane %v369, 5
        %v721 = vsel %vm714, %v719, %v720
        %v722 = vrot.slane %v370, 5
        %v723 = vrot.slane %v722, 4
        %v724 = vrot.slane %v371, 5
        %v725 = vsel %vm714, %v723, %v724
        %v726 = vrot.slane %v724, 4
        %v727 = vrot.slane %v372, 5
        %v728 = vsel %vm714, %v726, %v727
        %v729 = vrot.slane %v373, 5
        %v730 = vrot.slane %v729, 4
        %v731 = vrot.slane %v374, 5
        %v732 = vsel %vm714, %v730, %v731
        %v733 = vrot.slane %v731, 4
        %v734 = vrot.slane %v375, 5
        %v735 = vsel %vm714, %v733, %v734
        %v736 = vrot.slane %v376, 5
        %v737 = vrot.slane %v736, 4
        %v738 = vrot.slane %v377, 5
        %v739 = vsel %vm714, %v737, %v738
        %v740 = vrot.slane %v738, 4
        %v741 = vrot.slane %v378, 5
        %v742 = vsel %vm714, %v740, %v741
        %v743 = vrot.slane %v379, 5
        %v744 = vrot.slane %v743, 4
        %v745 = vrot.slane %v380, 5
        %v746 = vsel %vm714, %v744, %v745
        %v747 = vrot.slane %v745, 4
        %v748 = vrot.slane %v381, 5
        %v749 = vsel %vm714, %v747, %v748
        %v750 = vrot.slane %v382, 5
        %v751 = vrot.slane %v750, 4
        %v752 = vrot.slane %v383, 5
        %v753 = vsel %vm714, %v751, %v752
        %v754 = vrot.slane %v752, 4
        %v755 = vrot.slane %v384, 5
        %v756 = vsel %vm714, %v754, %v755
        %v757 = vrot.slane %v385, 5
        %v758 = vrot.slane %v757, 4
        %v759 = vrot.slane %v386, 5
        %v760 = vsel %vm714, %v758, %v759
        %v761 = vrot.slane %v759, 4
        %v762 = vrot.slane %v387, 5
        %v763 = vsel %vm714, %v761, %v762
        %v764 = vrot.slane %v388, 5
        %v765 = vrot.slane %v764, 4
        %v766 = vrot.slane %v389, 5
        %v767 = vsel %vm714, %v765, %v766
        %v768 = vrot.slane %v766, 4
        %v769 = vrot.slane %v390, 5
        %v770 = vsel %vm714, %v768, %v769
        %v771 = vrot.slane %v391, 5
        %v772 = vrot.slane %v771, 4
        %v773 = vrot.slane %v392, 5
        %v774 = vsel %vm714, %v772, %v773
        %v775 = vrot.slane %v773, 4
        %v776 = vrot.slane %v393, 5
        %v777 = vsel %vm714, %v775, %v776
        %v778 = vrot.slane %v394, 5
        %v779 = vrot.slane %v778, 4
        %v780 = vrot.slane %v395, 5
        %v781 = vsel %vm714, %v779, %v780
        %v782 = vrot.slane %v780, 4
        %v783 = vrot.slane %v396, 5
        %v784 = vsel %vm714, %v782, %v783
        %v786 = vshrl.u32 %v397, 16
        %v788 = vrot.slane %v786, 4
        %v789 = vshll.u32 %v397, 16
        %v791 = vrot.slane %v789, 5
        %v792 = vor.u32 %v788, %v791
        %v793 = vrot.slane %v792, 4
        %v795 = vshll.u32 %v398, 16
        %v797 = vrot.slane %v795, 5
        %v798 = vsel %vm441, %v793, %v797
        %v799 = vshrl.u32 %v398, 16
        %v801 = vrot.slane %v799, 4
        %v802 = vor.u32 %v801, %v797
        %v803 = vrot.slane %v802, 4
        %v805 = vshll.u32 %v399, 16
        %v807 = vrot.slane %v805, 5
        %v808 = vsel %vm441, %v803, %v807
        %v812 = vrot.slane %v397, 5
        %v813 = vrot.slane %v812, 4
        %v814 = vrot.slane %v398, 5
        %v815 = vsel %vm714, %v813, %v814
        %v816 = vrot.slane %v814, 4
        %v817 = vrot.slane %v399, 5
        %v818 = vsel %vm714, %v816, %v817
        %v820 = vshrl.u32 %v400, 16
        %v822 = vrot.slane %v820, 4
        %v823 = vshll.u32 %v400, 16
        %v825 = vrot.slane %v823, 5
        %v826 = vor.u32 %v822, %v825
        %v827 = vrot.slane %v826, 4
        %v829 = vshll.u32 %v401, 16
        %v831 = vrot.slane %v829, 5
        %v832 = vsel %vm441, %v827, %v831
        %v833 = vshrl.u32 %v401, 16
        %v835 = vrot.slane %v833, 4
        %v836 = vor.u32 %v835, %v831
        %v837 = vrot.slane %v836, 4
        %v839 = vshll.u32 %v402, 16
        %v841 = vrot.slane %v839, 5
        %v842 = vsel %vm441, %v837, %v841
        %v846 = vrot.slane %v400, 5
        %v847 = vrot.slane %v846, 4
        %v848 = vrot.slane %v401, 5
        %v849 = vsel %vm714, %v847, %v848
        %v850 = vrot.slane %v848, 4
        %v851 = vrot.slane %v402, 5
        %v852 = vsel %vm714, %v850, %v851
        %v854 = vshrl.u32 %v403, 16
        %v856 = vrot.slane %v854, 4
        %v857 = vshll.u32 %v403, 16
        %v859 = vrot.slane %v857, 5
        %v860 = vor.u32 %v856, %v859
        %v861 = vrot.slane %v860, 4
        %v863 = vshll.u32 %v404, 16
        %v865 = vrot.slane %v863, 5
        %v866 = vsel %vm441, %v861, %v865
        %v867 = vshrl.u32 %v404, 16
        %v869 = vrot.slane %v867, 4
        %v870 = vor.u32 %v869, %v865
        %v871 = vrot.slane %v870, 4
        %v873 = vshll.u32 %v405, 16
        %v875 = vrot.slane %v873, 5
        %v876 = vsel %vm441, %v871, %v875
        %v878 = vshrl.u32 %v406, 16
        %v880 = vrot.slane %v878, 4
        %v881 = vshll.u32 %v406, 16
        %v883 = vrot.slane %v881, 5
        %v884 = vor.u32 %v880, %v883
        %v885 = vrot.slane %v884, 4
        %v887 = vshll.u32 %v407, 16
        %v889 = vrot.slane %v887, 5
        %v890 = vsel %vm441, %v885, %v889
        %v891 = vshrl.u32 %v407, 16
        %v893 = vrot.slane %v891, 4
        %v894 = vor.u32 %v893, %v889
        %v895 = vrot.slane %v894, 4
        %v897 = vshll.u32 %v408, 16
        %v899 = vrot.slane %v897, 5
        %v900 = vsel %vm441, %v895, %v899
        %v902 = vshrl.u32 %v409, 16
        %v904 = vrot.slane %v902, 4
        %v905 = vshll.u32 %v409, 16
        %v907 = vrot.slane %v905, 5
        %v908 = vor.u32 %v904, %v907
        %v909 = vrot.slane %v908, 4
        %v911 = vshll.u32 %v410, 16
        %v913 = vrot.slane %v911, 5
        %v914 = vsel %vm441, %v909, %v913
        %v915 = vshrl.u32 %v410, 16
        %v917 = vrot.slane %v915, 4
        %v918 = vor.u32 %v917, %v913
        %v919 = vrot.slane %v918, 4
        %v921 = vshll.u32 %v411, 16
        %v923 = vrot.slane %v921, 5
        %v924 = vsel %vm441, %v919, %v923
        %v926 = vshrl.u32 %v412, 16
        %v928 = vrot.slane %v926, 4
        %v929 = vshll.u32 %v412, 16
        %v931 = vrot.slane %v929, 5
        %v932 = vor.u32 %v928, %v931
        %v933 = vrot.slane %v932, 4
        %v935 = vshll.u32 %v413, 16
        %v937 = vrot.slane %v935, 5
        %v938 = vsel %vm441, %v933, %v937
        %v939 = vshrl.u32 %v413, 16
        %v941 = vrot.slane %v939, 4
        %v942 = vor.u32 %v941, %v937
        %v943 = vrot.slane %v942, 4
        %v945 = vshll.u32 %v414, 16
        %v947 = vrot.slane %v945, 5
        %v948 = vsel %vm441, %v943, %v947
        %v950 = vshrl.u32 %v415, 16
        %v952 = vrot.slane %v950, 4
        %v953 = vshll.u32 %v415, 16
        %v955 = vrot.slane %v953, 5
        %v956 = vor.u32 %v952, %v955
        %v957 = vrot.slane %v956, 4
        %v959 = vshll.u32 %v416, 16
        %v961 = vrot.slane %v959, 5
        %v962 = vsel %vm441, %v957, %v961
        %v963 = vshrl.u32 %v416, 16
        %v965 = vrot.slane %v963, 4
        %v966 = vor.u32 %v965, %v961
        %v967 = vrot.slane %v966, 4
        %v969 = vshll.u32 %v417, 16
        %v971 = vrot.slane %v969, 5
        %v972 = vsel %vm441, %v967, %v971
        %v974 = vshrl.u32 %v418, 16
        %v976 = vrot.slane %v974, 4
        %v977 = vshll.u32 %v418, 16
        %v979 = vrot.slane %v977, 5
        %v980 = vor.u32 %v976, %v979
        %v981 = vrot.slane %v980, 4
        %v983 = vshll.u32 %v419, 16
        %v985 = vrot.slane %v983, 5
        %v986 = vsel %vm441, %v981, %v985
        %v987 = vshrl.u32 %v419, 16
        %v989 = vrot.slane %v987, 4
        %v990 = vor.u32 %v989, %v985
        %v991 = vrot.slane %v990, 4
        %v993 = vshll.u32 %v420, 16
        %v995 = vrot.slane %v993, 5
        %v996 = vsel %vm441, %v991, %v995
        %v998 = vshrl.u32 %v421, 16
        %v1000 = vrot.slane %v998, 4
        %v1001 = vshll.u32 %v421, 16
        %v1003 = vrot.slane %v1001, 5
        %v1004 = vor.u32 %v1000, %v1003
        %v1005 = vrot.slane %v1004, 4
        %v1007 = vshll.u32 %v422, 16
        %v1009 = vrot.slane %v1007, 5
        %v1010 = vsel %vm441, %v1005, %v1009
        %v1011 = vshrl.u32 %v422, 16
        %v1013 = vrot.slane %v1011, 4
        %v1014 = vor.u32 %v1013, %v1009
        %v1015 = vrot.slane %v1014, 4
        %v1017 = vshll.u32 %v423, 16
        %v1019 = vrot.slane %v1017, 5
        %v1020 = vsel %vm441, %v1015, %v1019
        %v1022 = vshrl.u32 %v424, 16
        %v1024 = vrot.slane %v1022, 4
        %v1025 = vshll.u32 %v424, 16
        %v1027 = vrot.slane %v1025, 5
        %v1028 = vor.u32 %v1024, %v1027
        %v1029 = vrot.slane %v1028, 4
        %v1031 = vshll.u32 %v425, 16
        %v1033 = vrot.slane %v1031, 5
        %v1034 = vsel %vm441, %v1029, %v1033
        %v1035 = vshrl.u32 %v425, 16
        %v1037 = vrot.slane %v1035, 4
        %v1038 = vor.u32 %v1037, %v1033
        %v1039 = vrot.slane %v1038, 4
        %v1041 = vshll.u32 %v426, 16
        %v1043 = vrot.slane %v1041, 5
        %v1044 = vsel %vm441, %v1039, %v1043
        %v1046 = vshrl.u32 %v427, 16
        %v1048 = vrot.slane %v1046, 4
        %v1049 = vshll.u32 %v427, 16
        %v1051 = vrot.slane %v1049, 5
        %v1052 = vor.u32 %v1048, %v1051
        %v1053 = vrot.slane %v1052, 4
        %v1055 = vshll.u32 %v428, 16
        %v1057 = vrot.slane %v1055, 5
        %v1058 = vsel %vm441, %v1053, %v1057
        %v1059 = vshrl.u32 %v428, 16
        %v1061 = vrot.slane %v1059, 4
        %v1062 = vor.u32 %v1061, %v1057
        %v1063 = vrot.slane %v1062, 4
        %v1065 = vshll.u32 %v429, 16
        %v1067 = vrot.slane %v1065, 5
        %v1068 = vsel %vm441, %v1063, %v1067
        %v1070 = vshrl.u32 %v430, 16
        %v1072 = vrot.slane %v1070, 4
        %v1073 = vshll.u32 %v430, 16
        %v1075 = vrot.slane %v1073, 5
        %v1076 = vor.u32 %v1072, %v1075
        %v1077 = vrot.slane %v1076, 4
        %v1079 = vshll.u32 %v431, 16
        %v1081 = vrot.slane %v1079, 5
        %v1082 = vsel %vm441, %v1077, %v1081
        %v1083 = vshrl.u32 %v431, 16
        %v1085 = vrot.slane %v1083, 4
        %v1086 = vor.u32 %v1085, %v1081
        %v1087 = vrot.slane %v1086, 4
        %v1089 = vshll.u32 %v432, 16
        %v1091 = vrot.slane %v1089, 5
        %v1092 = vsel %vm441, %v1087, %v1091
        %v1123 = vrot.slane %v403, 5
        %v1124 = vrot.slane %v1123, 4
        %v1125 = vrot.slane %v404, 5
        %v1126 = vsel %vm714, %v1124, %v1125
        %v1127 = vrot.slane %v1125, 4
        %v1128 = vrot.slane %v405, 5
        %v1129 = vsel %vm714, %v1127, %v1128
        %v1130 = vrot.slane %v406, 5
        %v1131 = vrot.slane %v1130, 4
        %v1132 = vrot.slane %v407, 5
        %v1133 = vsel %vm714, %v1131, %v1132
        %v1134 = vrot.slane %v1132, 4
        %v1135 = vrot.slane %v408, 5
        %v1136 = vsel %vm714, %v1134, %v1135
        %v1137 = vrot.slane %v409, 5
        %v1138 = vrot.slane %v1137, 4
        %v1139 = vrot.slane %v410, 5
        %v1140 = vsel %vm714, %v1138, %v1139
        %v1141 = vrot.slane %v1139, 4
        %v1142 = vrot.slane %v411, 5
        %v1143 = vsel %vm714, %v1141, %v1142
        %v1144 = vrot.slane %v412, 5
        %v1145 = vrot.slane %v1144, 4
        %v1146 = vrot.slane %v413, 5
        %v1147 = vsel %vm714, %v1145, %v1146
        %v1148 = vrot.slane %v1146, 4
        %v1149 = vrot.slane %v414, 5
        %v1150 = vsel %vm714, %v1148, %v1149
        %v1151 = vrot.slane %v415, 5
        %v1152 = vrot.slane %v1151, 4
        %v1153 = vrot.slane %v416, 5
        %v1154 = vsel %vm714, %v1152, %v1153
        %v1155 = vrot.slane %v1153, 4
        %v1156 = vrot.slane %v417, 5
        %v1157 = vsel %vm714, %v1155, %v1156
        %v1158 = vrot.slane %v418, 5
        %v1159 = vrot.slane %v1158, 4
        %v1160 = vrot.slane %v419, 5
        %v1161 = vsel %vm714, %v1159, %v1160
        %v1162 = vrot.slane %v1160, 4
        %v1163 = vrot.slane %v420, 5
        %v1164 = vsel %vm714, %v1162, %v1163
        %v1165 = vrot.slane %v421, 5
        %v1166 = vrot.slane %v1165, 4
        %v1167 = vrot.slane %v422, 5
        %v1168 = vsel %vm714, %v1166, %v1167
        %v1169 = vrot.slane %v1167, 4
        %v1170 = vrot.slane %v423, 5
        %v1171 = vsel %vm714, %v1169, %v1170
        %v1172 = vrot.slane %v424, 5
        %v1173 = vrot.slane %v1172, 4
        %v1174 = vrot.slane %v425, 5
        %v1175 = vsel %vm714, %v1173, %v1174
        %v1176 = vrot.slane %v1174, 4
        %v1177 = vrot.slane %v426, 5
        %v1178 = vsel %vm714, %v1176, %v1177
        %v1179 = vrot.slane %v427, 5
        %v1180 = vrot.slane %v1179, 4
        %v1181 = vrot.slane %v428, 5
        %v1182 = vsel %vm714, %v1180, %v1181
        %v1183 = vrot.slane %v1181, 4
        %v1184 = vrot.slane %v429, 5
        %v1185 = vsel %vm714, %v1183, %v1184
        %v1186 = vrot.slane %v430, 5
        %v1187 = vrot.slane %v1186, 4
        %v1188 = vrot.slane %v431, 5
        %v1189 = vsel %vm714, %v1187, %v1188
        %v1190 = vrot.slane %v1188, 4
        %v1191 = vrot.slane %v432, 5
        %v1192 = vsel %vm714, %v1190, %v1191
        %v1194 = vshrl.u32 %v433, 16
        %v1196 = vrot.slane %v1194, 4
        %v1197 = vshll.u32 %v433, 16
        %v1199 = vrot.slane %v1197, 5
        %v1200 = vor.u32 %v1196, %v1199
        %v1201 = vrot.slane %v1200, 4
        %v1203 = vshll.u32 %v434, 16
        %v1205 = vrot.slane %v1203, 5
        %v1206 = vsel %vm441, %v1201, %v1205
        %v1207 = vshrl.u32 %v434, 16
        %v1209 = vrot.slane %v1207, 4
        %v1210 = vor.u32 %v1209, %v1205
        %v1211 = vrot.slane %v1210, 4
        %v1213 = vshll.u32 %v435, 16
        %v1215 = vrot.slane %v1213, 5
        %v1216 = vsel %vm441, %v1211, %v1215
        %v1220 = vrot.slane %v433, 5
        %v1221 = vrot.slane %v1220, 4
        %v1222 = vrot.slane %v434, 5
        %v1223 = vsel %vm714, %v1221, %v1222
        %v1224 = vrot.slane %v1222, 4
        %v1225 = vrot.slane %v435, 5
        %v1226 = vsel %vm714, %v1224, %v1225
        %v1228 = vshrl.u32 %v436, 16
        %v1230 = vrot.slane %v1228, 4
        %v1231 = vshll.u32 %v436, 16
        %v1233 = vrot.slane %v1231, 5
        %v1234 = vor.u32 %v1230, %v1233
        %v1235 = vrot.slane %v1234, 4
        %v1237 = vshll.u32 %v437, 16
        %v1239 = vrot.slane %v1237, 5
        %v1240 = vsel %vm441, %v1235, %v1239
        %v1241 = vshrl.u32 %v437, 16
        %v1243 = vrot.slane %v1241, 4
        %v1244 = vor.u32 %v1243, %v1239
        %v1245 = vrot.slane %v1244, 4
        %v1247 = vshll.u32 %v438, 16
        %v1249 = vrot.slane %v1247, 5
        %v1250 = vsel %vm441, %v1245, %v1249
        %v1254 = vrot.slane %v436, 5
        %v1255 = vrot.slane %v1254, 4
        %v1256 = vrot.slane %v437, 5
        %v1257 = vsel %vm714, %v1255, %v1256
        %v1258 = vrot.slane %v1256, 4
        %v1259 = vrot.slane %v438, 5
        %v1260 = vsel %vm714, %v1258, %v1259
        %v1261 = vunpack.c.l.b16 %v367
        %v1262 = vunpack.c.l.b16 %v368
        %v1263 = vunpack.c.l.b16 %v370
        %v1264 = vunpack.c.l.b16 %v371
        %v1265 = vunpack.c.l.b16 %v373
        %v1266 = vunpack.c.l.b16 %v374
        %v1267 = vunpack.c.l.b16 %v376
        %v1268 = vunpack.c.l.b16 %v377
        %v1269 = vunpack.c.l.b16 %v379
        %v1270 = vunpack.c.l.b16 %v380
        %v1271 = vunpack.c.l.b16 %v382
        %v1272 = vunpack.c.l.b16 %v383
        %v1273 = vunpack.c.l.b16 %v385
        %v1274 = vunpack.c.l.b16 %v386
        %v1275 = vunpack.c.l.b16 %v388
        %v1276 = vunpack.c.l.b16 %v389
        %v1277 = vunpack.c.l.b16 %v391
        %v1278 = vunpack.c.l.b16 %v392
        %v1279 = vunpack.c.l.b16 %v394
        %v1280 = vunpack.c.l.b16 %v395
        %v1281 = vpack.c.b16 %v1262, %v1261
        %v1282 = vpack.c.b16 %v1264, %v1263
        %v1283 = vpack.c.b16 %v1266, %v1265
        %v1284 = vpack.c.b16 %v1268, %v1267
        %v1285 = vpack.c.b16 %v1270, %v1269
        %v1286 = vpack.c.b16 %v1272, %v1271
        %v1287 = vpack.c.b16 %v1274, %v1273
        %v1288 = vpack.c.b16 %v1276, %v1275
        %v1289 = vpack.c.b16 %v1278, %v1277
        %v1290 = vpack.c.b16 %v1280, %v1279
        %v1291 = vunpack.c.l.b16 %v455
        %v1292 = vunpack.c.l.b16 %v465
        %v1293 = vunpack.c.l.b16 %v479
        %v1294 = vunpack.c.l.b16 %v489
        %v1295 = vunpack.c.l.b16 %v503
        %v1296 = vunpack.c.l.b16 %v513
        %v1297 = vunpack.c.l.b16 %v527
        %v1298 = vunpack.c.l.b16 %v537
        %v1299 = vunpack.c.l.b16 %v551
        %v1300 = vunpack.c.l.b16 %v561
        %v1301 = vunpack.c.l.b16 %v575
        %v1302 = vunpack.c.l.b16 %v585
        %v1303 = vunpack.c.l.b16 %v599
        %v1304 = vunpack.c.l.b16 %v609
        %v1305 = vunpack.c.l.b16 %v623
        %v1306 = vunpack.c.l.b16 %v633
        %v1307 = vunpack.c.l.b16 %v647
        %v1308 = vunpack.c.l.b16 %v657
        %v1309 = vunpack.c.l.b16 %v671
        %v1310 = vunpack.c.l.b16 %v681
        %v1311 = vpack.c.b16 %v1292, %v1291
        %v1312 = vpack.c.b16 %v1294, %v1293
        %v1313 = vpack.c.b16 %v1296, %v1295
        %v1314 = vpack.c.b16 %v1298, %v1297
        %v1315 = vpack.c.b16 %v1300, %v1299
        %v1316 = vpack.c.b16 %v1302, %v1301
        %v1317 = vpack.c.b16 %v1304, %v1303
        %v1318 = vpack.c.b16 %v1306, %v1305
        %v1319 = vpack.c.b16 %v1308, %v1307
        %v1320 = vpack.c.b16 %v1310, %v1309
        %1321 = vrot.lane.b32.xlu0 %v1311, 4
        %v1322 = vpop.permute.xlu0 %1321
        %1323 = vrot.lane.b32.xlu0 %v1312, 4
        %v1324 = vpop.permute.xlu0 %1323
        %1325 = vrot.lane.b32.xlu0 %v1313, 4
        %v1326 = vpop.permute.xlu0 %1325
        %1327 = vrot.lane.b32.xlu0 %v1314, 4
        %v1328 = vpop.permute.xlu0 %1327
        %1329 = vrot.lane.b32.xlu0 %v1315, 4
        %v1330 = vpop.permute.xlu0 %1329
        %1331 = vrot.lane.b32.xlu0 %v1316, 4
        %v1332 = vpop.permute.xlu0 %1331
        %1333 = vrot.lane.b32.xlu0 %v1317, 4
        %v1334 = vpop.permute.xlu0 %1333
        %1335 = vrot.lane.b32.xlu0 %v1318, 4
        %v1336 = vpop.permute.xlu0 %1335
        %1337 = vrot.lane.b32.xlu0 %v1319, 4
        %v1338 = vpop.permute.xlu0 %1337
        %1339 = vrot.lane.b32.xlu0 %v1320, 4
        %v1340 = vpop.permute.xlu0 %1339
        %v1341 = vunpack.c.l.b16 %v718
        %v1342 = vunpack.c.l.b16 %v721
        %v1343 = vunpack.c.l.b16 %v725
        %v1344 = vunpack.c.l.b16 %v728
        %v1345 = vunpack.c.l.b16 %v732
        %v1346 = vunpack.c.l.b16 %v735
        %v1347 = vunpack.c.l.b16 %v739
        %v1348 = vunpack.c.l.b16 %v742
        %v1349 = vunpack.c.l.b16 %v746
        %v1350 = vunpack.c.l.b16 %v749
        %v1351 = vunpack.c.l.b16 %v753
        %v1352 = vunpack.c.l.b16 %v756
        %v1353 = vunpack.c.l.b16 %v760
        %v1354 = vunpack.c.l.b16 %v763
        %v1355 = vunpack.c.l.b16 %v767
        %v1356 = vunpack.c.l.b16 %v770
        %v1357 = vunpack.c.l.b16 %v774
        %v1358 = vunpack.c.l.b16 %v777
        %v1359 = vunpack.c.l.b16 %v781
        %v1360 = vunpack.c.l.b16 %v784
        %v1361 = vpack.c.b16 %v1342, %v1341
        %v1362 = vpack.c.b16 %v1344, %v1343
        %v1363 = vpack.c.b16 %v1346, %v1345
        %v1364 = vpack.c.b16 %v1348, %v1347
        %v1365 = vpack.c.b16 %v1350, %v1349
        %v1366 = vpack.c.b16 %v1352, %v1351
        %v1367 = vpack.c.b16 %v1354, %v1353
        %v1368 = vpack.c.b16 %v1356, %v1355
        %v1369 = vpack.c.b16 %v1358, %v1357
        %v1370 = vpack.c.b16 %v1360, %v1359
        %1371 = vrot.lane.b32.xlu0 %v1361, 8
        %v1372 = vpop.permute.xlu0 %1371
        %1373 = vrot.lane.b32.xlu0 %v1362, 8
        %v1374 = vpop.permute.xlu0 %1373
        %1375 = vrot.lane.b32.xlu0 %v1363, 8
        %v1376 = vpop.permute.xlu0 %1375
        %1377 = vrot.lane.b32.xlu0 %v1364, 8
        %v1378 = vpop.permute.xlu0 %1377
        %1379 = vrot.lane.b32.xlu0 %v1365, 8
        %v1380 = vpop.permute.xlu0 %1379
        %1381 = vrot.lane.b32.xlu0 %v1366, 8
        %v1382 = vpop.permute.xlu0 %1381
        %1383 = vrot.lane.b32.xlu0 %v1367, 8
        %v1384 = vpop.permute.xlu0 %1383
        %1385 = vrot.lane.b32.xlu0 %v1368, 8
        %v1386 = vpop.permute.xlu0 %1385
        %1387 = vrot.lane.b32.xlu0 %v1369, 8
        %v1388 = vpop.permute.xlu0 %1387
        %1389 = vrot.lane.b32.xlu0 %v1370, 8
        %v1390 = vpop.permute.xlu0 %1389
        %v1391 = vunpack.c.l.b16 %v397
        %v1392 = vunpack.c.l.b16 %v398
        %v1393 = vpack.c.b16 %v1392, %v1391
        %1394 = vrot.lane.b32.xlu0 %v1282, 12
        %v1395 = vpop.permute.xlu0 %1394
        %1396 = vrot.lane.b32.xlu0 %v1283, 12
        %v1397 = vpop.permute.xlu0 %1396
        %1398 = vrot.lane.b32.xlu0 %v1284, 12
        %v1399 = vpop.permute.xlu0 %1398
        %1400 = vrot.lane.b32.xlu0 %v1285, 12
        %v1401 = vpop.permute.xlu0 %1400
        %1402 = vrot.lane.b32.xlu0 %v1286, 12
        %v1403 = vpop.permute.xlu0 %1402
        %1404 = vrot.lane.b32.xlu0 %v1287, 12
        %v1405 = vpop.permute.xlu0 %1404
        %1406 = vrot.lane.b32.xlu0 %v1288, 12
        %v1407 = vpop.permute.xlu0 %1406
        %1408 = vrot.lane.b32.xlu0 %v1289, 12
        %v1409 = vpop.permute.xlu0 %1408
        %1410 = vrot.lane.b32.xlu0 %v1290, 12
        %v1411 = vpop.permute.xlu0 %1410
        %1412 = vrot.lane.b32.xlu0 %v1393, 12
        %v1413 = vpop.permute.xlu0 %1412
        %v1414 = vunpack.c.l.b16 %v798
        %v1415 = vunpack.c.l.b16 %v808
        %v1416 = vpack.c.b16 %v1415, %v1414
        %1417 = vrot.lane.b32.xlu0 %v1312, 16
        %v1418 = vpop.permute.xlu0 %1417
        %1419 = vrot.lane.b32.xlu0 %v1313, 16
        %v1420 = vpop.permute.xlu0 %1419
        %1421 = vrot.lane.b32.xlu0 %v1314, 16
        %v1422 = vpop.permute.xlu0 %1421
        %1423 = vrot.lane.b32.xlu0 %v1315, 16
        %v1424 = vpop.permute.xlu0 %1423
        %1425 = vrot.lane.b32.xlu0 %v1316, 16
        %v1426 = vpop.permute.xlu0 %1425
        %1427 = vrot.lane.b32.xlu0 %v1317, 16
        %v1428 = vpop.permute.xlu0 %1427
        %1429 = vrot.lane.b32.xlu0 %v1318, 16
        %v1430 = vpop.permute.xlu0 %1429
        %1431 = vrot.lane.b32.xlu0 %v1319, 16
        %v1432 = vpop.permute.xlu0 %1431
        %1433 = vrot.lane.b32.xlu0 %v1320, 16
        %v1434 = vpop.permute.xlu0 %1433
        %1435 = vrot.lane.b32.xlu0 %v1416, 16
        %v1436 = vpop.permute.xlu0 %1435
        %v1437 = vunpack.c.l.b16 %v815
        %v1438 = vunpack.c.l.b16 %v818
        %v1439 = vpack.c.b16 %v1438, %v1437
        %1440 = vrot.lane.b32.xlu0 %v1362, 20
        %v1441 = vpop.permute.xlu0 %1440
        %1442 = vrot.lane.b32.xlu0 %v1363, 20
        %v1443 = vpop.permute.xlu0 %1442
        %1444 = vrot.lane.b32.xlu0 %v1364, 20
        %v1445 = vpop.permute.xlu0 %1444
        %1446 = vrot.lane.b32.xlu0 %v1365, 20
        %v1447 = vpop.permute.xlu0 %1446
        %1448 = vrot.lane.b32.xlu0 %v1366, 20
        %v1449 = vpop.permute.xlu0 %1448
        %1450 = vrot.lane.b32.xlu0 %v1367, 20
        %v1451 = vpop.permute.xlu0 %1450
        %1452 = vrot.lane.b32.xlu0 %v1368, 20
        %v1453 = vpop.permute.xlu0 %1452
        %1454 = vrot.lane.b32.xlu0 %v1369, 20
        %v1455 = vpop.permute.xlu0 %1454
        %1456 = vrot.lane.b32.xlu0 %v1370, 20
        %v1457 = vpop.permute.xlu0 %1456
        %1458 = vrot.lane.b32.xlu0 %v1439, 20
        %v1459 = vpop.permute.xlu0 %1458
        %v1460 = vunpack.c.l.b16 %v400
        %v1461 = vunpack.c.l.b16 %v401
        %v1462 = vpack.c.b16 %v1461, %v1460
        %1463 = vrot.lane.b32.xlu0 %v1283, 24
        %v1464 = vpop.permute.xlu0 %1463
        %1465 = vrot.lane.b32.xlu0 %v1284, 24
        %v1466 = vpop.permute.xlu0 %1465
        %1467 = vrot.lane.b32.xlu0 %v1285, 24
        %v1468 = vpop.permute.xlu0 %1467
        %1469 = vrot.lane.b32.xlu0 %v1286, 24
        %v1470 = vpop.permute.xlu0 %1469
        %1471 = vrot.lane.b32.xlu0 %v1287, 24
        %v1472 = vpop.permute.xlu0 %1471
        %1473 = vrot.lane.b32.xlu0 %v1288, 24
        %v1474 = vpop.permute.xlu0 %1473
        %1475 = vrot.lane.b32.xlu0 %v1289, 24
        %v1476 = vpop.permute.xlu0 %1475
        %1477 = vrot.lane.b32.xlu0 %v1290, 24
        %v1478 = vpop.permute.xlu0 %1477
        %1479 = vrot.lane.b32.xlu0 %v1393, 24
        %v1480 = vpop.permute.xlu0 %1479
        %1481 = vrot.lane.b32.xlu0 %v1462, 24
        %v1482 = vpop.permute.xlu0 %1481
        %v1483 = vunpack.c.l.b16 %v832
        %v1484 = vunpack.c.l.b16 %v842
        %v1485 = vpack.c.b16 %v1484, %v1483
        %1486 = vrot.lane.b32.xlu0 %v1313, 28
        %v1487 = vpop.permute.xlu0 %1486
        %1488 = vrot.lane.b32.xlu0 %v1314, 28
        %v1489 = vpop.permute.xlu0 %1488
        %1490 = vrot.lane.b32.xlu0 %v1315, 28
        %v1491 = vpop.permute.xlu0 %1490
        %1492 = vrot.lane.b32.xlu0 %v1316, 28
        %v1493 = vpop.permute.xlu0 %1492
        %1494 = vrot.lane.b32.xlu0 %v1317, 28
        %v1495 = vpop.permute.xlu0 %1494
        %1496 = vrot.lane.b32.xlu0 %v1318, 28
        %v1497 = vpop.permute.xlu0 %1496
        %1498 = vrot.lane.b32.xlu0 %v1319, 28
        %v1499 = vpop.permute.xlu0 %1498
        %1500 = vrot.lane.b32.xlu0 %v1320, 28
        %v1501 = vpop.permute.xlu0 %1500
        %1502 = vrot.lane.b32.xlu0 %v1416, 28
        %v1503 = vpop.permute.xlu0 %1502
        %1504 = vrot.lane.b32.xlu0 %v1485, 28
        %v1505 = vpop.permute.xlu0 %1504
        %v1506 = vunpack.c.l.b16 %v849
        %v1507 = vunpack.c.l.b16 %v852
        %v1508 = vpack.c.b16 %v1507, %v1506
        %1509 = vrot.lane.b32.xlu0 %v1363, 32
        %v1510 = vpop.permute.xlu0 %1509
        %1511 = vrot.lane.b32.xlu0 %v1364, 32
        %v1512 = vpop.permute.xlu0 %1511
        %1513 = vrot.lane.b32.xlu0 %v1365, 32
        %v1514 = vpop.permute.xlu0 %1513
        %1515 = vrot.lane.b32.xlu0 %v1366, 32
        %v1516 = vpop.permute.xlu0 %1515
        %1517 = vrot.lane.b32.xlu0 %v1367, 32
        %v1518 = vpop.permute.xlu0 %1517
        %1519 = vrot.lane.b32.xlu0 %v1368, 32
        %v1520 = vpop.permute.xlu0 %1519
        %1521 = vrot.lane.b32.xlu0 %v1369, 32
        %v1522 = vpop.permute.xlu0 %1521
        %1523 = vrot.lane.b32.xlu0 %v1370, 32
        %v1524 = vpop.permute.xlu0 %1523
        %1525 = vrot.lane.b32.xlu0 %v1439, 32
        %v1526 = vpop.permute.xlu0 %1525
        %1527 = vrot.lane.b32.xlu0 %v1508, 32
        %v1528 = vpop.permute.xlu0 %1527
        %v1529 = vunpack.c.l.b16 %v403
        %v1530 = vunpack.c.l.b16 %v404
        %v1531 = vunpack.c.l.b16 %v406
        %v1532 = vunpack.c.l.b16 %v407
        %v1533 = vunpack.c.l.b16 %v409
        %v1534 = vunpack.c.l.b16 %v410
        %v1535 = vunpack.c.l.b16 %v412
        %v1536 = vunpack.c.l.b16 %v413
        %v1537 = vunpack.c.l.b16 %v415
        %v1538 = vunpack.c.l.b16 %v416
        %v1539 = vunpack.c.l.b16 %v418
        %v1540 = vunpack.c.l.b16 %v419
        %v1541 = vunpack.c.l.b16 %v421
        %v1542 = vunpack.c.l.b16 %v422
        %v1543 = vunpack.c.l.b16 %v424
        %v1544 = vunpack.c.l.b16 %v425
        %v1545 = vunpack.c.l.b16 %v427
        %v1546 = vunpack.c.l.b16 %v428
        %v1547 = vunpack.c.l.b16 %v430
        %v1548 = vunpack.c.l.b16 %v431
        %v1549 = vpack.c.b16 %v1530, %v1529
        %v1550 = vpack.c.b16 %v1532, %v1531
        %v1551 = vpack.c.b16 %v1534, %v1533
        %v1552 = vpack.c.b16 %v1536, %v1535
        %v1553 = vpack.c.b16 %v1538, %v1537
        %v1554 = vpack.c.b16 %v1540, %v1539
        %v1555 = vpack.c.b16 %v1542, %v1541
        %v1556 = vpack.c.b16 %v1544, %v1543
        %v1557 = vpack.c.b16 %v1546, %v1545
        %v1558 = vpack.c.b16 %v1548, %v1547
        %1559 = vrot.lane.b32.xlu0 %v1549, 36
        %v1560 = vpop.permute.xlu0 %1559
        %1561 = vrot.lane.b32.xlu0 %v1550, 36
        %v1562 = vpop.permute.xlu0 %1561
        %1563 = vrot.lane.b32.xlu0 %v1551, 36
        %v1564 = vpop.permute.xlu0 %1563
        %1565 = vrot.lane.b32.xlu0 %v1552, 36
        %v1566 = vpop.permute.xlu0 %1565
        %1567 = vrot.lane.b32.xlu0 %v1553, 36
        %v1568 = vpop.permute.xlu0 %1567
        %1569 = vrot.lane.b32.xlu0 %v1554, 36
        %v1570 = vpop.permute.xlu0 %1569
        %1571 = vrot.lane.b32.xlu0 %v1555, 36
        %v1572 = vpop.permute.xlu0 %1571
        %1573 = vrot.lane.b32.xlu0 %v1556, 36
        %v1574 = vpop.permute.xlu0 %1573
        %1575 = vrot.lane.b32.xlu0 %v1557, 36
        %v1576 = vpop.permute.xlu0 %1575
        %1577 = vrot.lane.b32.xlu0 %v1558, 36
        %v1578 = vpop.permute.xlu0 %1577
        %v1579 = vunpack.c.l.b16 %v866
        %v1580 = vunpack.c.l.b16 %v876
        %v1581 = vunpack.c.l.b16 %v890
        %v1582 = vunpack.c.l.b16 %v900
        %v1583 = vunpack.c.l.b16 %v914
        %v1584 = vunpack.c.l.b16 %v924
        %v1585 = vunpack.c.l.b16 %v938
        %v1586 = vunpack.c.l.b16 %v948
        %v1587 = vunpack.c.l.b16 %v962
        %v1588 = vunpack.c.l.b16 %v972
        %v1589 = vunpack.c.l.b16 %v986
        %v1590 = vunpack.c.l.b16 %v996
        %v1591 = vunpack.c.l.b16 %v1010
        %v1592 = vunpack.c.l.b16 %v1020
        %v1593 = vunpack.c.l.b16 %v1034
        %v1594 = vunpack.c.l.b16 %v1044
        %v1595 = vunpack.c.l.b16 %v1058
        %v1596 = vunpack.c.l.b16 %v1068
        %v1597 = vunpack.c.l.b16 %v1082
        %v1598 = vunpack.c.l.b16 %v1092
        %v1599 = vpack.c.b16 %v1580, %v1579
        %v1600 = vpack.c.b16 %v1582, %v1581
        %v1601 = vpack.c.b16 %v1584, %v1583
        %v1602 = vpack.c.b16 %v1586, %v1585
        %v1603 = vpack.c.b16 %v1588, %v1587
        %v1604 = vpack.c.b16 %v1590, %v1589
        %v1605 = vpack.c.b16 %v1592, %v1591
        %v1606 = vpack.c.b16 %v1594, %v1593
        %v1607 = vpack.c.b16 %v1596, %v1595
        %v1608 = vpack.c.b16 %v1598, %v1597
        %1609 = vrot.lane.b32.xlu0 %v1599, 40
        %v1610 = vpop.permute.xlu0 %1609
        %1611 = vrot.lane.b32.xlu0 %v1600, 40
        %v1612 = vpop.permute.xlu0 %1611
        %1613 = vrot.lane.b32.xlu0 %v1601, 40
        %v1614 = vpop.permute.xlu0 %1613
        %1615 = vrot.lane.b32.xlu0 %v1602, 40
        %v1616 = vpop.permute.xlu0 %1615
        %1617 = vrot.lane.b32.xlu0 %v1603, 40
        %v1618 = vpop.permute.xlu0 %1617
        %1619 = vrot.lane.b32.xlu0 %v1604, 40
        %v1620 = vpop.permute.xlu0 %1619
        %1621 = vrot.lane.b32.xlu0 %v1605, 40
        %v1622 = vpop.permute.xlu0 %1621
        %1623 = vrot.lane.b32.xlu0 %v1606, 40
        %v1624 = vpop.permute.xlu0 %1623
        %1625 = vrot.lane.b32.xlu0 %v1607, 40
        %v1626 = vpop.permute.xlu0 %1625
        %1627 = vrot.lane.b32.xlu0 %v1608, 40
        %v1628 = vpop.permute.xlu0 %1627
        %v1629 = vunpack.c.l.b16 %v1126
        %v1630 = vunpack.c.l.b16 %v1129
        %v1631 = vunpack.c.l.b16 %v1133
        %v1632 = vunpack.c.l.b16 %v1136
        %v1633 = vunpack.c.l.b16 %v1140
        %v1634 = vunpack.c.l.b16 %v1143
        %v1635 = vunpack.c.l.b16 %v1147
        %v1636 = vunpack.c.l.b16 %v1150
        %v1637 = vunpack.c.l.b16 %v1154
        %v1638 = vunpack.c.l.b16 %v1157
        %v1639 = vunpack.c.l.b16 %v1161
        %v1640 = vunpack.c.l.b16 %v1164
        %v1641 = vunpack.c.l.b16 %v1168
        %v1642 = vunpack.c.l.b16 %v1171
        %v1643 = vunpack.c.l.b16 %v1175
        %v1644 = vunpack.c.l.b16 %v1178
        %v1645 = vunpack.c.l.b16 %v1182
        %v1646 = vunpack.c.l.b16 %v1185
        %v1647 = vunpack.c.l.b16 %v1189
        %v1648 = vunpack.c.l.b16 %v1192
        %v1649 = vpack.c.b16 %v1630, %v1629
        %v1650 = vpack.c.b16 %v1632, %v1631
        %v1651 = vpack.c.b16 %v1634, %v1633
        %v1652 = vpack.c.b16 %v1636, %v1635
        %v1653 = vpack.c.b16 %v1638, %v1637
        %v1654 = vpack.c.b16 %v1640, %v1639
        %v1655 = vpack.c.b16 %v1642, %v1641
        %v1656 = vpack.c.b16 %v1644, %v1643
        %v1657 = vpack.c.b16 %v1646, %v1645
        %v1658 = vpack.c.b16 %v1648, %v1647
        %1659 = vrot.lane.b32.xlu0 %v1649, 44
        %v1660 = vpop.permute.xlu0 %1659
        %1661 = vrot.lane.b32.xlu0 %v1650, 44
        %v1662 = vpop.permute.xlu0 %1661
        %1663 = vrot.lane.b32.xlu0 %v1651, 44
        %v1664 = vpop.permute.xlu0 %1663
        %1665 = vrot.lane.b32.xlu0 %v1652, 44
        %v1666 = vpop.permute.xlu0 %1665
        %1667 = vrot.lane.b32.xlu0 %v1653, 44
        %v1668 = vpop.permute.xlu0 %1667
        %1669 = vrot.lane.b32.xlu0 %v1654, 44
        %v1670 = vpop.permute.xlu0 %1669
        %1671 = vrot.lane.b32.xlu0 %v1655, 44
        %v1672 = vpop.permute.xlu0 %1671
        %1673 = vrot.lane.b32.xlu0 %v1656, 44
        %v1674 = vpop.permute.xlu0 %1673
        %1675 = vrot.lane.b32.xlu0 %v1657, 44
        %v1676 = vpop.permute.xlu0 %1675
        %1677 = vrot.lane.b32.xlu0 %v1658, 44
        %v1678 = vpop.permute.xlu0 %1677
        %v1679 = vunpack.c.l.b16 %v433
        %v1680 = vunpack.c.l.b16 %v434
        %v1681 = vpack.c.b16 %v1680, %v1679
        %1682 = vrot.lane.b32.xlu0 %v1550, 48
        %v1683 = vpop.permute.xlu0 %1682
        %1684 = vrot.lane.b32.xlu0 %v1551, 48
        %v1685 = vpop.permute.xlu0 %1684
        %1686 = vrot.lane.b32.xlu0 %v1552, 48
        %v1687 = vpop.permute.xlu0 %1686
        %1688 = vrot.lane.b32.xlu0 %v1553, 48
        %v1689 = vpop.permute.xlu0 %1688
        %1690 = vrot.lane.b32.xlu0 %v1554, 48
        %v1691 = vpop.permute.xlu0 %1690
        %1692 = vrot.lane.b32.xlu0 %v1555, 48
        %v1693 = vpop.permute.xlu0 %1692
        %1694 = vrot.lane.b32.xlu0 %v1556, 48
        %v1695 = vpop.permute.xlu0 %1694
        %1696 = vrot.lane.b32.xlu0 %v1557, 48
        %v1697 = vpop.permute.xlu0 %1696
        %1698 = vrot.lane.b32.xlu0 %v1558, 48
        %v1699 = vpop.permute.xlu0 %1698
        %1700 = vrot.lane.b32.xlu0 %v1681, 48
        %v1701 = vpop.permute.xlu0 %1700
        %v1702 = vunpack.c.l.b16 %v1206
        %v1703 = vunpack.c.l.b16 %v1216
        %v1704 = vpack.c.b16 %v1703, %v1702
        %1705 = vrot.lane.b32.xlu0 %v1600, 52
        %v1706 = vpop.permute.xlu0 %1705
        %1707 = vrot.lane.b32.xlu0 %v1601, 52
        %v1708 = vpop.permute.xlu0 %1707
        %1709 = vrot.lane.b32.xlu0 %v1602, 52
        %v1710 = vpop.permute.xlu0 %1709
        %1711 = vrot.lane.b32.xlu0 %v1603, 52
        %v1712 = vpop.permute.xlu0 %1711
        %1713 = vrot.lane.b32.xlu0 %v1604, 52
        %v1714 = vpop.permute.xlu0 %1713
        %1715 = vrot.lane.b32.xlu0 %v1605, 52
        %v1716 = vpop.permute.xlu0 %1715
        %1717 = vrot.lane.b32.xlu0 %v1606, 52
        %v1718 = vpop.permute.xlu0 %1717
        %1719 = vrot.lane.b32.xlu0 %v1607, 52
        %v1720 = vpop.permute.xlu0 %1719
        %1721 = vrot.lane.b32.xlu0 %v1608, 52
        %v1722 = vpop.permute.xlu0 %1721
        %1723 = vrot.lane.b32.xlu0 %v1704, 52
        %v1724 = vpop.permute.xlu0 %1723
        %v1725 = vunpack.c.l.b16 %v1223
        %v1726 = vunpack.c.l.b16 %v1226
        %v1727 = vpack.c.b16 %v1726, %v1725
        %1728 = vrot.lane.b32.xlu0 %v1650, 56
        %v1729 = vpop.permute.xlu0 %1728
        %1730 = vrot.lane.b32.xlu0 %v1651, 56
        %v1731 = vpop.permute.xlu0 %1730
        %1732 = vrot.lane.b32.xlu0 %v1652, 56
        %v1733 = vpop.permute.xlu0 %1732
        %1734 = vrot.lane.b32.xlu0 %v1653, 56
        %v1735 = vpop.permute.xlu0 %1734
        %1736 = vrot.lane.b32.xlu0 %v1654, 56
        %v1737 = vpop.permute.xlu0 %1736
        %1738 = vrot.lane.b32.xlu0 %v1655, 56
        %v1739 = vpop.permute.xlu0 %1738
        %1740 = vrot.lane.b32.xlu0 %v1656, 56
        %v1741 = vpop.permute.xlu0 %1740
        %1742 = vrot.lane.b32.xlu0 %v1657, 56
        %v1743 = vpop.permute.xlu0 %1742
        %1744 = vrot.lane.b32.xlu0 %v1658, 56
        %v1745 = vpop.permute.xlu0 %1744
        %1746 = vrot.lane.b32.xlu0 %v1727, 56
        %v1747 = vpop.permute.xlu0 %1746
        %v1748 = vunpack.c.l.b16 %v436
        %v1749 = vunpack.c.l.b16 %v437
        %v1750 = vpack.c.b16 %v1749, %v1748
        %1751 = vrot.lane.b32.xlu0 %v1551, 60
        %v1752 = vpop.permute.xlu0 %1751
        %1753 = vrot.lane.b32.xlu0 %v1552, 60
        %v1754 = vpop.permute.xlu0 %1753
        %1755 = vrot.lane.b32.xlu0 %v1553, 60
        %v1756 = vpop.permute.xlu0 %1755
        %1757 = vrot.lane.b32.xlu0 %v1554, 60
        %v1758 = vpop.permute.xlu0 %1757
        %1759 = vrot.lane.b32.xlu0 %v1555, 60
        %v1760 = vpop.permute.xlu0 %1759
        %1761 = vrot.lane.b32.xlu0 %v1556, 60
        %v1762 = vpop.permute.xlu0 %1761
        %1763 = vrot.lane.b32.xlu0 %v1557, 60
        %v1764 = vpop.permute.xlu0 %1763
        %1765 = vrot.lane.b32.xlu0 %v1558, 60
        %v1766 = vpop.permute.xlu0 %1765
        %1767 = vrot.lane.b32.xlu0 %v1681, 60
        %v1768 = vpop.permute.xlu0 %1767
        %1769 = vrot.lane.b32.xlu0 %v1750, 60
        %v1770 = vpop.permute.xlu0 %1769
        %vm1771 = vcmask 31744
        %v1774 = vsel %vm1771, %v1281, %v1322
        %v1777 = vsel %vm1771, %v1282, %v1324
        %v1780 = vsel %vm1771, %v1283, %v1326
        %v1783 = vsel %vm1771, %v1284, %v1328
        %v1786 = vsel %vm1771, %v1285, %v1330
        %v1789 = vsel %vm1771, %v1286, %v1332
        %v1792 = vsel %vm1771, %v1287, %v1334
        %v1795 = vsel %vm1771, %v1288, %v1336
        %v1798 = vsel %vm1771, %v1289, %v1338
        %v1801 = vsel %vm1771, %v1290, %v1340
        %vm1802 = vcmask 64512
        %v1804 = vsel %vm1802, %v1774, %v1372
        %v1806 = vsel %vm1802, %v1777, %v1374
        %v1808 = vsel %vm1802, %v1780, %v1376
        %v1810 = vsel %vm1802, %v1783, %v1378
        %v1812 = vsel %vm1802, %v1786, %v1380
        %v1814 = vsel %vm1802, %v1789, %v1382
        %v1816 = vsel %vm1802, %v1792, %v1384
        %v1818 = vsel %vm1802, %v1795, %v1386
        %v1820 = vsel %vm1802, %v1798, %v1388
        %v1822 = vsel %vm1802, %v1801, %v1390
        %vm1823 = vcmask 97280
        %v1825 = vsel %vm1823, %v1804, %v1395
        %v1827 = vsel %vm1823, %v1806, %v1397
        %v1829 = vsel %vm1823, %v1808, %v1399
        %v1831 = vsel %vm1823, %v1810, %v1401
        %v1833 = vsel %vm1823, %v1812, %v1403
        %v1835 = vsel %vm1823, %v1814, %v1405
        %v1837 = vsel %vm1823, %v1816, %v1407
        %v1839 = vsel %vm1823, %v1818, %v1409
        %v1841 = vsel %vm1823, %v1820, %v1411
        %v1843 = vsel %vm1823, %v1822, %v1413
        %vm1844 = vcmask 130048
        %v1846 = vsel %vm1844, %v1825, %v1418
        %v1848 = vsel %vm1844, %v1827, %v1420
        %v1850 = vsel %vm1844, %v1829, %v1422
        %v1852 = vsel %vm1844, %v1831, %v1424
        %v1854 = vsel %vm1844, %v1833, %v1426
        %v1856 = vsel %vm1844, %v1835, %v1428
        %v1858 = vsel %vm1844, %v1837, %v1430
        %v1860 = vsel %vm1844, %v1839, %v1432
        %v1862 = vsel %vm1844, %v1841, %v1434
        %v1864 = vsel %vm1844, %v1843, %v1436
        %vm1865 = vcmask 162816
        %v1867 = vsel %vm1865, %v1846, %v1441
        %v1869 = vsel %vm1865, %v1848, %v1443
        %v1871 = vsel %vm1865, %v1850, %v1445
        %v1873 = vsel %vm1865, %v1852, %v1447
        %v1875 = vsel %vm1865, %v1854, %v1449
        %v1877 = vsel %vm1865, %v1856, %v1451
        %v1879 = vsel %vm1865, %v1858, %v1453
        %v1881 = vsel %vm1865, %v1860, %v1455
        %v1883 = vsel %vm1865, %v1862, %v1457
        %v1885 = vsel %vm1865, %v1864, %v1459
        %vm1886 = vcmask 195584
        %v1888 = vsel %vm1886, %v1867, %v1464
        %v1890 = vsel %vm1886, %v1869, %v1466
        %v1892 = vsel %vm1886, %v1871, %v1468
        %v1894 = vsel %vm1886, %v1873, %v1470
        %v1896 = vsel %vm1886, %v1875, %v1472
        %v1898 = vsel %vm1886, %v1877, %v1474
        %v1900 = vsel %vm1886, %v1879, %v1476
        %v1902 = vsel %vm1886, %v1881, %v1478
        %v1904 = vsel %vm1886, %v1883, %v1480
        %v1906 = vsel %vm1886, %v1885, %v1482
        %vm1907 = vcmask 228352
        %v1909 = vsel %vm1907, %v1888, %v1487
        %v1911 = vsel %vm1907, %v1890, %v1489
        %v1913 = vsel %vm1907, %v1892, %v1491
        %v1915 = vsel %vm1907, %v1894, %v1493
        %v1917 = vsel %vm1907, %v1896, %v1495
        %v1919 = vsel %vm1907, %v1898, %v1497
        %v1921 = vsel %vm1907, %v1900, %v1499
        %v1923 = vsel %vm1907, %v1902, %v1501
        %v1925 = vsel %vm1907, %v1904, %v1503
        %v1927 = vsel %vm1907, %v1906, %v1505
        %vm1928 = vcmask 261120
        %v1930 = vsel %vm1928, %v1909, %v1510
        %v1932 = vsel %vm1928, %v1911, %v1512
        %v1934 = vsel %vm1928, %v1913, %v1514
        %v1936 = vsel %vm1928, %v1915, %v1516
        %v1938 = vsel %vm1928, %v1917, %v1518
        %v1940 = vsel %vm1928, %v1919, %v1520
        %v1942 = vsel %vm1928, %v1921, %v1522
        %v1944 = vsel %vm1928, %v1923, %v1524
        %v1946 = vsel %vm1928, %v1925, %v1526
        %v1948 = vsel %vm1928, %v1927, %v1528
        %vm1949 = vcmask 293888
        %v1951 = vsel %vm1949, %v1930, %v1560
        %v1953 = vsel %vm1949, %v1932, %v1562
        %v1955 = vsel %vm1949, %v1934, %v1564
        %v1957 = vsel %vm1949, %v1936, %v1566
        %v1959 = vsel %vm1949, %v1938, %v1568
        %v1961 = vsel %vm1949, %v1940, %v1570
        %v1963 = vsel %vm1949, %v1942, %v1572
        %v1965 = vsel %vm1949, %v1944, %v1574
        %v1967 = vsel %vm1949, %v1946, %v1576
        %v1969 = vsel %vm1949, %v1948, %v1578
        %vm1970 = vcmask 326656
        %v1972 = vsel %vm1970, %v1951, %v1610
        %v1974 = vsel %vm1970, %v1953, %v1612
        %v1976 = vsel %vm1970, %v1955, %v1614
        %v1978 = vsel %vm1970, %v1957, %v1616
        %v1980 = vsel %vm1970, %v1959, %v1618
        %v1982 = vsel %vm1970, %v1961, %v1620
        %v1984 = vsel %vm1970, %v1963, %v1622
        %v1986 = vsel %vm1970, %v1965, %v1624
        %v1988 = vsel %vm1970, %v1967, %v1626
        %v1990 = vsel %vm1970, %v1969, %v1628
        %vm1991 = vcmask 359424
        %v1993 = vsel %vm1991, %v1972, %v1660
        %v1995 = vsel %vm1991, %v1974, %v1662
        %v1997 = vsel %vm1991, %v1976, %v1664
        %v1999 = vsel %vm1991, %v1978, %v1666
        %v2001 = vsel %vm1991, %v1980, %v1668
        %v2003 = vsel %vm1991, %v1982, %v1670
        %v2005 = vsel %vm1991, %v1984, %v1672
        %v2007 = vsel %vm1991, %v1986, %v1674
        %v2009 = vsel %vm1991, %v1988, %v1676
        %v2011 = vsel %vm1991, %v1990, %v1678
        %vm2012 = vcmask 392192
        %v2014 = vsel %vm2012, %v1993, %v1683
        %v2016 = vsel %vm2012, %v1995, %v1685
        %v2018 = vsel %vm2012, %v1997, %v1687
        %v2020 = vsel %vm2012, %v1999, %v1689
        %v2022 = vsel %vm2012, %v2001, %v1691
        %v2024 = vsel %vm2012, %v2003, %v1693
        %v2026 = vsel %vm2012, %v2005, %v1695
        %v2028 = vsel %vm2012, %v2007, %v1697
        %v2030 = vsel %vm2012, %v2009, %v1699
        %v2032 = vsel %vm2012, %v2011, %v1701
        %vm2033 = vcmask 424960
        %v2035 = vsel %vm2033, %v2014, %v1706
        %v2037 = vsel %vm2033, %v2016, %v1708
        %v2039 = vsel %vm2033, %v2018, %v1710
        %v2041 = vsel %vm2033, %v2020, %v1712
        %v2043 = vsel %vm2033, %v2022, %v1714
        %v2045 = vsel %vm2033, %v2024, %v1716
        %v2047 = vsel %vm2033, %v2026, %v1718
        %v2049 = vsel %vm2033, %v2028, %v1720
        %v2051 = vsel %vm2033, %v2030, %v1722
        %v2053 = vsel %vm2033, %v2032, %v1724
        %vm2054 = vcmask 457728
        %v2056 = vsel %vm2054, %v2035, %v1729
        %v2058 = vsel %vm2054, %v2037, %v1731
        %v2060 = vsel %vm2054, %v2039, %v1733
        %v2062 = vsel %vm2054, %v2041, %v1735
        %v2064 = vsel %vm2054, %v2043, %v1737
        %v2066 = vsel %vm2054, %v2045, %v1739
        %v2068 = vsel %vm2054, %v2047, %v1741
        %v2070 = vsel %vm2054, %v2049, %v1743
        %v2072 = vsel %vm2054, %v2051, %v1745
        %v2074 = vsel %vm2054, %v2053, %v1747
        %vm2075 = vcmask 490496
        %v2077 = vsel %vm2075, %v2056, %v1752
        %v2079 = vsel %vm2075, %v2058, %v1754
        %v2081 = vsel %vm2075, %v2060, %v1756
        %v2083 = vsel %vm2075, %v2062, %v1758
        %v2085 = vsel %vm2075, %v2064, %v1760
        %v2087 = vsel %vm2075, %v2066, %v1762
        %v2089 = vsel %vm2075, %v2068, %v1764
        %v2091 = vsel %vm2075, %v2070, %v1766
        %v2093 = vsel %vm2075, %v2072, %v1768
        %v2095 = vsel %vm2075, %v2074, %v1770
        %v2096 = vunpack.c.l.b16 %v1240
        %v2097 = vunpack.c.l.b16 %v1250
        %v2098 = vpack.c.b16 %v2097, %v2096
        %v2099 = vunpack.c.l.b16 %v1257
        %v2100 = vunpack.c.l.b16 %v1260
        %v2101 = vpack.c.b16 %v2100, %v2099
        %2102 = vrot.lane.b32.xlu0 %v1651, 4
        %v2103 = vpop.permute.xlu0 %2102
        %2104 = vrot.lane.b32.xlu0 %v1652, 4
        %v2105 = vpop.permute.xlu0 %2104
        %2106 = vrot.lane.b32.xlu0 %v1653, 4
        %v2107 = vpop.permute.xlu0 %2106
        %2108 = vrot.lane.b32.xlu0 %v1654, 4
        %v2109 = vpop.permute.xlu0 %2108
        %2110 = vrot.lane.b32.xlu0 %v1655, 4
        %v2111 = vpop.permute.xlu0 %2110
        %2112 = vrot.lane.b32.xlu0 %v1656, 4
        %v2113 = vpop.permute.xlu0 %2112
        %2114 = vrot.lane.b32.xlu0 %v1657, 4
        %v2115 = vpop.permute.xlu0 %2114
        %2116 = vrot.lane.b32.xlu0 %v1658, 4
        %v2117 = vpop.permute.xlu0 %2116
        %2118 = vrot.lane.b32.xlu0 %v1727, 4
        %v2119 = vpop.permute.xlu0 %2118
        %2120 = vrot.lane.b32.xlu0 %v2101, 4
        %v2121 = vpop.permute.xlu0 %2120
        %v2124 = vsel %vm1771, %v1601, %v2103
        %v2127 = vsel %vm1771, %v1602, %v2105
        %v2130 = vsel %vm1771, %v1603, %v2107
        %v2133 = vsel %vm1771, %v1604, %v2109
        %v2136 = vsel %vm1771, %v1605, %v2111
        %v2139 = vsel %vm1771, %v1606, %v2113
        %v2142 = vsel %vm1771, %v1607, %v2115
        %v2145 = vsel %vm1771, %v1608, %v2117
        %v2148 = vsel %vm1771, %v1704, %v2119
        %v2151 = vsel %vm1771, %v2098, %v2121
        %2162 = vrot.lane.b32.xlu0 %v2124, 64
        %v2163 = vpop.permute.xlu0 %2162
        %2164 = vrot.lane.b32.xlu0 %v2127, 64
        %v2165 = vpop.permute.xlu0 %2164
        %2166 = vrot.lane.b32.xlu0 %v2130, 64
        %v2167 = vpop.permute.xlu0 %2166
        %2168 = vrot.lane.b32.xlu0 %v2133, 64
        %v2169 = vpop.permute.xlu0 %2168
        %2170 = vrot.lane.b32.xlu0 %v2136, 64
        %v2171 = vpop.permute.xlu0 %2170
        %2172 = vrot.lane.b32.xlu0 %v2139, 64
        %v2173 = vpop.permute.xlu0 %2172
        %2174 = vrot.lane.b32.xlu0 %v2142, 64
        %v2175 = vpop.permute.xlu0 %2174
        %2176 = vrot.lane.b32.xlu0 %v2145, 64
        %v2177 = vpop.permute.xlu0 %2176
        %2178 = vrot.lane.b32.xlu0 %v2148, 64
        %v2179 = vpop.permute.xlu0 %2178
        %2180 = vrot.lane.b32.xlu0 %v2151, 64
        %v2181 = vpop.permute.xlu0 %2180
        %vm2182 = vcmask 523264
        %v2184 = vsel %vm2182, %v2077, %v2163
        %v2186 = vsel %vm2182, %v2079, %v2165
        %v2188 = vsel %vm2182, %v2081, %v2167
        %v2190 = vsel %vm2182, %v2083, %v2169
        %v2192 = vsel %vm2182, %v2085, %v2171
        %v2194 = vsel %vm2182, %v2087, %v2173
        %v2196 = vsel %vm2182, %v2089, %v2175
        %v2198 = vsel %vm2182, %v2091, %v2177
        %v2200 = vsel %vm2182, %v2093, %v2179
        %v2202 = vsel %vm2182, %v2095, %v2181
        %v2203 = vld [vmem:[%s2] sm:$0xf]
        %v2204 = vld [vmem:[%s2 + $0x4] sm:$0xf]
        %v2205 = vld [vmem:[%s2 + $0x8] sm:$0xf]
        %v2206 = vld [vmem:[%s2 + $0xc] sm:$0xf]
        %v2207 = vld [vmem:[%s2 + $0x10] sm:$0xf]
        %v2208 = vld [vmem:[%s2 + $0x14] sm:$0xf]
        %v2209 = vld [vmem:[%s2 + $0x18] sm:$0xf]
        %v2210 = vld [vmem:[%s2 + $0x1c] sm:$0xf]
        %v2211 = vld [vmem:[%s2 + $0x20] sm:$0xf]
        %v2221 = vunpack.c.l.b16 %v2203
        %v2222 = vunpack.c.l.b16 %v2204
        %v2223 = vunpack.c.l.b16 %v2205
        %v2224 = vunpack.c.l.b16 %v2206
        %v2225 = vunpack.c.l.b16 %v2207
        %v2226 = vunpack.c.l.b16 %v2208
        %v2227 = vunpack.c.l.b16 %v2209
        %v2228 = vunpack.c.l.b16 %v2210
        %v2229 = vunpack.c.l.b16 %v2211
        %v2230 = vpack.c.b16 %v2222, %v2221
        %v2231 = vpack.c.b16 %v2224, %v2223
        %v2232 = vpack.c.b16 %v2226, %v2225
        %v2233 = vpack.c.b16 %v2228, %v2227
        %v2234 = vpack.c.b16 %v2229, %v2229
        %vm2239 = vcmask 588800
        %v2240 = vsel %vm2239, %v2184, 0
        %v2242 = vsel %vm2239, %v2186, 0
        %v2244 = vsel %vm2239, %v2188, 0
        %v2246 = vsel %vm2239, %v2190, 0
        %v2248 = vsel %vm2239, %v2192, 0
        %v2250 = vsel %vm2239, %v2194, 0
        %v2252 = vsel %vm2239, %v2196, 0
        %v2254 = vsel %vm2239, %v2198, 0
        %v2256 = vsel %vm2239, %v2200, 0
        %v2258 = vsel %vm2239, %v2202, 0
        %vm2260 = vcmask 1043456
        %v2262 = vsel %vm2260, %v2234, 0
        %2264 = vmatprep.subr.bf16.mxu0 0
        %2265 = vmatpush1.bf16.msra.mxu0 0
        %2266 = vmatprep.subr.bf16.mxu0 0
        %2267 = vmatpush1.bf16.msra.mxu0 0
        %2268 = vmatprep.subr.bf16.mxu0 0
        %2269 = vmatpush1.bf16.msra.mxu0 0
        %2270 = vmatprep.subr.bf16.mxu0 0
        %2271 = vmatpush1.bf16.msra.mxu0 %v2262
        %2272 = vmatprep.subr.bf16.mxu0 0
        %2273 = vmatpush1.bf16.msra.mxu0 %v2233
        %2274 = vmatprep.subr.bf16.mxu0 0
        %2275 = vmatpush1.bf16.msra.mxu0 %v2232
        %2276 = vmatprep.subr.bf16.mxu0 0
        %2277 = vmatpush1.bf16.msra.mxu0 %v2231
        %2278 = vmatprep.subr.bf16.mxu0 0
        %2279 = vmatpush1.bf16.msra.mxu0 %v2230
        %2280 = vmatprep.subr.bf16.mxu0 0
        %2281 = vmatpush2.bf16.msra.mxu0 0
        %2282 = vmatprep.subr.bf16.mxu0 0
        %2283 = vmatpush2.bf16.msra.mxu0 0
        %2284 = vmatprep.subr.bf16.mxu0 0
        %2285 = vmatpush2.bf16.msra.mxu0 0
        %2286 = vmatprep.subr.bf16.mxu0 0
        %2287 = vmatpush2.bf16.msra.mxu0 0
        %2288 = vmatprep.subr.bf16.mxu0 0
        %2289 = vmatpush2.bf16.msra.mxu0 0
        %2290 = vmatprep.subr.bf16.mxu0 0
        %2291 = vmatpush2.bf16.msra.mxu0 0
        %2292 = vmatprep.subr.bf16.mxu0 0
        %2293 = vmatpush2.bf16.msra.mxu0 0
        %2294 = vmatprep.subr.bf16.mxu0 0
        %2295 = vmatpush2.bf16.msra.mxu0 0
        %2296 = vmatprep.mubr.bf16.mxu0 0
        %2297 = vmatmul.mubr.bf16.gmra.mxu0 %v2240
        %v2298 = vpop.f32.mrf.mxu0
        %v2299 = vadd.f32 0.0, %v2298
        %v2300 = vpop.f32.mrf.mxu0
        %v2301 = vpop.f32.mrf.mxu0
        %v2302 = vadd.f32 0.0, %v2301
        %v2303 = vpop.f32.mrf.mxu0
        %2304 = vmatprep.mubr.bf16.mxu0 0
        %2305 = vmatmul.mubr.bf16.gmra.mxu0 %v2242
        %v2306 = vpop.f32.mrf.mxu0
        %v2307 = vadd.f32 0.0, %v2306
        %v2308 = vpop.f32.mrf.mxu0
        %v2309 = vpop.f32.mrf.mxu0
        %v2310 = vadd.f32 0.0, %v2309
        %v2311 = vpop.f32.mrf.mxu0
        %2312 = vmatprep.mubr.bf16.mxu0 0
        %2313 = vmatmul.mubr.bf16.gmra.mxu0 %v2244
        %v2314 = vpop.f32.mrf.mxu0
        %v2315 = vadd.f32 0.0, %v2314
        %v2316 = vpop.f32.mrf.mxu0
        %v2317 = vpop.f32.mrf.mxu0
        %v2318 = vadd.f32 0.0, %v2317
        %v2319 = vpop.f32.mrf.mxu0
        %2320 = vmatprep.mubr.bf16.mxu0 0
        %2321 = vmatmul.mubr.bf16.gmra.mxu0 %v2246
        %v2322 = vpop.f32.mrf.mxu0
        %v2323 = vadd.f32 0.0, %v2322
        %v2324 = vpop.f32.mrf.mxu0
        %v2325 = vpop.f32.mrf.mxu0
        %v2326 = vadd.f32 0.0, %v2325
        %v2327 = vpop.f32.mrf.mxu0
        %2328 = vmatprep.mubr.bf16.mxu0 0
        %2329 = vmatmul.mubr.bf16.gmra.mxu0 %v2248
        %v2330 = vpop.f32.mrf.mxu0
        %v2331 = vadd.f32 0.0, %v2330
        %v2332 = vpop.f32.mrf.mxu0
        %v2333 = vpop.f32.mrf.mxu0
        %v2334 = vadd.f32 0.0, %v2333
        %v2335 = vpop.f32.mrf.mxu0
        %2336 = vmatprep.mubr.bf16.mxu0 0
        %2337 = vmatmul.mubr.bf16.gmra.mxu0 %v2250
        %v2338 = vpop.f32.mrf.mxu0
        %v2339 = vadd.f32 0.0, %v2338
        %v2340 = vpop.f32.mrf.mxu0
        %v2341 = vpop.f32.mrf.mxu0
        %v2342 = vadd.f32 0.0, %v2341
        %v2343 = vpop.f32.mrf.mxu0
        %2344 = vmatprep.mubr.bf16.mxu0 0
        %2345 = vmatmul.mubr.bf16.gmra.mxu0 %v2252
        %v2346 = vpop.f32.mrf.mxu0
        %v2347 = vadd.f32 0.0, %v2346
        %v2348 = vpop.f32.mrf.mxu0
        %v2349 = vpop.f32.mrf.mxu0
        %v2350 = vadd.f32 0.0, %v2349
        %v2351 = vpop.f32.mrf.mxu0
        %2352 = vmatprep.mubr.bf16.mxu0 0
        %2353 = vmatmul.mubr.bf16.gmra.mxu0 %v2254
        %v2354 = vpop.f32.mrf.mxu0
        %v2355 = vadd.f32 0.0, %v2354
        %v2356 = vpop.f32.mrf.mxu0
        %v2357 = vpop.f32.mrf.mxu0
        %v2358 = vadd.f32 0.0, %v2357
        %v2359 = vpop.f32.mrf.mxu0
        %2360 = vmatprep.mubr.bf16.mxu0 0
        %2361 = vmatmul.mubr.bf16.gmra.mxu0 %v2256
        %v2362 = vpop.f32.mrf.mxu0
        %v2363 = vadd.f32 0.0, %v2362
        %v2364 = vpop.f32.mrf.mxu0
        %v2365 = vpop.f32.mrf.mxu0
        %v2366 = vadd.f32 0.0, %v2365
        %v2367 = vpop.f32.mrf.mxu0
        %2368 = vmatprep.mubr.bf16.mxu0 0
        %2369 = vmatmul.mubr.bf16.gmra.mxu0 %v2258
        %v2370 = vpop.f32.mrf.mxu0
        %v2371 = vadd.f32 0.0, %v2370
        %v2372 = vpop.f32.mrf.mxu0
        %v2373 = vpop.f32.mrf.mxu0
        %v2374 = vadd.f32 0.0, %v2373
        %v2375 = vpop.f32.mrf.mxu0
        %2376 = vdwg.mxu0
        %v2377 = vld [vmem:[%s3] sm:$0x1]
        %v2379 = vlaneseq
        %v2380 = vshrl.u32 %v2379, 7
        %v2381 = vsub.s32 0, %v2380
        %v2382 = vrot.slane %v2377, %v2381
        %v2384 = vmul.f32 %v2299, %v2382
        %v2385 = vmul.f32 %v2302, %v2382
        %v2386 = vmul.f32 %v2307, %v2382
        %v2387 = vmul.f32 %v2310, %v2382
        %v2388 = vmul.f32 %v2315, %v2382
        %v2389 = vmul.f32 %v2318, %v2382
        %v2390 = vmul.f32 %v2323, %v2382
        %v2391 = vmul.f32 %v2326, %v2382
        %v2392 = vmul.f32 %v2331, %v2382
        %v2393 = vmul.f32 %v2334, %v2382
        %v2394 = vmul.f32 %v2339, %v2382
        %v2395 = vmul.f32 %v2342, %v2382
        %v2396 = vmul.f32 %v2347, %v2382
        %v2397 = vmul.f32 %v2350, %v2382
        %v2398 = vmul.f32 %v2355, %v2382
        %v2399 = vmul.f32 %v2358, %v2382
        %v2400 = vmul.f32 %v2363, %v2382
        %v2401 = vmul.f32 %v2366, %v2382
        %v2402 = vmul.f32 %v2371, %v2382
        %v2403 = vmul.f32 %v2374, %v2382
        %v2404 = vld [vmem:[%s4] sm:$0x1]
        %v2406 = vlaneseq
        %v2407 = vshrl.u32 %v2406, 7
        %v2408 = vsub.s32 0, %v2407
        %v2409 = vrot.slane %v2404, %v2408
        %v2411 = vadd.f32 %v2384, %v2409
        %v2412 = vadd.f32 %v2385, %v2409
        %v2413 = vadd.f32 %v2386, %v2409
        %v2414 = vadd.f32 %v2387, %v2409
        %v2415 = vadd.f32 %v2388, %v2409
        %v2416 = vadd.f32 %v2389, %v2409
        %v2417 = vadd.f32 %v2390, %v2409
        %v2418 = vadd.f32 %v2391, %v2409
        %v2419 = vadd.f32 %v2392, %v2409
        %v2420 = vadd.f32 %v2393, %v2409
        %v2421 = vadd.f32 %v2394, %v2409
        %v2422 = vadd.f32 %v2395, %v2409
        %v2423 = vadd.f32 %v2396, %v2409
        %v2424 = vadd.f32 %v2397, %v2409
        %v2425 = vadd.f32 %v2398, %v2409
        %v2426 = vadd.f32 %v2399, %v2409
        %v2427 = vadd.f32 %v2400, %v2409
        %v2428 = vadd.f32 %v2401, %v2409
        %v2429 = vadd.f32 %v2402, %v2409
        %v2430 = vadd.f32 %v2403, %v2409
        %v2431 = vmax.f32 %v2411, 0.0
        %v2432 = vmax.f32 %v2412, 0.0
        %v2433 = vmax.f32 %v2413, 0.0
        %v2434 = vmax.f32 %v2414, 0.0
        %v2435 = vmax.f32 %v2415, 0.0
        %v2436 = vmax.f32 %v2416, 0.0
        %v2437 = vmax.f32 %v2417, 0.0
        %v2438 = vmax.f32 %v2418, 0.0
        %v2439 = vmax.f32 %v2419, 0.0
        %v2440 = vmax.f32 %v2420, 0.0
        %v2441 = vmax.f32 %v2421, 0.0
        %v2442 = vmax.f32 %v2422, 0.0
        %v2443 = vmax.f32 %v2423, 0.0
        %v2444 = vmax.f32 %v2424, 0.0
        %v2445 = vmax.f32 %v2425, 0.0
        %v2446 = vmax.f32 %v2426, 0.0
        %v2447 = vmax.f32 %v2427, 0.0
        %v2448 = vmax.f32 %v2428, 0.0
        %v2449 = vmax.f32 %v2429, 0.0
        %v2450 = vmax.f32 %v2430, 0.0
        %v2451 = vpack.c.bf16 %v2432, %v2431
        %v2452 = vpack.c.bf16 %v2434, %v2433
        %v2453 = vpack.c.bf16 %v2436, %v2435
        %v2454 = vpack.c.bf16 %v2438, %v2437
        %v2455 = vpack.c.bf16 %v2440, %v2439
        %v2456 = vpack.c.bf16 %v2442, %v2441
        %v2457 = vpack.c.bf16 %v2444, %v2443
        %v2458 = vpack.c.bf16 %v2446, %v2445
        %v2459 = vpack.c.bf16 %v2448, %v2447
        %v2460 = vpack.c.bf16 %v2450, %v2449
        %v2471 = vunpack.c.l.b16 %v2451
        %v2472 = vunpack.c.h.b16 %v2451
        %v2473 = vunpack.c.l.b16 %v2452
        %v2474 = vunpack.c.h.b16 %v2452
        %v2475 = vunpack.c.l.b16 %v2453
        %v2476 = vunpack.c.h.b16 %v2453
        %v2477 = vunpack.c.l.b16 %v2454
        %v2478 = vunpack.c.h.b16 %v2454
        %v2479 = vunpack.c.l.b16 %v2455
        %v2480 = vunpack.c.h.b16 %v2455
        %v2481 = vunpack.c.l.b16 %v2456
        %v2482 = vunpack.c.h.b16 %v2456
        %v2483 = vunpack.c.l.b16 %v2457
        %v2484 = vunpack.c.h.b16 %v2457
        %v2485 = vunpack.c.l.b16 %v2458
        %v2486 = vunpack.c.h.b16 %v2458
        %v2487 = vunpack.c.l.b16 %v2459
        %v2488 = vunpack.c.h.b16 %v2459
        %v2489 = vunpack.c.l.b16 %v2460
        %v2490 = vunpack.c.h.b16 %v2460
        %v2491 = vpack.c.b16 %v2471, %v2471
        %v2492 = vpack.c.b16 %v2472, %v2472
        %v2493 = vpack.c.b16 %v2473, %v2473
        %v2494 = vpack.c.b16 %v2474, %v2474
        %v2495 = vpack.c.b16 %v2475, %v2475
        %v2496 = vpack.c.b16 %v2476, %v2476
        %v2497 = vpack.c.b16 %v2477, %v2477
        %v2498 = vpack.c.b16 %v2478, %v2478
        %v2499 = vpack.c.b16 %v2479, %v2479
        %v2500 = vpack.c.b16 %v2480, %v2480
        %v2501 = vpack.c.b16 %v2481, %v2481
        %v2502 = vpack.c.b16 %v2482, %v2482
        %v2503 = vpack.c.b16 %v2483, %v2483
        %v2504 = vpack.c.b16 %v2484, %v2484
        %v2505 = vpack.c.b16 %v2485, %v2485
        %v2506 = vpack.c.b16 %v2486, %v2486
        %v2507 = vpack.c.b16 %v2487, %v2487
        %v2508 = vpack.c.b16 %v2488, %v2488
        %v2509 = vpack.c.b16 %v2489, %v2489
        %v2510 = vpack.c.b16 %v2490, %v2490
        %vm2511 = vsmask.f32 256
        %vm2512 = vsmask.f32 4368
        %vm2513 = vmor %vm2511, %vm2512
        %v2515 = vshrl.u32 %v2491, 16
        %v2517 = vrot.slane %v2515, 7
        %v2518 = vshll.u32 %v2491, 16
        %v2520 = vor.u32 %v2517, %v2518
        %v2521 = vrot.slane %v2517, 4
        %v2523 = vshrl.u32 %v2492, 16
        %v2525 = vrot.slane %v2523, 7
        %v2526 = vshll.u32 %v2492, 16
        %v2528 = vor.u32 %v2525, %v2526
        %v2529 = vsel %vm2513, %v2521, %v2528
        %v2530 = vrot.slane %v2525, 4
        %v2532 = vshrl.u32 %v2493, 16
        %v2534 = vrot.slane %v2532, 7
        %v2535 = vshll.u32 %v2493, 16
        %v2537 = vor.u32 %v2534, %v2535
        %v2538 = vrot.slane %v2534, 4
        %v2540 = vshrl.u32 %v2494, 16
        %v2542 = vrot.slane %v2540, 7
        %v2543 = vshll.u32 %v2494, 16
        %v2545 = vor.u32 %v2542, %v2543
        %v2546 = vsel %vm2513, %v2538, %v2545
        %v2547 = vrot.slane %v2542, 4
        %v2549 = vshrl.u32 %v2495, 16
        %v2551 = vrot.slane %v2549, 7
        %v2552 = vshll.u32 %v2495, 16
        %v2554 = vor.u32 %v2551, %v2552
        %v2555 = vrot.slane %v2551, 4
        %v2557 = vshrl.u32 %v2496, 16
        %v2559 = vrot.slane %v2557, 7
        %v2560 = vshll.u32 %v2496, 16
        %v2562 = vor.u32 %v2559, %v2560
        %v2563 = vsel %vm2513, %v2555, %v2562
        %v2564 = vrot.slane %v2559, 4
        %v2566 = vshrl.u32 %v2497, 16
        %v2568 = vrot.slane %v2566, 7
        %v2569 = vshll.u32 %v2497, 16
        %v2571 = vor.u32 %v2568, %v2569
        %v2572 = vrot.slane %v2568, 4
        %v2574 = vshrl.u32 %v2498, 16
        %v2576 = vrot.slane %v2574, 7
        %v2577 = vshll.u32 %v2498, 16
        %v2579 = vor.u32 %v2576, %v2577
        %v2580 = vsel %vm2513, %v2572, %v2579
        %v2581 = vrot.slane %v2576, 4
        %v2583 = vshrl.u32 %v2499, 16
        %v2585 = vrot.slane %v2583, 7
        %v2586 = vshll.u32 %v2499, 16
        %v2588 = vor.u32 %v2585, %v2586
        %v2589 = vrot.slane %v2585, 4
        %v2591 = vshrl.u32 %v2500, 16
        %v2593 = vrot.slane %v2591, 7
        %v2594 = vshll.u32 %v2500, 16
        %v2596 = vor.u32 %v2593, %v2594
        %v2597 = vsel %vm2513, %v2589, %v2596
        %v2598 = vrot.slane %v2593, 4
        %v2600 = vshrl.u32 %v2501, 16
        %v2602 = vrot.slane %v2600, 7
        %v2603 = vshll.u32 %v2501, 16
        %v2605 = vor.u32 %v2602, %v2603
        %v2606 = vrot.slane %v2602, 4
        %v2608 = vshrl.u32 %v2502, 16
        %v2610 = vrot.slane %v2608, 7
        %v2611 = vshll.u32 %v2502, 16
        %v2613 = vor.u32 %v2610, %v2611
        %v2614 = vsel %vm2513, %v2606, %v2613
        %v2615 = vrot.slane %v2610, 4
        %v2617 = vshrl.u32 %v2503, 16
        %v2619 = vrot.slane %v2617, 7
        %v2620 = vshll.u32 %v2503, 16
        %v2622 = vor.u32 %v2619, %v2620
        %v2623 = vrot.slane %v2619, 4
        %v2625 = vshrl.u32 %v2504, 16
        %v2627 = vrot.slane %v2625, 7
        %v2628 = vshll.u32 %v2504, 16
        %v2630 = vor.u32 %v2627, %v2628
        %v2631 = vsel %vm2513, %v2623, %v2630
        %v2632 = vrot.slane %v2627, 4
        %v2634 = vshrl.u32 %v2505, 16
        %v2636 = vrot.slane %v2634, 7
        %v2637 = vshll.u32 %v2505, 16
        %v2639 = vor.u32 %v2636, %v2637
        %v2640 = vrot.slane %v2636, 4
        %v2642 = vshrl.u32 %v2506, 16
        %v2644 = vrot.slane %v2642, 7
        %v2645 = vshll.u32 %v2506, 16
        %v2647 = vor.u32 %v2644, %v2645
        %v2648 = vsel %vm2513, %v2640, %v2647
        %v2649 = vrot.slane %v2644, 4
        %v2651 = vshrl.u32 %v2507, 16
        %v2653 = vrot.slane %v2651, 7
        %v2654 = vshll.u32 %v2507, 16
        %v2656 = vor.u32 %v2653, %v2654
        %v2657 = vrot.slane %v2653, 4
        %v2659 = vshrl.u32 %v2508, 16
        %v2661 = vrot.slane %v2659, 7
        %v2662 = vshll.u32 %v2508, 16
        %v2664 = vor.u32 %v2661, %v2662
        %v2665 = vsel %vm2513, %v2657, %v2664
        %v2666 = vrot.slane %v2661, 4
        %v2668 = vshrl.u32 %v2509, 16
        %v2670 = vrot.slane %v2668, 7
        %v2671 = vshll.u32 %v2509, 16
        %v2673 = vor.u32 %v2670, %v2671
        %v2674 = vrot.slane %v2670, 4
        %v2676 = vshrl.u32 %v2510, 16
        %v2678 = vrot.slane %v2676, 7
        %v2679 = vshll.u32 %v2510, 16
        %v2681 = vor.u32 %v2678, %v2679
        %v2682 = vsel %vm2513, %v2674, %v2681
        %v2683 = vrot.slane %v2678, 4
        %vm2714 = vcmask 27648
        %vm2715 = vsmask.f32 7938
        %vm2716 = vmand %vm2714, %vm2715
        %v2717 = vld [vmem:[#allocation2] sm:$0xf]
        %v2718 = vsel %vm2716, %v2520, %v2717
        %2719 = vst [vmem:[#allocation2] sm:$0xf] %v2718
        %vm2720 = vcmask 27648
        %2721 = vst.msk [vmem:[#allocation2 + $0x4] sm:$0xf] %vm2720, %v2529
        %vm2722 = vcmask 24576
        %vm2723 = vmand %vm2722, %vm2511
        %v2724 = vld [vmem:[#allocation2 + $0x8] sm:$0x1]
        %v2725 = vsel %vm2723, %v2530, %v2724
        %2726 = vst [vmem:[#allocation2 + $0x8] sm:$0x1] %v2725
        %v2727 = vld [vmem:[#allocation2 + $0xc] sm:$0xf]
        %v2728 = vsel %vm2716, %v2537, %v2727
        %2729 = vst [vmem:[#allocation2 + $0xc] sm:$0xf] %v2728
        %2730 = vst.msk [vmem:[#allocation2 + $0x10] sm:$0xf] %vm2720, %v2546
        %v2731 = vld [vmem:[#allocation2 + $0x14] sm:$0x1]
        %v2732 = vsel %vm2723, %v2547, %v2731
        %2733 = vst [vmem:[#allocation2 + $0x14] sm:$0x1] %v2732
        %v2734 = vld [vmem:[#allocation2 + $0x18] sm:$0xf]
        %v2735 = vsel %vm2716, %v2554, %v2734
        %2736 = vst [vmem:[#allocation2 + $0x18] sm:$0xf] %v2735
        %2737 = vst.msk [vmem:[#allocation2 + $0x1c] sm:$0xf] %vm2720, %v2563
        %v2738 = vld [vmem:[#allocation2 + $0x20] sm:$0x1]
        %v2739 = vsel %vm2723, %v2564, %v2738
        %2740 = vst [vmem:[#allocation2 + $0x20] sm:$0x1] %v2739
        %v2741 = vld [vmem:[#allocation2 + $0x24] sm:$0xf]
        %v2742 = vsel %vm2716, %v2571, %v2741
        %2743 = vst [vmem:[#allocation2 + $0x24] sm:$0xf] %v2742
        %2744 = vst.msk [vmem:[#allocation2 + $0x28] sm:$0xf] %vm2720, %v2580
        %v2745 = vld [vmem:[#allocation2 + $0x2c] sm:$0x1]
        %v2746 = vsel %vm2723, %v2581, %v2745
        %2747 = vst [vmem:[#allocation2 + $0x2c] sm:$0x1] %v2746
        %v2748 = vld [vmem:[#allocation2 + $0x30] sm:$0xf]
        %v2749 = vsel %vm2716, %v2588, %v2748
        %2750 = vst [vmem:[#allocation2 + $0x30] sm:$0xf] %v2749
        %2751 = vst.msk [vmem:[#allocation2 + $0x34] sm:$0xf] %vm2720, %v2597
        %v2752 = vld [vmem:[#allocation2 + $0x38] sm:$0x1]
        %v2753 = vsel %vm2723, %v2598, %v2752
        %2754 = vst [vmem:[#allocation2 + $0x38] sm:$0x1] %v2753
        %v2755 = vld [vmem:[#allocation2 + $0x3c] sm:$0xf]
        %v2756 = vsel %vm2716, %v2605, %v2755
        %2757 = vst [vmem:[#allocation2 + $0x3c] sm:$0xf] %v2756
        %2758 = vst.msk [vmem:[#allocation2 + $0x40] sm:$0xf] %vm2720, %v2614
        %v2759 = vld [vmem:[#allocation2 + $0x44] sm:$0x1]
        %v2760 = vsel %vm2723, %v2615, %v2759
        %2761 = vst [vmem:[#allocation2 + $0x44] sm:$0x1] %v2760
        %v2762 = vld [vmem:[#allocation2 + $0x48] sm:$0xf]
        %v2763 = vsel %vm2716, %v2622, %v2762
        %2764 = vst [vmem:[#allocation2 + $0x48] sm:$0xf] %v2763
        %2765 = vst.msk [vmem:[#allocation2 + $0x4c] sm:$0xf] %vm2720, %v2631
        %v2766 = vld [vmem:[#allocation2 + $0x50] sm:$0x1]
        %v2767 = vsel %vm2723, %v2632, %v2766
        %2768 = vst [vmem:[#allocation2 + $0x50] sm:$0x1] %v2767
        %v2769 = vld [vmem:[#allocation2 + $0x54] sm:$0xf]
        %v2770 = vsel %vm2716, %v2639, %v2769
        %2771 = vst [vmem:[#allocation2 + $0x54] sm:$0xf] %v2770
        %2772 = vst.msk [vmem:[#allocation2 + $0x58] sm:$0xf] %vm2720, %v2648
        %v2773 = vld [vmem:[#allocation2 + $0x5c] sm:$0x1]
        %v2774 = vsel %vm2723, %v2649, %v2773
        %2775 = vst [vmem:[#allocation2 + $0x5c] sm:$0x1] %v2774
        %v2776 = vld [vmem:[#allocation2 + $0x60] sm:$0xf]
        %v2777 = vsel %vm2716, %v2656, %v2776
        %2778 = vst [vmem:[#allocation2 + $0x60] sm:$0xf] %v2777
        %2779 = vst.msk [vmem:[#allocation2 + $0x64] sm:$0xf] %vm2720, %v2665
        %v2780 = vld [vmem:[#allocation2 + $0x68] sm:$0x1]
        %v2781 = vsel %vm2723, %v2666, %v2780
        %2782 = vst [vmem:[#allocation2 + $0x68] sm:$0x1] %v2781
        %v2783 = vld [vmem:[#allocation2 + $0x6c] sm:$0xf]
        %v2784 = vsel %vm2716, %v2673, %v2783
        %2785 = vst [vmem:[#allocation2 + $0x6c] sm:$0xf] %v2784
        %2786 = vst.msk [vmem:[#allocation2 + $0x70] sm:$0xf] %vm2720, %v2682
        %v2787 = vld [vmem:[#allocation2 + $0x74] sm:$0x1]
        %v2788 = vsel %vm2723, %v2683, %v2787
        %2789 = vst [vmem:[#allocation2 + $0x74] sm:$0x1] %v2788
        %v2790 = vld [vmem:[#allocation2] sm:$0x1]
        %v2791 = vsel %vm2723, 0, %v2790
        %2792 = vst [vmem:[#allocation2] sm:$0x1] %v2791
        %v2793 = vld [vmem:[#allocation2 + $0xc] sm:$0x1]
        %v2794 = vsel %vm2723, 0, %v2793
        %2795 = vst [vmem:[#allocation2 + $0xc] sm:$0x1] %v2794
        %v2796 = vld [vmem:[#allocation2 + $0x18] sm:$0x1]
        %v2797 = vsel %vm2723, 0, %v2796
        %2798 = vst [vmem:[#allocation2 + $0x18] sm:$0x1] %v2797
        %v2799 = vld [vmem:[#allocation2 + $0x24] sm:$0x1]
        %v2800 = vsel %vm2723, 0, %v2799
        %2801 = vst [vmem:[#allocation2 + $0x24] sm:$0x1] %v2800
        %v2802 = vld [vmem:[#allocation2 + $0x30] sm:$0x1]
        %v2803 = vsel %vm2723, 0, %v2802
        %2804 = vst [vmem:[#allocation2 + $0x30] sm:$0x1] %v2803
        %v2805 = vld [vmem:[#allocation2 + $0x3c] sm:$0x1]
        %v2806 = vsel %vm2723, 0, %v2805
        %2807 = vst [vmem:[#allocation2 + $0x3c] sm:$0x1] %v2806
        %v2808 = vld [vmem:[#allocation2 + $0x48] sm:$0x1]
        %v2809 = vsel %vm2723, 0, %v2808
        %2810 = vst [vmem:[#allocation2 + $0x48] sm:$0x1] %v2809
        %v2811 = vld [vmem:[#allocation2 + $0x54] sm:$0x1]
        %v2812 = vsel %vm2723, 0, %v2811
        %2813 = vst [vmem:[#allocation2 + $0x54] sm:$0x1] %v2812
        %v2814 = vld [vmem:[#allocation2 + $0x60] sm:$0x1]
        %v2815 = vsel %vm2723, 0, %v2814
        %2816 = vst [vmem:[#allocation2 + $0x60] sm:$0x1] %v2815
        %v2817 = vld [vmem:[#allocation2 + $0x6c] sm:$0x1]
        %v2818 = vsel %vm2723, 0, %v2817
        %2819 = vst [vmem:[#allocation2 + $0x6c] sm:$0x1] %v2818
        %vm2820 = vmand %vm2722, %vm2715
        %v2821 = vld [vmem:[#allocation2 + $0x8] sm:$0x1]
        %v2822 = vsel %vm2820, 0, %v2821
        %2823 = vst [vmem:[#allocation2 + $0x8] sm:$0x1] %v2822
        %v2824 = vld [vmem:[#allocation2 + $0x14] sm:$0x1]
        %v2825 = vsel %vm2820, 0, %v2824
        %2826 = vst [vmem:[#allocation2 + $0x14] sm:$0x1] %v2825
        %v2827 = vld [vmem:[#allocation2 + $0x20] sm:$0x1]
        %v2828 = vsel %vm2820, 0, %v2827
        %2829 = vst [vmem:[#allocation2 + $0x20] sm:$0x1] %v2828
        %v2830 = vld [vmem:[#allocation2 + $0x2c] sm:$0x1]
        %v2831 = vsel %vm2820, 0, %v2830
        %2832 = vst [vmem:[#allocation2 + $0x2c] sm:$0x1] %v2831
        %v2833 = vld [vmem:[#allocation2 + $0x38] sm:$0x1]
        %v2834 = vsel %vm2820, 0, %v2833
        %2835 = vst [vmem:[#allocation2 + $0x38] sm:$0x1] %v2834
        %v2836 = vld [vmem:[#allocation2 + $0x44] sm:$0x1]
        %v2837 = vsel %vm2820, 0, %v2836
        %2838 = vst [vmem:[#allocation2 + $0x44] sm:$0x1] %v2837
        %v2839 = vld [vmem:[#allocation2 + $0x50] sm:$0x1]
        %v2840 = vsel %vm2820, 0, %v2839
        %2841 = vst [vmem:[#allocation2 + $0x50] sm:$0x1] %v2840
        %v2842 = vld [vmem:[#allocation2 + $0x5c] sm:$0x1]
        %v2843 = vsel %vm2820, 0, %v2842
        %2844 = vst [vmem:[#allocation2 + $0x5c] sm:$0x1] %v2843
        %v2845 = vld [vmem:[#allocation2 + $0x68] sm:$0x1]
        %v2846 = vsel %vm2820, 0, %v2845
        %2847 = vst [vmem:[#allocation2 + $0x68] sm:$0x1] %v2846
        %v2848 = vld [vmem:[#allocation2 + $0x74] sm:$0x1]
        %v2849 = vsel %vm2820, 0, %v2848
        %2850 = vst [vmem:[#allocation2 + $0x74] sm:$0x1] %v2849
        %p2851 = scmp.eq.s32.totalorder %s27, 0
        // Predicated region
        $region53: #{tpu_custom_call.1} parent=51 // pred_check
          %p2852 = pneg %p2851
        $region54: #{tpu_custom_call.1} parent=51 // pred_check_branch
          %2854 = sbr.rel (%p2852) target = $region56
        $region55: #{tpu_custom_call.1} parent=51 // pred_region
          %2855 = vst.msk [vmem:[#allocation2] sm:$0xf] %vm2720, 0
          %2856 = vst.msk [vmem:[#allocation2 + $0x4] sm:$0xf] %vm2720, 0
          %vm2857 = vcmask 24576
          %2858 = vst.msk [vmem:[#allocation2 + $0x8] sm:$0x1] %vm2857, 0
        $region56: #{tpu_custom_call.1} parent=51 // pred_fallthru
          _
        %p2859 = scmp.eq.s32.totalorder %s27, 1
        // Predicated region
        $region57: #{tpu_custom_call.1} parent=51 // pred_check
          %p2860 = pneg %p2859
        $region58: #{tpu_custom_call.1} parent=51 // pred_check_branch
          %2862 = sbr.rel (%p2860) target = $region60
        $region59: #{tpu_custom_call.1} parent=51 // pred_region
          %s2863 = scalar_lea.vmem [#allocation2], 108
          %2864 = vst.msk [vmem:[%s2863] sm:$0xf] %vm2720, 0
          %2865 = vst.msk [vmem:[%s2863 + $0x4] sm:$0xf] %vm2720, 0
          %vm2866 = vcmask 24576
          %2867 = vst.msk [vmem:[%s2863 + $0x8] sm:$0x1] %vm2866, 0
        $region60: #{tpu_custom_call.1} parent=51 // pred_fallthru
          _
        %v2868 = vld [vmem:[#allocation2] sm:$0xf]
        %v2869 = vld [vmem:[#allocation2 + $0x4] sm:$0xf]
        %v2870 = vld [vmem:[#allocation2 + $0x8] sm:$0x1]
        %v2871 = vld [vmem:[#allocation2 + $0xc] sm:$0xf]
        %v2872 = vld [vmem:[#allocation2 + $0x10] sm:$0xf]
        %v2873 = vld [vmem:[#allocation2 + $0x14] sm:$0x1]
        %v2874 = vld [vmem:[#allocation2 + $0x18] sm:$0xf]
        %v2875 = vld [vmem:[#allocation2 + $0x1c] sm:$0xf]
        %v2876 = vld [vmem:[#allocation2 + $0x20] sm:$0x1]
        %v2877 = vld [vmem:[#allocation2 + $0x24] sm:$0xf]
        %v2878 = vld [vmem:[#allocation2 + $0x28] sm:$0xf]
        %v2879 = vld [vmem:[#allocation2 + $0x2c] sm:$0x1]
        %v2880 = vld [vmem:[#allocation2 + $0x30] sm:$0xf]
        %v2881 = vld [vmem:[#allocation2 + $0x34] sm:$0xf]
        %v2882 = vld [vmem:[#allocation2 + $0x38] sm:$0x1]
        %v2883 = vld [vmem:[#allocation2 + $0x3c] sm:$0xf]
        %v2884 = vld [vmem:[#allocation2 + $0x40] sm:$0xf]
        %v2885 = vld [vmem:[#allocation2 + $0x44] sm:$0x1]
        %v2886 = vld [vmem:[#allocation2 + $0x48] sm:$0xf]
        %v2887 = vld [vmem:[#allocation2 + $0x4c] sm:$0xf]
        %v2888 = vld [vmem:[#allocation2 + $0x50] sm:$0x1]
        %v2889 = vld [vmem:[#allocation2 + $0x54] sm:$0xf]
        %v2890 = vld [vmem:[#allocation2 + $0x58] sm:$0xf]
        %v2891 = vld [vmem:[#allocation2 + $0x5c] sm:$0x1]
        %v2892 = vld [vmem:[#allocation2 + $0x60] sm:$0xf]
        %v2893 = vld [vmem:[#allocation2 + $0x64] sm:$0xf]
        %v2894 = vld [vmem:[#allocation2 + $0x68] sm:$0x1]
        %v2895 = vld [vmem:[#allocation2 + $0x6c] sm:$0xf]
        %v2896 = vld [vmem:[#allocation2 + $0x70] sm:$0xf]
        %v2897 = vld [vmem:[#allocation2 + $0x74] sm:$0x1]
        %v2899 = vshrl.u32 %v2868, 16
        %v2901 = vrot.slane %v2899, 4
        %v2902 = vshll.u32 %v2868, 16
        %v2904 = vrot.slane %v2902, 5
        %v2905 = vor.u32 %v2901, %v2904
        %v2906 = vrot.slane %v2905, 4
        %v2908 = vshll.u32 %v2869, 16
        %v2910 = vrot.slane %v2908, 5
        %v2911 = vsel %vm441, %v2906, %v2910
        %v2912 = vshrl.u32 %v2869, 16
        %v2914 = vrot.slane %v2912, 4
        %v2915 = vor.u32 %v2914, %v2910
        %v2916 = vrot.slane %v2915, 4
        %v2918 = vshll.u32 %v2870, 16
        %v2920 = vrot.slane %v2918, 5
        %v2921 = vsel %vm441, %v2916, %v2920
        %v2923 = vshrl.u32 %v2871, 16
        %v2925 = vrot.slane %v2923, 4
        %v2926 = vshll.u32 %v2871, 16
        %v2928 = vrot.slane %v2926, 5
        %v2929 = vor.u32 %v2925, %v2928
        %v2930 = vrot.slane %v2929, 4
        %v2932 = vshll.u32 %v2872, 16
        %v2934 = vrot.slane %v2932, 5
        %v2935 = vsel %vm441, %v2930, %v2934
        %v2936 = vshrl.u32 %v2872, 16
        %v2938 = vrot.slane %v2936, 4
        %v2939 = vor.u32 %v2938, %v2934
        %v2940 = vrot.slane %v2939, 4
        %v2942 = vshll.u32 %v2873, 16
        %v2944 = vrot.slane %v2942, 5
        %v2945 = vsel %vm441, %v2940, %v2944
        %v2947 = vshrl.u32 %v2874, 16
        %v2949 = vrot.slane %v2947, 4
        %v2950 = vshll.u32 %v2874, 16
        %v2952 = vrot.slane %v2950, 5
        %v2953 = vor.u32 %v2949, %v2952
        %v2954 = vrot.slane %v2953, 4
        %v2956 = vshll.u32 %v2875, 16
        %v2958 = vrot.slane %v2956, 5
        %v2959 = vsel %vm441, %v2954, %v2958
        %v2960 = vshrl.u32 %v2875, 16
        %v2962 = vrot.slane %v2960, 4
        %v2963 = vor.u32 %v2962, %v2958
        %v2964 = vrot.slane %v2963, 4
        %v2966 = vshll.u32 %v2876, 16
        %v2968 = vrot.slane %v2966, 5
        %v2969 = vsel %vm441, %v2964, %v2968
        %v2971 = vshrl.u32 %v2877, 16
        %v2973 = vrot.slane %v2971, 4
        %v2974 = vshll.u32 %v2877, 16
        %v2976 = vrot.slane %v2974, 5
        %v2977 = vor.u32 %v2973, %v2976
        %v2978 = vrot.slane %v2977, 4
        %v2980 = vshll.u32 %v2878, 16
        %v2982 = vrot.slane %v2980, 5
        %v2983 = vsel %vm441, %v2978, %v2982
        %v2984 = vshrl.u32 %v2878, 16
        %v2986 = vrot.slane %v2984, 4
        %v2987 = vor.u32 %v2986, %v2982
        %v2988 = vrot.slane %v2987, 4
        %v2990 = vshll.u32 %v2879, 16
        %v2992 = vrot.slane %v2990, 5
        %v2993 = vsel %vm441, %v2988, %v2992
        %v2995 = vshrl.u32 %v2880, 16
        %v2997 = vrot.slane %v2995, 4
        %v2998 = vshll.u32 %v2880, 16
        %v3000 = vrot.slane %v2998, 5
        %v3001 = vor.u32 %v2997, %v3000
        %v3002 = vrot.slane %v3001, 4
        %v3004 = vshll.u32 %v2881, 16
        %v3006 = vrot.slane %v3004, 5
        %v3007 = vsel %vm441, %v3002, %v3006
        %v3008 = vshrl.u32 %v2881, 16
        %v3010 = vrot.slane %v3008, 4
        %v3011 = vor.u32 %v3010, %v3006
        %v3012 = vrot.slane %v3011, 4
        %v3014 = vshll.u32 %v2882, 16
        %v3016 = vrot.slane %v3014, 5
        %v3017 = vsel %vm441, %v3012, %v3016
        %v3019 = vshrl.u32 %v2883, 16
        %v3021 = vrot.slane %v3019, 4
        %v3022 = vshll.u32 %v2883, 16
        %v3024 = vrot.slane %v3022, 5
        %v3025 = vor.u32 %v3021, %v3024
        %v3026 = vrot.slane %v3025, 4
        %v3028 = vshll.u32 %v2884, 16
        %v3030 = vrot.slane %v3028, 5
        %v3031 = vsel %vm441, %v3026, %v3030
        %v3032 = vshrl.u32 %v2884, 16
        %v3034 = vrot.slane %v3032, 4
        %v3035 = vor.u32 %v3034, %v3030
        %v3036 = vrot.slane %v3035, 4
        %v3038 = vshll.u32 %v2885, 16
        %v3040 = vrot.slane %v3038, 5
        %v3041 = vsel %vm441, %v3036, %v3040
        %v3043 = vshrl.u32 %v2886, 16
        %v3045 = vrot.slane %v3043, 4
        %v3046 = vshll.u32 %v2886, 16
        %v3048 = vrot.slane %v3046, 5
        %v3049 = vor.u32 %v3045, %v3048
        %v3050 = vrot.slane %v3049, 4
        %v3052 = vshll.u32 %v2887, 16
        %v3054 = vrot.slane %v3052, 5
        %v3055 = vsel %vm441, %v3050, %v3054
        %v3056 = vshrl.u32 %v2887, 16
        %v3058 = vrot.slane %v3056, 4
        %v3059 = vor.u32 %v3058, %v3054
        %v3060 = vrot.slane %v3059, 4
        %v3062 = vshll.u32 %v2888, 16
        %v3064 = vrot.slane %v3062, 5
        %v3065 = vsel %vm441, %v3060, %v3064
        %v3067 = vshrl.u32 %v2889, 16
        %v3069 = vrot.slane %v3067, 4
        %v3070 = vshll.u32 %v2889, 16
        %v3072 = vrot.slane %v3070, 5
        %v3073 = vor.u32 %v3069, %v3072
        %v3074 = vrot.slane %v3073, 4
        %v3076 = vshll.u32 %v2890, 16
        %v3078 = vrot.slane %v3076, 5
        %v3079 = vsel %vm441, %v3074, %v3078
        %v3080 = vshrl.u32 %v2890, 16
        %v3082 = vrot.slane %v3080, 4
        %v3083 = vor.u32 %v3082, %v3078
        %v3084 = vrot.slane %v3083, 4
        %v3086 = vshll.u32 %v2891, 16
        %v3088 = vrot.slane %v3086, 5
        %v3089 = vsel %vm441, %v3084, %v3088
        %v3114 = vrot.slane %v2868, 5
        %v3115 = vrot.slane %v3114, 4
        %v3116 = vrot.slane %v2869, 5
        %v3117 = vsel %vm714, %v3115, %v3116
        %v3118 = vrot.slane %v3116, 4
        %v3119 = vrot.slane %v2870, 5
        %v3120 = vsel %vm714, %v3118, %v3119
        %v3121 = vrot.slane %v2871, 5
        %v3122 = vrot.slane %v3121, 4
        %v3123 = vrot.slane %v2872, 5
        %v3124 = vsel %vm714, %v3122, %v3123
        %v3125 = vrot.slane %v3123, 4
        %v3126 = vrot.slane %v2873, 5
        %v3127 = vsel %vm714, %v3125, %v3126
        %v3128 = vrot.slane %v2874, 5
        %v3129 = vrot.slane %v3128, 4
        %v3130 = vrot.slane %v2875, 5
        %v3131 = vsel %vm714, %v3129, %v3130
        %v3132 = vrot.slane %v3130, 4
        %v3133 = vrot.slane %v2876, 5
        %v3134 = vsel %vm714, %v3132, %v3133
        %v3135 = vrot.slane %v2877, 5
        %v3136 = vrot.slane %v3135, 4
        %v3137 = vrot.slane %v2878, 5
        %v3138 = vsel %vm714, %v3136, %v3137
        %v3139 = vrot.slane %v3137, 4
        %v3140 = vrot.slane %v2879, 5
        %v3141 = vsel %vm714, %v3139, %v3140
        %v3142 = vrot.slane %v2880, 5
        %v3143 = vrot.slane %v3142, 4
        %v3144 = vrot.slane %v2881, 5
        %v3145 = vsel %vm714, %v3143, %v3144
        %v3146 = vrot.slane %v3144, 4
        %v3147 = vrot.slane %v2882, 5
        %v3148 = vsel %vm714, %v3146, %v3147
        %v3149 = vrot.slane %v2883, 5
        %v3150 = vrot.slane %v3149, 4
        %v3151 = vrot.slane %v2884, 5
        %v3152 = vsel %vm714, %v3150, %v3151
        %v3153 = vrot.slane %v3151, 4
        %v3154 = vrot.slane %v2885, 5
        %v3155 = vsel %vm714, %v3153, %v3154
        %v3156 = vrot.slane %v2886, 5
        %v3157 = vrot.slane %v3156, 4
        %v3158 = vrot.slane %v2887, 5
        %v3159 = vsel %vm714, %v3157, %v3158
        %v3160 = vrot.slane %v3158, 4
        %v3161 = vrot.slane %v2888, 5
        %v3162 = vsel %vm714, %v3160, %v3161
        %v3163 = vrot.slane %v2889, 5
        %v3164 = vrot.slane %v3163, 4
        %v3165 = vrot.slane %v2890, 5
        %v3166 = vsel %vm714, %v3164, %v3165
        %v3167 = vrot.slane %v3165, 4
        %v3168 = vrot.slane %v2891, 5
        %v3169 = vsel %vm714, %v3167, %v3168
        %v3171 = vshrl.u32 %v2892, 16
        %v3173 = vrot.slane %v3171, 4
        %v3174 = vshll.u32 %v2892, 16
        %v3176 = vrot.slane %v3174, 5
        %v3177 = vor.u32 %v3173, %v3176
        %v3178 = vrot.slane %v3177, 4
        %v3180 = vshll.u32 %v2893, 16
        %v3182 = vrot.slane %v3180, 5
        %v3183 = vsel %vm441, %v3178, %v3182
        %v3184 = vshrl.u32 %v2893, 16
        %v3186 = vrot.slane %v3184, 4
        %v3187 = vor.u32 %v3186, %v3182
        %v3188 = vrot.slane %v3187, 4
        %v3190 = vshll.u32 %v2894, 16
        %v3192 = vrot.slane %v3190, 5
        %v3193 = vsel %vm441, %v3188, %v3192
        %v3197 = vrot.slane %v2892, 5
        %v3198 = vrot.slane %v3197, 4
        %v3199 = vrot.slane %v2893, 5
        %v3200 = vsel %vm714, %v3198, %v3199
        %v3201 = vrot.slane %v3199, 4
        %v3202 = vrot.slane %v2894, 5
        %v3203 = vsel %vm714, %v3201, %v3202
        %v3205 = vshrl.u32 %v2895, 16
        %v3207 = vrot.slane %v3205, 4
        %v3208 = vshll.u32 %v2895, 16
        %v3210 = vrot.slane %v3208, 5
        %v3211 = vor.u32 %v3207, %v3210
        %v3212 = vrot.slane %v3211, 4
        %v3214 = vshll.u32 %v2896, 16
        %v3216 = vrot.slane %v3214, 5
        %v3217 = vsel %vm441, %v3212, %v3216
        %v3218 = vshrl.u32 %v2896, 16
        %v3220 = vrot.slane %v3218, 4
        %v3221 = vor.u32 %v3220, %v3216
        %v3222 = vrot.slane %v3221, 4
        %v3224 = vshll.u32 %v2897, 16
        %v3226 = vrot.slane %v3224, 5
        %v3227 = vsel %vm441, %v3222, %v3226
        %v3231 = vrot.slane %v2895, 5
        %v3232 = vrot.slane %v3231, 4
        %v3233 = vrot.slane %v2896, 5
        %v3234 = vsel %vm714, %v3232, %v3233
        %v3235 = vrot.slane %v3233, 4
        %v3236 = vrot.slane %v2897, 5
        %v3237 = vsel %vm714, %v3235, %v3236
        %v3238 = vunpack.c.l.b16 %v2868
        %v3239 = vunpack.c.l.b16 %v2869
        %v3240 = vunpack.c.l.b16 %v2871
        %v3241 = vunpack.c.l.b16 %v2872
        %v3242 = vunpack.c.l.b16 %v2874
        %v3243 = vunpack.c.l.b16 %v2875
        %v3244 = vunpack.c.l.b16 %v2877
        %v3245 = vunpack.c.l.b16 %v2878
        %v3246 = vunpack.c.l.b16 %v2880
        %v3247 = vunpack.c.l.b16 %v2881
        %v3248 = vunpack.c.l.b16 %v2883
        %v3249 = vunpack.c.l.b16 %v2884
        %v3250 = vunpack.c.l.b16 %v2886
        %v3251 = vunpack.c.l.b16 %v2887
        %v3252 = vunpack.c.l.b16 %v2889
        %v3253 = vunpack.c.l.b16 %v2890
        %v3254 = vpack.c.b16 %v3239, %v3238
        %v3255 = vpack.c.b16 %v3241, %v3240
        %v3256 = vpack.c.b16 %v3243, %v3242
        %v3257 = vpack.c.b16 %v3245, %v3244
        %v3258 = vpack.c.b16 %v3247, %v3246
        %v3259 = vpack.c.b16 %v3249, %v3248
        %v3260 = vpack.c.b16 %v3251, %v3250
        %v3261 = vpack.c.b16 %v3253, %v3252
        %v3262 = vunpack.c.l.b16 %v2911
        %v3263 = vunpack.c.l.b16 %v2921
        %v3264 = vunpack.c.l.b16 %v2935
        %v3265 = vunpack.c.l.b16 %v2945
        %v3266 = vunpack.c.l.b16 %v2959
        %v3267 = vunpack.c.l.b16 %v2969
        %v3268 = vunpack.c.l.b16 %v2983
        %v3269 = vunpack.c.l.b16 %v2993
        %v3270 = vunpack.c.l.b16 %v3007
        %v3271 = vunpack.c.l.b16 %v3017
        %v3272 = vunpack.c.l.b16 %v3031
        %v3273 = vunpack.c.l.b16 %v3041
        %v3274 = vunpack.c.l.b16 %v3055
        %v3275 = vunpack.c.l.b16 %v3065
        %v3276 = vunpack.c.l.b16 %v3079
        %v3277 = vunpack.c.l.b16 %v3089
        %v3278 = vpack.c.b16 %v3263, %v3262
        %v3279 = vpack.c.b16 %v3265, %v3264
        %v3280 = vpack.c.b16 %v3267, %v3266
        %v3281 = vpack.c.b16 %v3269, %v3268
        %v3282 = vpack.c.b16 %v3271, %v3270
        %v3283 = vpack.c.b16 %v3273, %v3272
        %v3284 = vpack.c.b16 %v3275, %v3274
        %v3285 = vpack.c.b16 %v3277, %v3276
        %3286 = vrot.lane.b32.xlu0 %v3278, 4
        %v3287 = vpop.permute.xlu0 %3286
        %3288 = vrot.lane.b32.xlu0 %v3279, 4
        %v3289 = vpop.permute.xlu0 %3288
        %3290 = vrot.lane.b32.xlu0 %v3280, 4
        %v3291 = vpop.permute.xlu0 %3290
        %3292 = vrot.lane.b32.xlu0 %v3281, 4
        %v3293 = vpop.permute.xlu0 %3292
        %3294 = vrot.lane.b32.xlu0 %v3282, 4
        %v3295 = vpop.permute.xlu0 %3294
        %3296 = vrot.lane.b32.xlu0 %v3283, 4
        %v3297 = vpop.permute.xlu0 %3296
        %3298 = vrot.lane.b32.xlu0 %v3284, 4
        %v3299 = vpop.permute.xlu0 %3298
        %3300 = vrot.lane.b32.xlu0 %v3285, 4
        %v3301 = vpop.permute.xlu0 %3300
        %v3302 = vunpack.c.l.b16 %v3117
        %v3303 = vunpack.c.l.b16 %v3120
        %v3304 = vunpack.c.l.b16 %v3124
        %v3305 = vunpack.c.l.b16 %v3127
        %v3306 = vunpack.c.l.b16 %v3131
        %v3307 = vunpack.c.l.b16 %v3134
        %v3308 = vunpack.c.l.b16 %v3138
        %v3309 = vunpack.c.l.b16 %v3141
        %v3310 = vunpack.c.l.b16 %v3145
        %v3311 = vunpack.c.l.b16 %v3148
        %v3312 = vunpack.c.l.b16 %v3152
        %v3313 = vunpack.c.l.b16 %v3155
        %v3314 = vunpack.c.l.b16 %v3159
        %v3315 = vunpack.c.l.b16 %v3162
        %v3316 = vunpack.c.l.b16 %v3166
        %v3317 = vunpack.c.l.b16 %v3169
        %v3318 = vpack.c.b16 %v3303, %v3302
        %v3319 = vpack.c.b16 %v3305, %v3304
        %v3320 = vpack.c.b16 %v3307, %v3306
        %v3321 = vpack.c.b16 %v3309, %v3308
        %v3322 = vpack.c.b16 %v3311, %v3310
        %v3323 = vpack.c.b16 %v3313, %v3312
        %v3324 = vpack.c.b16 %v3315, %v3314
        %v3325 = vpack.c.b16 %v3317, %v3316
        %3326 = vrot.lane.b32.xlu0 %v3318, 8
        %v3327 = vpop.permute.xlu0 %3326
        %3328 = vrot.lane.b32.xlu0 %v3319, 8
        %v3329 = vpop.permute.xlu0 %3328
        %3330 = vrot.lane.b32.xlu0 %v3320, 8
        %v3331 = vpop.permute.xlu0 %3330
        %3332 = vrot.lane.b32.xlu0 %v3321, 8
        %v3333 = vpop.permute.xlu0 %3332
        %3334 = vrot.lane.b32.xlu0 %v3322, 8
        %v3335 = vpop.permute.xlu0 %3334
        %3336 = vrot.lane.b32.xlu0 %v3323, 8
        %v3337 = vpop.permute.xlu0 %3336
        %3338 = vrot.lane.b32.xlu0 %v3324, 8
        %v3339 = vpop.permute.xlu0 %3338
        %3340 = vrot.lane.b32.xlu0 %v3325, 8
        %v3341 = vpop.permute.xlu0 %3340
        %v3342 = vunpack.c.l.b16 %v2892
        %v3343 = vunpack.c.l.b16 %v2893
        %v3344 = vpack.c.b16 %v3343, %v3342
        %3345 = vrot.lane.b32.xlu0 %v3255, 12
        %v3346 = vpop.permute.xlu0 %3345
        %3347 = vrot.lane.b32.xlu0 %v3256, 12
        %v3348 = vpop.permute.xlu0 %3347
        %3349 = vrot.lane.b32.xlu0 %v3257, 12
        %v3350 = vpop.permute.xlu0 %3349
        %3351 = vrot.lane.b32.xlu0 %v3258, 12
        %v3352 = vpop.permute.xlu0 %3351
        %3353 = vrot.lane.b32.xlu0 %v3259, 12
        %v3354 = vpop.permute.xlu0 %3353
        %3355 = vrot.lane.b32.xlu0 %v3260, 12
        %v3356 = vpop.permute.xlu0 %3355
        %3357 = vrot.lane.b32.xlu0 %v3261, 12
        %v3358 = vpop.permute.xlu0 %3357
        %3359 = vrot.lane.b32.xlu0 %v3344, 12
        %v3360 = vpop.permute.xlu0 %3359
        %v3361 = vunpack.c.l.b16 %v3183
        %v3362 = vunpack.c.l.b16 %v3193
        %v3363 = vpack.c.b16 %v3362, %v3361
        %3364 = vrot.lane.b32.xlu0 %v3279, 16
        %v3365 = vpop.permute.xlu0 %3364
        %3366 = vrot.lane.b32.xlu0 %v3280, 16
        %v3367 = vpop.permute.xlu0 %3366
        %3368 = vrot.lane.b32.xlu0 %v3281, 16
        %v3369 = vpop.permute.xlu0 %3368
        %3370 = vrot.lane.b32.xlu0 %v3282, 16
        %v3371 = vpop.permute.xlu0 %3370
        %3372 = vrot.lane.b32.xlu0 %v3283, 16
        %v3373 = vpop.permute.xlu0 %3372
        %3374 = vrot.lane.b32.xlu0 %v3284, 16
        %v3375 = vpop.permute.xlu0 %3374
        %3376 = vrot.lane.b32.xlu0 %v3285, 16
        %v3377 = vpop.permute.xlu0 %3376
        %3378 = vrot.lane.b32.xlu0 %v3363, 16
        %v3379 = vpop.permute.xlu0 %3378
        %v3380 = vunpack.c.l.b16 %v3200
        %v3381 = vunpack.c.l.b16 %v3203
        %v3382 = vpack.c.b16 %v3381, %v3380
        %3383 = vrot.lane.b32.xlu0 %v3319, 20
        %v3384 = vpop.permute.xlu0 %3383
        %3385 = vrot.lane.b32.xlu0 %v3320, 20
        %v3386 = vpop.permute.xlu0 %3385
        %3387 = vrot.lane.b32.xlu0 %v3321, 20
        %v3388 = vpop.permute.xlu0 %3387
        %3389 = vrot.lane.b32.xlu0 %v3322, 20
        %v3390 = vpop.permute.xlu0 %3389
        %3391 = vrot.lane.b32.xlu0 %v3323, 20
        %v3392 = vpop.permute.xlu0 %3391
        %3393 = vrot.lane.b32.xlu0 %v3324, 20
        %v3394 = vpop.permute.xlu0 %3393
        %3395 = vrot.lane.b32.xlu0 %v3325, 20
        %v3396 = vpop.permute.xlu0 %3395
        %3397 = vrot.lane.b32.xlu0 %v3382, 20
        %v3398 = vpop.permute.xlu0 %3397
        %v3399 = vunpack.c.l.b16 %v2895
        %v3400 = vunpack.c.l.b16 %v2896
        %v3401 = vpack.c.b16 %v3400, %v3399
        %3402 = vrot.lane.b32.xlu0 %v3256, 24
        %v3403 = vpop.permute.xlu0 %3402
        %3404 = vrot.lane.b32.xlu0 %v3257, 24
        %v3405 = vpop.permute.xlu0 %3404
        %3406 = vrot.lane.b32.xlu0 %v3258, 24
        %v3407 = vpop.permute.xlu0 %3406
        %3408 = vrot.lane.b32.xlu0 %v3259, 24
        %v3409 = vpop.permute.xlu0 %3408
        %3410 = vrot.lane.b32.xlu0 %v3260, 24
        %v3411 = vpop.permute.xlu0 %3410
        %3412 = vrot.lane.b32.xlu0 %v3261, 24
        %v3413 = vpop.permute.xlu0 %3412
        %3414 = vrot.lane.b32.xlu0 %v3344, 24
        %v3415 = vpop.permute.xlu0 %3414
        %3416 = vrot.lane.b32.xlu0 %v3401, 24
        %v3417 = vpop.permute.xlu0 %3416
        %v3418 = vunpack.c.l.b16 %v3217
        %v3419 = vunpack.c.l.b16 %v3227
        %v3420 = vpack.c.b16 %v3419, %v3418
        %3421 = vrot.lane.b32.xlu0 %v3280, 28
        %v3422 = vpop.permute.xlu0 %3421
        %3423 = vrot.lane.b32.xlu0 %v3281, 28
        %v3424 = vpop.permute.xlu0 %3423
        %3425 = vrot.lane.b32.xlu0 %v3282, 28
        %v3426 = vpop.permute.xlu0 %3425
        %3427 = vrot.lane.b32.xlu0 %v3283, 28
        %v3428 = vpop.permute.xlu0 %3427
        %3429 = vrot.lane.b32.xlu0 %v3284, 28
        %v3430 = vpop.permute.xlu0 %3429
        %3431 = vrot.lane.b32.xlu0 %v3285, 28
        %v3432 = vpop.permute.xlu0 %3431
        %3433 = vrot.lane.b32.xlu0 %v3363, 28
        %v3434 = vpop.permute.xlu0 %3433
        %3435 = vrot.lane.b32.xlu0 %v3420, 28
        %v3436 = vpop.permute.xlu0 %3435
        %v3437 = vunpack.c.l.b16 %v3234
        %v3438 = vunpack.c.l.b16 %v3237
        %v3439 = vpack.c.b16 %v3438, %v3437
        %3440 = vrot.lane.b32.xlu0 %v3320, 32
        %v3441 = vpop.permute.xlu0 %3440
        %3442 = vrot.lane.b32.xlu0 %v3321, 32
        %v3443 = vpop.permute.xlu0 %3442
        %3444 = vrot.lane.b32.xlu0 %v3322, 32
        %v3445 = vpop.permute.xlu0 %3444
        %3446 = vrot.lane.b32.xlu0 %v3323, 32
        %v3447 = vpop.permute.xlu0 %3446
        %3448 = vrot.lane.b32.xlu0 %v3324, 32
        %v3449 = vpop.permute.xlu0 %3448
        %3450 = vrot.lane.b32.xlu0 %v3325, 32
        %v3451 = vpop.permute.xlu0 %3450
        %3452 = vrot.lane.b32.xlu0 %v3382, 32
        %v3453 = vpop.permute.xlu0 %3452
        %3454 = vrot.lane.b32.xlu0 %v3439, 32
        %v3455 = vpop.permute.xlu0 %3454
        %v3458 = vsel %vm1771, %v3254, %v3287
        %v3461 = vsel %vm1771, %v3255, %v3289
        %v3464 = vsel %vm1771, %v3256, %v3291
        %v3467 = vsel %vm1771, %v3257, %v3293
        %v3470 = vsel %vm1771, %v3258, %v3295
        %v3473 = vsel %vm1771, %v3259, %v3297
        %v3476 = vsel %vm1771, %v3260, %v3299
        %v3479 = vsel %vm1771, %v3261, %v3301
        %v3481 = vsel %vm1802, %v3458, %v3327
        %v3483 = vsel %vm1802, %v3461, %v3329
        %v3485 = vsel %vm1802, %v3464, %v3331
        %v3487 = vsel %vm1802, %v3467, %v3333
        %v3489 = vsel %vm1802, %v3470, %v3335
        %v3491 = vsel %vm1802, %v3473, %v3337
        %v3493 = vsel %vm1802, %v3476, %v3339
        %v3495 = vsel %vm1802, %v3479, %v3341
        %v3497 = vsel %vm1823, %v3481, %v3346
        %v3499 = vsel %vm1823, %v3483, %v3348
        %v3501 = vsel %vm1823, %v3485, %v3350
        %v3503 = vsel %vm1823, %v3487, %v3352
        %v3505 = vsel %vm1823, %v3489, %v3354
        %v3507 = vsel %vm1823, %v3491, %v3356
        %v3509 = vsel %vm1823, %v3493, %v3358
        %v3511 = vsel %vm1823, %v3495, %v3360
        %v3513 = vsel %vm1844, %v3497, %v3365
        %v3515 = vsel %vm1844, %v3499, %v3367
        %v3517 = vsel %vm1844, %v3501, %v3369
        %v3519 = vsel %vm1844, %v3503, %v3371
        %v3521 = vsel %vm1844, %v3505, %v3373
        %v3523 = vsel %vm1844, %v3507, %v3375
        %v3525 = vsel %vm1844, %v3509, %v3377
        %v3527 = vsel %vm1844, %v3511, %v3379
        %v3529 = vsel %vm1865, %v3513, %v3384
        %v3531 = vsel %vm1865, %v3515, %v3386
        %v3533 = vsel %vm1865, %v3517, %v3388
        %v3535 = vsel %vm1865, %v3519, %v3390
        %v3537 = vsel %vm1865, %v3521, %v3392
        %v3539 = vsel %vm1865, %v3523, %v3394
        %v3541 = vsel %vm1865, %v3525, %v3396
        %v3543 = vsel %vm1865, %v3527, %v3398
        %v3545 = vsel %vm1886, %v3529, %v3403
        %v3547 = vsel %vm1886, %v3531, %v3405
        %v3549 = vsel %vm1886, %v3533, %v3407
        %v3551 = vsel %vm1886, %v3535, %v3409
        %v3553 = vsel %vm1886, %v3537, %v3411
        %v3555 = vsel %vm1886, %v3539, %v3413
        %v3557 = vsel %vm1886, %v3541, %v3415
        %v3559 = vsel %vm1886, %v3543, %v3417
        %v3561 = vsel %vm1907, %v3545, %v3422
        %v3563 = vsel %vm1907, %v3547, %v3424
        %v3565 = vsel %vm1907, %v3549, %v3426
        %v3567 = vsel %vm1907, %v3551, %v3428
        %v3569 = vsel %vm1907, %v3553, %v3430
        %v3571 = vsel %vm1907, %v3555, %v3432
        %v3573 = vsel %vm1907, %v3557, %v3434
        %v3575 = vsel %vm1907, %v3559, %v3436
        %v3577 = vsel %vm1928, %v3561, %v3441
        %v3579 = vsel %vm1928, %v3563, %v3443
        %v3581 = vsel %vm1928, %v3565, %v3445
        %v3583 = vsel %vm1928, %v3567, %v3447
        %v3585 = vsel %vm1928, %v3569, %v3449
        %v3587 = vsel %vm1928, %v3571, %v3451
        %v3589 = vsel %vm1928, %v3573, %v3453
        %v3591 = vsel %vm1928, %v3575, %v3455
        %v3592 = vld [vmem:[%s5] sm:$0xf]
        %v3593 = vld [vmem:[%s5 + $0x4] sm:$0xf]
        %v3594 = vld [vmem:[%s5 + $0x8] sm:$0xf]
        %v3595 = vld [vmem:[%s5 + $0xc] sm:$0xf]
        %v3596 = vld [vmem:[%s5 + $0x10] sm:$0x3]
        %v3602 = vunpack.c.l.b16 %v3592
        %v3603 = vunpack.c.l.b16 %v3593
        %v3604 = vunpack.c.l.b16 %v3594
        %v3605 = vunpack.c.l.b16 %v3595
        %v3606 = vunpack.c.l.b16 %v3596
        %v3607 = vpack.c.b16 %v3603, %v3602
        %v3608 = vpack.c.b16 %v3605, %v3604
        %v3609 = vpack.c.b16 %v3606, %v3606
        %v3612 = vsel %vm1949, %v3577, 0
        %v3614 = vsel %vm1949, %v3579, 0
        %v3616 = vsel %vm1949, %v3581, 0
        %v3618 = vsel %vm1949, %v3583, 0
        %v3620 = vsel %vm1949, %v3585, 0
        %v3622 = vsel %vm1949, %v3587, 0
        %v3624 = vsel %vm1949, %v3589, 0
        %v3626 = vsel %vm1949, %v3591, 0
        %vm3628 = vcmask 1041408
        %v3630 = vsel %vm3628, %v3609, 0
        %3632 = vmatprep.subr.bf16.mxu0 0
        %3633 = vmatpush1.bf16.msra.mxu0 0
        %3634 = vmatprep.subr.bf16.mxu0 0
        %3635 = vmatpush1.bf16.msra.mxu0 0
        %3636 = vmatprep.subr.bf16.mxu0 0
        %3637 = vmatpush1.bf16.msra.mxu0 0
        %3638 = vmatprep.subr.bf16.mxu0 0
        %3639 = vmatpush1.bf16.msra.mxu0 0
        %3640 = vmatprep.subr.bf16.mxu0 0
        %3641 = vmatpush1.bf16.msra.mxu0 0
        %3642 = vmatprep.subr.bf16.mxu0 0
        %3643 = vmatpush1.bf16.msra.mxu0 %v3630
        %3644 = vmatprep.subr.bf16.mxu0 0
        %3645 = vmatpush1.bf16.msra.mxu0 %v3608
        %3646 = vmatprep.subr.bf16.mxu0 0
        %3647 = vmatpush1.bf16.msra.mxu0 %v3607
        %3648 = vmatprep.subr.bf16.mxu0 0
        %3649 = vmatpush2.bf16.msra.mxu0 0
        %3650 = vmatprep.subr.bf16.mxu0 0
        %3651 = vmatpush2.bf16.msra.mxu0 0
        %3652 = vmatprep.subr.bf16.mxu0 0
        %3653 = vmatpush2.bf16.msra.mxu0 0
        %3654 = vmatprep.subr.bf16.mxu0 0
        %3655 = vmatpush2.bf16.msra.mxu0 0
        %3656 = vmatprep.subr.bf16.mxu0 0
        %3657 = vmatpush2.bf16.msra.mxu0 0
        %3658 = vmatprep.subr.bf16.mxu0 0
        %3659 = vmatpush2.bf16.msra.mxu0 0
        %3660 = vmatprep.subr.bf16.mxu0 0
        %3661 = vmatpush2.bf16.msra.mxu0 0
        %3662 = vmatprep.subr.bf16.mxu0 0
        %3663 = vmatpush2.bf16.msra.mxu0 0
        %3664 = vmatprep.mubr.bf16.mxu0 0
        %3665 = vmatmul.mubr.bf16.gmra.mxu0 %v3612
        %v3666 = vpop.f32.mrf.mxu0
        %v3667 = vadd.f32 0.0, %v3666
        %v3668 = vpop.f32.mrf.mxu0
        %v3669 = vpop.f32.mrf.mxu0
        %v3670 = vadd.f32 0.0, %v3669
        %v3671 = vpop.f32.mrf.mxu0
        %3672 = vmatprep.mubr.bf16.mxu0 0
        %3673 = vmatmul.mubr.bf16.gmra.mxu0 %v3614
        %v3674 = vpop.f32.mrf.mxu0
        %v3675 = vadd.f32 0.0, %v3674
        %v3676 = vpop.f32.mrf.mxu0
        %v3677 = vpop.f32.mrf.mxu0
        %v3678 = vadd.f32 0.0, %v3677
        %v3679 = vpop.f32.mrf.mxu0
        %3680 = vmatprep.mubr.bf16.mxu0 0
        %3681 = vmatmul.mubr.bf16.gmra.mxu0 %v3616
        %v3682 = vpop.f32.mrf.mxu0
        %v3683 = vadd.f32 0.0, %v3682
        %v3684 = vpop.f32.mrf.mxu0
        %v3685 = vpop.f32.mrf.mxu0
        %v3686 = vadd.f32 0.0, %v3685
        %v3687 = vpop.f32.mrf.mxu0
        %3688 = vmatprep.mubr.bf16.mxu0 0
        %3689 = vmatmul.mubr.bf16.gmra.mxu0 %v3618
        %v3690 = vpop.f32.mrf.mxu0
        %v3691 = vadd.f32 0.0, %v3690
        %v3692 = vpop.f32.mrf.mxu0
        %v3693 = vpop.f32.mrf.mxu0
        %v3694 = vadd.f32 0.0, %v3693
        %v3695 = vpop.f32.mrf.mxu0
        %3696 = vmatprep.mubr.bf16.mxu0 0
        %3697 = vmatmul.mubr.bf16.gmra.mxu0 %v3620
        %v3698 = vpop.f32.mrf.mxu0
        %v3699 = vadd.f32 0.0, %v3698
        %v3700 = vpop.f32.mrf.mxu0
        %v3701 = vpop.f32.mrf.mxu0
        %v3702 = vadd.f32 0.0, %v3701
        %v3703 = vpop.f32.mrf.mxu0
        %3704 = vmatprep.mubr.bf16.mxu0 0
        %3705 = vmatmul.mubr.bf16.gmra.mxu0 %v3622
        %v3706 = vpop.f32.mrf.mxu0
        %v3707 = vadd.f32 0.0, %v3706
        %v3708 = vpop.f32.mrf.mxu0
        %v3709 = vpop.f32.mrf.mxu0
        %v3710 = vadd.f32 0.0, %v3709
        %v3711 = vpop.f32.mrf.mxu0
        %3712 = vmatprep.mubr.bf16.mxu0 0
        %3713 = vmatmul.mubr.bf16.gmra.mxu0 %v3624
        %v3714 = vpop.f32.mrf.mxu0
        %v3715 = vadd.f32 0.0, %v3714
        %v3716 = vpop.f32.mrf.mxu0
        %v3717 = vpop.f32.mrf.mxu0
        %v3718 = vadd.f32 0.0, %v3717
        %v3719 = vpop.f32.mrf.mxu0
        %3720 = vmatprep.mubr.bf16.mxu0 0
        %3721 = vmatmul.mubr.bf16.gmra.mxu0 %v3626
        %v3722 = vpop.f32.mrf.mxu0
        %v3723 = vadd.f32 0.0, %v3722
        %v3724 = vpop.f32.mrf.mxu0
        %v3725 = vpop.f32.mrf.mxu0
        %v3726 = vadd.f32 0.0, %v3725
        %v3727 = vpop.f32.mrf.mxu0
        %3728 = vdwg.mxu0
        %v3729 = vld [vmem:[%s6] sm:$0x1]
        %v3731 = vlaneseq
        %v3732 = vshrl.u32 %v3731, 7
        %v3733 = vsub.s32 0, %v3732
        %v3734 = vrot.slane %v3729, %v3733
        %v3736 = vmul.f32 %v3667, %v3734
        %v3737 = vmul.f32 %v3670, %v3734
        %v3738 = vmul.f32 %v3675, %v3734
        %v3739 = vmul.f32 %v3678, %v3734
        %v3740 = vmul.f32 %v3683, %v3734
        %v3741 = vmul.f32 %v3686, %v3734
        %v3742 = vmul.f32 %v3691, %v3734
        %v3743 = vmul.f32 %v3694, %v3734
        %v3744 = vmul.f32 %v3699, %v3734
        %v3745 = vmul.f32 %v3702, %v3734
        %v3746 = vmul.f32 %v3707, %v3734
        %v3747 = vmul.f32 %v3710, %v3734
        %v3748 = vmul.f32 %v3715, %v3734
        %v3749 = vmul.f32 %v3718, %v3734
        %v3750 = vmul.f32 %v3723, %v3734
        %v3751 = vmul.f32 %v3726, %v3734
        %v3752 = vld [vmem:[%s7] sm:$0x1]
        %v3754 = vlaneseq
        %v3755 = vshrl.u32 %v3754, 7
        %v3756 = vsub.s32 0, %v3755
        %v3757 = vrot.slane %v3752, %v3756
        %v3759 = vadd.f32 %v3736, %v3757
        %v3760 = vadd.f32 %v3737, %v3757
        %v3761 = vadd.f32 %v3738, %v3757
        %v3762 = vadd.f32 %v3739, %v3757
        %v3763 = vadd.f32 %v3740, %v3757
        %v3764 = vadd.f32 %v3741, %v3757
        %v3765 = vadd.f32 %v3742, %v3757
        %v3766 = vadd.f32 %v3743, %v3757
        %v3767 = vadd.f32 %v3744, %v3757
        %v3768 = vadd.f32 %v3745, %v3757
        %v3769 = vadd.f32 %v3746, %v3757
        %v3770 = vadd.f32 %v3747, %v3757
        %v3771 = vadd.f32 %v3748, %v3757
        %v3772 = vadd.f32 %v3749, %v3757
        %v3773 = vadd.f32 %v3750, %v3757
        %v3774 = vadd.f32 %v3751, %v3757
        %v3775 = vmax.f32 %v3759, 0.0
        %v3776 = vmax.f32 %v3760, 0.0
        %v3777 = vmax.f32 %v3761, 0.0
        %v3778 = vmax.f32 %v3762, 0.0
        %v3779 = vmax.f32 %v3763, 0.0
        %v3780 = vmax.f32 %v3764, 0.0
        %v3781 = vmax.f32 %v3765, 0.0
        %v3782 = vmax.f32 %v3766, 0.0
        %v3783 = vmax.f32 %v3767, 0.0
        %v3784 = vmax.f32 %v3768, 0.0
        %v3785 = vmax.f32 %v3769, 0.0
        %v3786 = vmax.f32 %v3770, 0.0
        %v3787 = vmax.f32 %v3771, 0.0
        %v3788 = vmax.f32 %v3772, 0.0
        %v3789 = vmax.f32 %v3773, 0.0
        %v3790 = vmax.f32 %v3774, 0.0
        %3791 = vxpose.xlu0.b32.start [1/16] %v3775, 128
        %3792 = vxpose.xlu0.b32.cont [2/16] %v3776, 128
        %3793 = vxpose.xlu0.b32.cont [3/16] %v3777, 128
        %3794 = vxpose.xlu0.b32.cont [4/16] %v3778, 128
        %3795 = vxpose.xlu0.b32.cont [5/16] %v3779, 128
        %3796 = vxpose.xlu0.b32.cont [6/16] %v3780, 128
        %3797 = vxpose.xlu0.b32.cont [7/16] %v3781, 128
        %3798 = vxpose.xlu0.b32.cont [8/16] %v3782, 128
        %3799 = vxpose.xlu0.b32.cont [9/16] %v3783, 128
        %3800 = vxpose.xlu0.b32.cont [10/16] %v3784, 128
        %3801 = vxpose.xlu0.b32.cont [11/16] %v3785, 128
        %3802 = vxpose.xlu0.b32.cont [12/16] %v3786, 128
        %3803 = vxpose.xlu0.b32.cont [13/16] %v3787, 128
        %3804 = vxpose.xlu0.b32.cont [14/16] %v3788, 128
        %3805 = vxpose.xlu0.b32.cont [15/16] %v3789, 128
        %3806 = vxpose.xlu0.b32.end [16/16] %v3790, 128
        %v3807 = vpop.trf.xlu0
        %v3808 = vpop.trf.xlu0
        %v3809 = vpop.trf.xlu0
        %v3810 = vpop.trf.xlu0
        %v3811 = vpop.trf.xlu0
        %v3812 = vpop.trf.xlu0
        %v3813 = vpop.trf.xlu0
        %v3814 = vpop.trf.xlu0
        %v3815 = vpop.trf.xlu0
        %v3816 = vpop.trf.xlu0
        %v3817 = vpop.trf.xlu0
        %v3818 = vpop.trf.xlu0
        %v3819 = vpop.trf.xlu0
        %v3820 = vpop.trf.xlu0
        %v3821 = vpop.trf.xlu0
        %v3822 = vpop.trf.xlu0
        %3823 = vst [vmem:[%s347] sm:$0xf] %v3807
        %s3824 = sand.u32 %s230, 1
        %s3825 = scalar_lea.sflag [#allocation4], %s3824
        %s3826 = sand.u32 %s230, 1
        %s3827 = smul.addr %s3826, 4
        %s3828 = scalar_lea.vmem [#allocation3], %s3827
        // Predicated region
        $region61: #{tpu_custom_call.1} parent=51 // pred_check
          %p3829 = pneg %p240
        $region62: #{tpu_custom_call.1} parent=51 // pred_check_branch
          %3831 = sbr.rel (%p3829) target = $region64
        $region63: #{tpu_custom_call.1} parent=51 // pred_region
          %s3833 = ssub.s32 64, 64
          %3834 = vsyncadd %s3825, %s3833
          %s3835 = smul.addr %s26, 2
          %s3836 = sadd.s32 %s27, %s3835
          %s3837 = smul.addr %s3836, 64
          %s3838 = scalar_lea.hbm %s8, %s3837
          %s3840 = sshll.u32 %s3828, 4
          %s3841 = int_to_ptr.vmem [resolvable:$true] %s3840
          %3843 = dma.vmem_to_hbm [thread:$0]  %s3841, 64, %s3838, %s3825
        $region64: #{tpu_custom_call.1} parent=51 // pred_fallthru
          _
      $region52: #{tpu_custom_call.1} parent=5 // pred_fallthru
        _
      %p3844 = scmp.le.s32.totalorder 2, %s17
      // Predicated region
      $region65: #{tpu_custom_call.1} parent=5 // pred_check
        %p3845 = pneg %p3844
      $region66: #{tpu_custom_call.1} parent=5 // pred_check_branch
        %3847 = sbr.rel (%p3845) target = $region68
      $region67: #{tpu_custom_call.1} parent=5 // pred_region
        %s3848 = ssub.s32 %s17, 2
        // Predicated region
        $region69: #{tpu_custom_call.1} parent=67 // pred_check
          %p3849 = pneg %p246
        $region70: #{tpu_custom_call.1} parent=67 // pred_check_branch
          %3851 = sbr.rel (%p3849) target = $region72
        $region71: #{tpu_custom_call.1} parent=67 // pred_region
          %s3852 = sand.u32 %s231, 1
          %s3853 = scalar_lea.sflag [#allocation4], %s3852
          %s3854 = sand.u32 %s231, 1
          %s3855 = smul.addr %s3854, 4
          %s3856 = scalar_lea.vmem [#allocation3], %s3855
          %3857 = dma.done %s3853, 64
        $region72: #{tpu_custom_call.1} parent=67 // pred_fallthru
          _
      $region68: #{tpu_custom_call.1} parent=5 // pred_fallthru
        _
    $region6: #{tpu_custom_call.1} parent=1 // loop_footer
      %s21 = sadd.s32 1, %s17
    $region7: #{tpu_custom_call.1} parent=1 // loop_footer_branch
      %16 = sbr.rel target = $region3
    $region8: #{tpu_custom_call.1} parent=1 // loop_exit
      _
    %3858 = vsyncpa [#allocation4], 1
    %s3859 = scalar_lea.sflag [#allocation4], 1
    %3860 = vsyncpa %s3859, 1

</llo_original>
